<compile_context>
chip_gen: v7x
topology: tpu7x:2x2x1
jax: 0.10.0
libtpu: 0.0.40
codegen_flags: <defaults>
</compile_context>

<pallas_src>
import math
from functools import partial

import jax
import jax.numpy as jnp
from jax.experimental import pallas as pl
from jax.experimental.pallas import tpu as pltpu


# ----------------------------------------------------------------------------
# Fused kernel: PE add -> nlayers x (MHA + add/LN + FFN + add/LN) -> head
# ----------------------------------------------------------------------------

def _layernorm(y, g, b, eps=1e-5):
    mean = jnp.mean(y, axis=-1, keepdims=True)
    var = jnp.mean(jnp.square(y - mean), axis=-1, keepdims=True)
    return (y - mean) * jax.lax.rsqrt(var + eps) * g + b


def _fused_stack_kernel(
    x_in_ref, pe_ref, mask_ref, kpm_ref,
    in_w_ref, in_b_ref, out_w_ref, out_b_ref,
    ff1_w_ref, ff1_b_ref, ff2_w_ref, ff2_b_ref,
    ln1_g_ref, ln1_b_ref, ln2_g_ref, ln2_b_ref,
    head_w_ref, head_b_ref,
    out_ref,
    *, B, S, H, Dh, E, nlayers, emb_scale,
):
    BS = B * S

    # ---- x = emb * sqrt(d_model) + pe  (pe broadcast in registers) ----
    x = x_in_ref[...] * emb_scale                                   # [B*S, E] f32
    x = (x.reshape(B, S, E) + pe_ref[...][None, :, :]).reshape(BS, E)
    # TODO(synk): dropout (p=0.1 on PE, p=0.5 inside layers) elided (eval mode).

    # combined additive attention mask, hoisted out of the layer loop: [B, S, S]
    mask_b = mask_ref[...][None, :, :] + kpm_ref[...]

    for l in range(nlayers):                                        # layers are serial: unroll
        # ---- self-attention: one fused QKV matmul, per-head B-batched dots ----
        qkv = (jnp.dot(x.astype(jnp.bfloat16), in_w_ref[l],
                       preferred_element_type=jnp.float32)
               + in_b_ref[l])                                       # [B*S, 3E] f32
        # free leading-dim split (rows = b*S + s, split at sublane multiple),
        # then a single bf16 cast reused by all heads.
        qkv3 = qkv.reshape(B, S, 3 * E).astype(jnp.bfloat16)        # [B, S, 3E]

        heads = []
        for h in range(H):
            # attn scale 1/sqrt(Dh) is already folded into the Q projection.
            qh = qkv3[:, :, h * Dh:(h + 1) * Dh]                    # [B, S, Dh]
            kh = qkv3[:, :, E + h * Dh:E + (h + 1) * Dh]
            vh = qkv3[:, :, 2 * E + h * Dh:2 * E + (h + 1) * Dh]
            s = jnp.einsum('bqd,bkd->bqk', qh, kh,
                           preferred_element_type=jnp.float32) + mask_b   # [B, S, S]
            s = s - jnp.max(s, axis=-1, keepdims=True)
            p = jnp.exp(s)
            # approx=False for exact parity with PyTorch softmax division.
            p = p * pl.reciprocal(jnp.sum(p, axis=-1, keepdims=True), approx=True)
            heads.append(jnp.einsum('bqk,bkd->bqd', p.astype(jnp.bfloat16), vh,
                                    preferred_element_type=jnp.float32))  # [B, S, Dh]

        # assemble heads in registers (no VMEM scratch round trip)
        attn = jnp.concatenate(heads, axis=-1).reshape(BS, E)       # [B*S, E] f32
        attn_out = (jnp.dot(attn.astype(jnp.bfloat16), out_w_ref[l],
                            preferred_element_type=jnp.float32)
                    + out_b_ref[l])

        # residual + post-LN 1
        x = _layernorm(x + attn_out, ln1_g_ref[l], ln1_b_ref[l])

        # ---- feed-forward ----
        hdn = jnp.maximum(
            jnp.dot(x.astype(jnp.bfloat16), ff1_w_ref[l],
                    preferred_element_type=jnp.float32) + ff1_b_ref[l], 0.0)
        ff = (jnp.dot(hdn.astype(jnp.bfloat16), ff2_w_ref[l],
                      preferred_element_type=jnp.float32)
              + ff2_b_ref[l])

        # residual + post-LN 2
        x = _layernorm(x + ff, ln2_g_ref[l], ln2_b_ref[l])

    # ---- head projection, lane-dense [B*S, ntoken+1] ----
    out_ref[...] = (jnp.dot(x.astype(jnp.bfloat16), head_w_ref[...],
                            preferred_element_type=jnp.float32)
                    + head_b_ref[...])


# ----------------------------------------------------------------------------
# Parameters (deterministic, synthetic init) — per-layer weights stacked [L, ...]
# ----------------------------------------------------------------------------

def init_params(key, *, ntoken, d_model, d_hid, nlayers, max_len=64):
    E = d_model
    N = ntoken + 1
    keys = jax.random.split(key, 2 + nlayers)

    emb = jax.random.uniform(keys[0], (N, E), jnp.float32, -0.1, 0.1)
    emb = emb.at[0].set(0.0)                                  # padding_idx = 0

    # sinusoidal positional encoding [max_len, E]
    position = jnp.arange(max_len, dtype=jnp.float32)[:, None]
    div_term = jnp.exp(jnp.arange(0, E, 2, dtype=jnp.float32)
                       * (-math.log(10000.0) / E))
    pe = jnp.zeros((max_len, E), jnp.float32)
    pe = pe.at[:, 0::2].set(jnp.sin(position * div_term))
    pe = pe.at[:, 1::2].set(jnp.cos(position * div_term))

    s = 0.05
    lkeys = [jax.random.split(keys[2 + l], 6) for l in range(nlayers)]

    def stack(fn):
        return jnp.stack([fn(l) for l in range(nlayers)], axis=0)

    # NOTE: synthetic init uses in_w as (E, 3E) with x @ in_w; real PyTorch
    # in_proj_weight is (3E, E) applied as x @ W.T — transpose when porting.
    in_w = stack(lambda l: jax.random.uniform(lkeys[l][0], (E, 3 * E),
                                              jnp.float32, -s, s)).astype(jnp.bfloat16)
    in_b = jnp.zeros((nlayers, 1, 3 * E), jnp.float32)
    out_w = stack(lambda l: jax.random.uniform(lkeys[l][1], (E, E),
                                               jnp.float32, -s, s)).astype(jnp.bfloat16)
    out_b = jnp.zeros((nlayers, 1, E), jnp.float32)
    ff1_w = stack(lambda l: jax.random.uniform(lkeys[l][2], (E, d_hid),
                                               jnp.float32, -s, s)).astype(jnp.bfloat16)
    ff1_b = stack(lambda l: jax.random.uniform(lkeys[l][3], (1, d_hid),
                                               jnp.float32, -s, s))
    ff2_w = stack(lambda l: jax.random.uniform(lkeys[l][4], (d_hid, E),
                                               jnp.float32, -s, s)).astype(jnp.bfloat16)
    ff2_b = stack(lambda l: jax.random.uniform(lkeys[l][5], (1, E),
                                               jnp.float32, -s, s))
    ln1_g = jnp.ones((nlayers, 1, E), jnp.float32)
    ln1_b = jnp.zeros((nlayers, 1, E), jnp.float32)
    ln2_g = jnp.ones((nlayers, 1, E), jnp.float32)
    ln2_b = jnp.zeros((nlayers, 1, E), jnp.float32)

    head_w = jax.random.uniform(keys[1], (E, N), jnp.float32,
                                -0.1, 0.1).astype(jnp.bfloat16)
    head_b = jnp.zeros((1, N), jnp.float32)

    return dict(emb=emb, pe=pe,
                in_w=in_w, in_b=in_b, out_w=out_w, out_b=out_b,
                ff1_w=ff1_w, ff1_b=ff1_b, ff2_w=ff2_w, ff2_b=ff2_b,
                ln1_g=ln1_g, ln1_b=ln1_b, ln2_g=ln2_g, ln2_b=ln2_b,
                head_w=head_w, head_b=head_b)


# ----------------------------------------------------------------------------
# Forward pass
# ----------------------------------------------------------------------------

def dqn_transformer_embedding(params, src, src_mask, src_key_padding_mask,
                              *, d_model, nhead, nlayers):
    B, S = src.shape
    E = d_model
    H = nhead
    Dh = E // H
    BS = B * S
    L = nlayers
    N = params["head_w"].shape[1]
    d_hid = params["ff1_w"].shape[2]

    # glue: embedding gather, batch-major flatten row = b*S + s
    x_in = jnp.take(params["emb"], src, axis=0).reshape(BS, E)      # [B*S, E]
    pe = params["pe"][:S]                                           # [S, E]
    kpm = jnp.where(src_key_padding_mask, -1e9, 0.0).astype(jnp.float32)[:, None, :]  # [B,1,S]

    # constant-fold the 1/sqrt(Dh) attention scale into the Q projection
    qscale = jnp.concatenate([jnp.full((E,), 1.0 / math.sqrt(Dh), jnp.float32),
                              jnp.ones((2 * E,), jnp.float32)])
    in_w = (params["in_w"].astype(jnp.float32) * qscale).astype(jnp.bfloat16)
    in_b = params["in_b"] * qscale

    kernel = partial(_fused_stack_kernel, B=B, S=S, H=H, Dh=Dh, E=E,
                     nlayers=nlayers, emb_scale=math.sqrt(E))

    def const(shape):      # full array, same block every (single) grid step
        return pl.BlockSpec(shape, lambda i: (0,) * len(shape))

    in_specs = [
        const((BS, E)),                                    # x_in
        const((S, E)),                                     # pe
        const((S, S)),                                     # src_mask (additive)
        const((B, 1, S)),                                  # key-padding (additive)
        const((L, E, 3 * E)), const((L, 1, 3 * E)),        # in_w, in_b
        const((L, E, E)),     const((L, 1, E)),            # out_w, out_b
        const((L, E, d_hid)), const((L, 1, d_hid)),        # ff1_w, ff1_b
        const((L, d_hid, E)), const((L, 1, E)),            # ff2_w, ff2_b
        const((L, 1, E)), const((L, 1, E)),                # ln1 gamma/beta
        const((L, 1, E)), const((L, 1, E)),                # ln2 gamma/beta
        const((E, N)),                                     # head_w
        const((1, N)),                                     # head_b
    ]

    out2d = pl.pallas_call(
        kernel,
        out_shape=jax.ShapeDtypeStruct((BS, N), jnp.float32),
        grid_spec=pltpu.PrefetchScalarGridSpec(
            num_scalar_prefetch=0,
            grid=(1,),                                     # single fused step
            in_specs=in_specs,
            out_specs=pl.BlockSpec((BS, N), lambda i: (0, 0)),
        ),
        compiler_params=pltpu.CompilerParams(
            dimension_semantics=("arbitrary",)),
    )(
        x_in, pe, src_mask, kpm,
        in_w, in_b, params["out_w"], params["out_b"],
        params["ff1_w"], params["ff1_b"], params["ff2_w"], params["ff2_b"],
        params["ln1_g"], params["ln1_b"], params["ln2_g"], params["ln2_b"],
        params["head_w"], params["head_b"],
    )

    # tiny glue: [B*S, N] -> [B, N, S]   (matches x.permute(1, 2, 0))
    return jnp.transpose(out2d.reshape(B, S, N), (0, 2, 1))


# ----------------------------------------------------------------------------

if __name__ == "__main__":
    B, S = 2, 8
    ntoken = 15
    d_model, nhead, d_hid, nlayers = 32, 4, 64, 2

    key = jax.random.PRNGKey(0)
    pkey, skey = jax.random.split(key)
    params = init_params(pkey, ntoken=ntoken, d_model=d_model,
                         d_hid=d_hid, nlayers=nlayers)

    # token ids [B, S] in [0, ntoken]  (0 is the padding token)
    src = jax.random.randint(skey, (B, S), 0, ntoken + 1)
    # causal additive float mask [S, S]
    src_mask = jnp.where(jnp.tril(jnp.ones((S, S), bool)), 0.0, -1e9).astype(jnp.float32)
    # key-padding mask [B, S], True = ignore; mask last key of batch 1
    src_key_padding_mask = jnp.zeros((B, S), bool).at[1, S - 1].set(True)

    fwd = jax.jit(dqn_transformer_embedding,
                  static_argnames=("d_model", "nhead", "nlayers"))
    out = fwd(params, src, src_mask, src_key_padding_mask,
              d_model=d_model, nhead=nhead, nlayers=nlayers)
    out = jax.block_until_ready(out)

    assert out.shape == (B, ntoken + 1, S), out.shape
    assert bool(jnp.all(jnp.isfinite(out)))
    print("KERNEL_OK")
</pallas_src>

<mosaic_0001>
module attributes {stable_mosaic.version = 11 : i64} {
  func.func @_fused_stack_kernel(%arg0: i32, %arg1: memref<16x32xf32, #tpu.memory_space<vmem>>, %arg2: memref<8x32xf32, #tpu.memory_space<vmem>>, %arg3: memref<8x8xf32, #tpu.memory_space<vmem>>, %arg4: memref<2x1x8xf32, #tpu.memory_space<vmem>>, %arg5: memref<2x32x96xbf16, #tpu.memory_space<vmem>>, %arg6: memref<2x1x96xf32, #tpu.memory_space<vmem>>, %arg7: memref<2x32x32xbf16, #tpu.memory_space<vmem>>, %arg8: memref<2x1x32xf32, #tpu.memory_space<vmem>>, %arg9: memref<2x32x64xbf16, #tpu.memory_space<vmem>>, %arg10: memref<2x1x64xf32, #tpu.memory_space<vmem>>, %arg11: memref<2x64x32xbf16, #tpu.memory_space<vmem>>, %arg12: memref<2x1x32xf32, #tpu.memory_space<vmem>>, %arg13: memref<2x1x32xf32, #tpu.memory_space<vmem>>, %arg14: memref<2x1x32xf32, #tpu.memory_space<vmem>>, %arg15: memref<2x1x32xf32, #tpu.memory_space<vmem>>, %arg16: memref<2x1x32xf32, #tpu.memory_space<vmem>>, %arg17: memref<32x16xbf16, #tpu.memory_space<vmem>>, %arg18: memref<1x16xf32, #tpu.memory_space<vmem>>, %arg19: memref<16x16xf32, #tpu.memory_space<vmem>>) attributes {dimension_semantics = [#tpu.dimension_semantics<arbitrary>], iteration_bounds = array<i64: 1>, scalar_prefetch = 0 : i64, scratch_operands = 0 : i64, tpu.core_type = #tpu.core_type<tc>, window_params = [{pipeline_mode = #tpu.pipeline_mode<synchronous>, transform_indices = @transform_0, window_bounds = array<i64: 16, 32>}, {pipeline_mode = #tpu.pipeline_mode<synchronous>, transform_indices = @transform_1, window_bounds = array<i64: 8, 32>}, {pipeline_mode = #tpu.pipeline_mode<synchronous>, transform_indices = @transform_2, window_bounds = array<i64: 8, 8>}, {pipeline_mode = #tpu.pipeline_mode<synchronous>, transform_indices = @transform_3, window_bounds = array<i64: 2, 1, 8>}, {pipeline_mode = #tpu.pipeline_mode<synchronous>, transform_indices = @transform_4, window_bounds = array<i64: 2, 32, 96>}, {pipeline_mode = #tpu.pipeline_mode<synchronous>, transform_indices = @transform_5, window_bounds = array<i64: 2, 1, 96>}, {pipeline_mode = #tpu.pipeline_mode<synchronous>, transform_indices = @transform_6, window_bounds = array<i64: 2, 32, 32>}, {pipeline_mode = #tpu.pipeline_mode<synchronous>, transform_indices = @transform_7, window_bounds = array<i64: 2, 1, 32>}, {pipeline_mode = #tpu.pipeline_mode<synchronous>, transform_indices = @transform_8, window_bounds = array<i64: 2, 32, 64>}, {pipeline_mode = #tpu.pipeline_mode<synchronous>, transform_indices = @transform_9, window_bounds = array<i64: 2, 1, 64>}, {pipeline_mode = #tpu.pipeline_mode<synchronous>, transform_indices = @transform_10, window_bounds = array<i64: 2, 64, 32>}, {pipeline_mode = #tpu.pipeline_mode<synchronous>, transform_indices = @transform_11, window_bounds = array<i64: 2, 1, 32>}, {pipeline_mode = #tpu.pipeline_mode<synchronous>, transform_indices = @transform_12, window_bounds = array<i64: 2, 1, 32>}, {pipeline_mode = #tpu.pipeline_mode<synchronous>, transform_indices = @transform_13, window_bounds = array<i64: 2, 1, 32>}, {pipeline_mode = #tpu.pipeline_mode<synchronous>, transform_indices = @transform_14, window_bounds = array<i64: 2, 1, 32>}, {pipeline_mode = #tpu.pipeline_mode<synchronous>, transform_indices = @transform_15, window_bounds = array<i64: 2, 1, 32>}, {pipeline_mode = #tpu.pipeline_mode<synchronous>, transform_indices = @transform_16, window_bounds = array<i64: 32, 16>}, {pipeline_mode = #tpu.pipeline_mode<synchronous>, transform_indices = @transform_17, window_bounds = array<i64: 1, 16>}, {pipeline_mode = #tpu.pipeline_mode<synchronous>, transform_indices = @transform_18, window_bounds = array<i64: 16, 16>}]} {
    %c0 = arith.constant 0 : index
    %c0_0 = arith.constant 0 : index
    %0 = vector.load %arg1[%c0, %c0_0] : memref<16x32xf32, #tpu.memory_space<vmem>>, vector<16x32xf32>
    %cst = arith.constant 5.65685415 : f32
    %1 = vector.broadcast %cst : f32 to vector<16x32xf32>
    %2 = arith.mulf %0, %1 : vector<16x32xf32>
    %3 = vector.shape_cast %2 : vector<16x32xf32> to vector<2x8x32xf32>
    %c0_1 = arith.constant 0 : index
    %c0_2 = arith.constant 0 : index
    %4 = vector.load %arg2[%c0_1, %c0_2] : memref<8x32xf32, #tpu.memory_space<vmem>>, vector<8x32xf32>
    %5 = vector.shape_cast %4 : vector<8x32xf32> to vector<1x8x32xf32>
    %6 = vector.broadcast %5 : vector<1x8x32xf32> to vector<2x8x32xf32>
    %7 = arith.addf %3, %6 : vector<2x8x32xf32>
    %8 = vector.shape_cast %7 : vector<2x8x32xf32> to vector<16x32xf32>
    %c0_3 = arith.constant 0 : index
    %c0_4 = arith.constant 0 : index
    %9 = vector.load %arg3[%c0_3, %c0_4] : memref<8x8xf32, #tpu.memory_space<vmem>>, vector<8x8xf32>
    %10 = vector.shape_cast %9 : vector<8x8xf32> to vector<1x8x8xf32>
    %c0_5 = arith.constant 0 : index
    %c0_6 = arith.constant 0 : index
    %c0_7 = arith.constant 0 : index
    %11 = vector.load %arg4[%c0_5, %c0_6, %c0_7] : memref<2x1x8xf32, #tpu.memory_space<vmem>>, vector<2x1x8xf32>
    %12 = vector.broadcast %10 : vector<1x8x8xf32> to vector<2x8x8xf32>
    %13 = vector.broadcast %11 : vector<2x1x8xf32> to vector<2x8x8xf32>
    %14 = arith.addf %12, %13 : vector<2x8x8xf32>
    %15 = arith.truncf %8 : vector<16x32xf32> to vector<16x32xbf16>
    %c0_8 = arith.constant 0 : index
    %c0_9 = arith.constant 0 : index
    %c0_10 = arith.constant 0 : index
    %16 = vector.load %arg5[%c0_8, %c0_9, %c0_10] : memref<2x32x96xbf16, #tpu.memory_space<vmem>>, vector<1x32x96xbf16>
    %17 = vector.shape_cast %16 : vector<1x32x96xbf16> to vector<32x96xbf16>
    %cst_11 = arith.constant dense<0.000000e+00> : vector<16x96xf32>
    %18 = tpu.matmul %15, %17, %cst_11 {dimension_numbers = #tpu.dot_dimension_numbers<[1], [0], [0], [1], [0, 0, 1, 1], [], []>} : vector<16x32xbf16>, vector<32x96xbf16>, vector<16x96xf32> -> vector<16x96xf32>
    %c0_12 = arith.constant 0 : index
    %c0_13 = arith.constant 0 : index
    %c0_14 = arith.constant 0 : index
    %19 = vector.load %arg6[%c0_12, %c0_13, %c0_14] : memref<2x1x96xf32, #tpu.memory_space<vmem>>, vector<1x1x96xf32>
    %20 = vector.shape_cast %19 : vector<1x1x96xf32> to vector<1x96xf32>
    %21 = vector.broadcast %20 : vector<1x96xf32> to vector<16x96xf32>
    %22 = arith.addf %18, %21 : vector<16x96xf32>
    %23 = vector.shape_cast %22 : vector<16x96xf32> to vector<2x8x96xf32>
    %24 = arith.truncf %23 : vector<2x8x96xf32> to vector<2x8x96xbf16>
    %25 = vector.extract_strided_slice %24 {offsets = [0, 0, 0], sizes = [2, 8, 8], strides = [1, 1, 1]} : vector<2x8x96xbf16> to vector<2x8x8xbf16>
    %26 = vector.extract_strided_slice %24 {offsets = [0, 0, 32], sizes = [2, 8, 8], strides = [1, 1, 1]} : vector<2x8x96xbf16> to vector<2x8x8xbf16>
    %27 = vector.extract_strided_slice %24 {offsets = [0, 0, 64], sizes = [2, 8, 8], strides = [1, 1, 1]} : vector<2x8x96xbf16> to vector<2x8x8xbf16>
    "tpu.trace_start"() <{level = 10 : i32, message = "bqd,bkd->bqk"}> : () -> ()
    %cst_15 = arith.constant dense<0.000000e+00> : vector<2x8x8xf32>
    %28 = tpu.matmul %25, %26, %cst_15 {dimension_numbers = #tpu.dot_dimension_numbers<[2], [2], [1], [1], [0, 0, 0, 1, 1, 1], [0], [0]>} : vector<2x8x8xbf16>, vector<2x8x8xbf16>, vector<2x8x8xf32> -> vector<2x8x8xf32>
    "tpu.trace_stop"() : () -> ()
    %29 = arith.addf %28, %14 : vector<2x8x8xf32>
    %cst_16 = arith.constant dense<0xFF800000> : vector<2x8xf32>
    %30 = vector.multi_reduction <maximumf>, %29, %cst_16 [2] : vector<2x8x8xf32> to vector<2x8xf32>
    %31 = vector.shape_cast %30 : vector<2x8xf32> to vector<2x8x1xf32>
    %32 = vector.broadcast %31 : vector<2x8x1xf32> to vector<2x8x8xf32>
    %33 = arith.subf %29, %32 : vector<2x8x8xf32>
    %34 = math.exp %33 : vector<2x8x8xf32>
    %cst_17 = arith.constant dense<0.000000e+00> : vector<2x8xf32>
    %35 = vector.multi_reduction <add>, %34, %cst_17 [2] : vector<2x8x8xf32> to vector<2x8xf32>
    %36 = vector.shape_cast %35 : vector<2x8xf32> to vector<2x8x1xf32>
    %37 = tpu.reciprocal %36 {approx = true} : vector<2x8x1xf32> -> vector<2x8x1xf32>
    %38 = vector.broadcast %37 : vector<2x8x1xf32> to vector<2x8x8xf32>
    %39 = arith.mulf %34, %38 : vector<2x8x8xf32>
    %40 = arith.truncf %39 : vector<2x8x8xf32> to vector<2x8x8xbf16>
    "tpu.trace_start"() <{level = 10 : i32, message = "bqk,bkd->bqd"}> : () -> ()
    %cst_18 = arith.constant dense<0.000000e+00> : vector<2x8x8xf32>
    %41 = tpu.matmul %40, %27, %cst_18 {dimension_numbers = #tpu.dot_dimension_numbers<[2], [1], [1], [2], [0, 0, 0, 1, 1, 2], [0], [0]>} : vector<2x8x8xbf16>, vector<2x8x8xbf16>, vector<2x8x8xf32> -> vector<2x8x8xf32>
    "tpu.trace_stop"() : () -> ()
    %42 = vector.extract_strided_slice %24 {offsets = [0, 0, 8], sizes = [2, 8, 8], strides = [1, 1, 1]} : vector<2x8x96xbf16> to vector<2x8x8xbf16>
    %43 = vector.extract_strided_slice %24 {offsets = [0, 0, 40], sizes = [2, 8, 8], strides = [1, 1, 1]} : vector<2x8x96xbf16> to vector<2x8x8xbf16>
    %44 = vector.extract_strided_slice %24 {offsets = [0, 0, 72], sizes = [2, 8, 8], strides = [1, 1, 1]} : vector<2x8x96xbf16> to vector<2x8x8xbf16>
    "tpu.trace_start"() <{level = 10 : i32, message = "bqd,bkd->bqk"}> : () -> ()
    %cst_19 = arith.constant dense<0.000000e+00> : vector<2x8x8xf32>
    %45 = tpu.matmul %42, %43, %cst_19 {dimension_numbers = #tpu.dot_dimension_numbers<[2], [2], [1], [1], [0, 0, 0, 1, 1, 1], [0], [0]>} : vector<2x8x8xbf16>, vector<2x8x8xbf16>, vector<2x8x8xf32> -> vector<2x8x8xf32>
    "tpu.trace_stop"() : () -> ()
    %46 = arith.addf %45, %14 : vector<2x8x8xf32>
    %cst_20 = arith.constant dense<0xFF800000> : vector<2x8xf32>
    %47 = vector.multi_reduction <maximumf>, %46, %cst_20 [2] : vector<2x8x8xf32> to vector<2x8xf32>
    %48 = vector.shape_cast %47 : vector<2x8xf32> to vector<2x8x1xf32>
    %49 = vector.broadcast %48 : vector<2x8x1xf32> to vector<2x8x8xf32>
    %50 = arith.subf %46, %49 : vector<2x8x8xf32>
    %51 = math.exp %50 : vector<2x8x8xf32>
    %cst_21 = arith.constant dense<0.000000e+00> : vector<2x8xf32>
    %52 = vector.multi_reduction <add>, %51, %cst_21 [2] : vector<2x8x8xf32> to vector<2x8xf32>
    %53 = vector.shape_cast %52 : vector<2x8xf32> to vector<2x8x1xf32>
    %54 = tpu.reciprocal %53 {approx = true} : vector<2x8x1xf32> -> vector<2x8x1xf32>
    %55 = vector.broadcast %54 : vector<2x8x1xf32> to vector<2x8x8xf32>
    %56 = arith.mulf %51, %55 : vector<2x8x8xf32>
    %57 = arith.truncf %56 : vector<2x8x8xf32> to vector<2x8x8xbf16>
    "tpu.trace_start"() <{level = 10 : i32, message = "bqk,bkd->bqd"}> : () -> ()
    %cst_22 = arith.constant dense<0.000000e+00> : vector<2x8x8xf32>
    %58 = tpu.matmul %57, %44, %cst_22 {dimension_numbers = #tpu.dot_dimension_numbers<[2], [1], [1], [2], [0, 0, 0, 1, 1, 2], [0], [0]>} : vector<2x8x8xbf16>, vector<2x8x8xbf16>, vector<2x8x8xf32> -> vector<2x8x8xf32>
    "tpu.trace_stop"() : () -> ()
    %59 = vector.extract_strided_slice %24 {offsets = [0, 0, 16], sizes = [2, 8, 8], strides = [1, 1, 1]} : vector<2x8x96xbf16> to vector<2x8x8xbf16>
    %60 = vector.extract_strided_slice %24 {offsets = [0, 0, 48], sizes = [2, 8, 8], strides = [1, 1, 1]} : vector<2x8x96xbf16> to vector<2x8x8xbf16>
    %61 = vector.extract_strided_slice %24 {offsets = [0, 0, 80], sizes = [2, 8, 8], strides = [1, 1, 1]} : vector<2x8x96xbf16> to vector<2x8x8xbf16>
    "tpu.trace_start"() <{level = 10 : i32, message = "bqd,bkd->bqk"}> : () -> ()
    %cst_23 = arith.constant dense<0.000000e+00> : vector<2x8x8xf32>
    %62 = tpu.matmul %59, %60, %cst_23 {dimension_numbers = #tpu.dot_dimension_numbers<[2], [2], [1], [1], [0, 0, 0, 1, 1, 1], [0], [0]>} : vector<2x8x8xbf16>, vector<2x8x8xbf16>, vector<2x8x8xf32> -> vector<2x8x8xf32>
    "tpu.trace_stop"() : () -> ()
    %63 = arith.addf %62, %14 : vector<2x8x8xf32>
    %cst_24 = arith.constant dense<0xFF800000> : vector<2x8xf32>
    %64 = vector.multi_reduction <maximumf>, %63, %cst_24 [2] : vector<2x8x8xf32> to vector<2x8xf32>
    %65 = vector.shape_cast %64 : vector<2x8xf32> to vector<2x8x1xf32>
    %66 = vector.broadcast %65 : vector<2x8x1xf32> to vector<2x8x8xf32>
    %67 = arith.subf %63, %66 : vector<2x8x8xf32>
    %68 = math.exp %67 : vector<2x8x8xf32>
    %cst_25 = arith.constant dense<0.000000e+00> : vector<2x8xf32>
    %69 = vector.multi_reduction <add>, %68, %cst_25 [2] : vector<2x8x8xf32> to vector<2x8xf32>
    %70 = vector.shape_cast %69 : vector<2x8xf32> to vector<2x8x1xf32>
    %71 = tpu.reciprocal %70 {approx = true} : vector<2x8x1xf32> -> vector<2x8x1xf32>
    %72 = vector.broadcast %71 : vector<2x8x1xf32> to vector<2x8x8xf32>
    %73 = arith.mulf %68, %72 : vector<2x8x8xf32>
    %74 = arith.truncf %73 : vector<2x8x8xf32> to vector<2x8x8xbf16>
    "tpu.trace_start"() <{level = 10 : i32, message = "bqk,bkd->bqd"}> : () -> ()
    %cst_26 = arith.constant dense<0.000000e+00> : vector<2x8x8xf32>
    %75 = tpu.matmul %74, %61, %cst_26 {dimension_numbers = #tpu.dot_dimension_numbers<[2], [1], [1], [2], [0, 0, 0, 1, 1, 2], [0], [0]>} : vector<2x8x8xbf16>, vector<2x8x8xbf16>, vector<2x8x8xf32> -> vector<2x8x8xf32>
    "tpu.trace_stop"() : () -> ()
    %76 = vector.extract_strided_slice %24 {offsets = [0, 0, 24], sizes = [2, 8, 8], strides = [1, 1, 1]} : vector<2x8x96xbf16> to vector<2x8x8xbf16>
    %77 = vector.extract_strided_slice %24 {offsets = [0, 0, 56], sizes = [2, 8, 8], strides = [1, 1, 1]} : vector<2x8x96xbf16> to vector<2x8x8xbf16>
    %78 = vector.extract_strided_slice %24 {offsets = [0, 0, 88], sizes = [2, 8, 8], strides = [1, 1, 1]} : vector<2x8x96xbf16> to vector<2x8x8xbf16>
    "tpu.trace_start"() <{level = 10 : i32, message = "bqd,bkd->bqk"}> : () -> ()
    %cst_27 = arith.constant dense<0.000000e+00> : vector<2x8x8xf32>
    %79 = tpu.matmul %76, %77, %cst_27 {dimension_numbers = #tpu.dot_dimension_numbers<[2], [2], [1], [1], [0, 0, 0, 1, 1, 1], [0], [0]>} : vector<2x8x8xbf16>, vector<2x8x8xbf16>, vector<2x8x8xf32> -> vector<2x8x8xf32>
    "tpu.trace_stop"() : () -> ()
    %80 = arith.addf %79, %14 : vector<2x8x8xf32>
    %cst_28 = arith.constant dense<0xFF800000> : vector<2x8xf32>
    %81 = vector.multi_reduction <maximumf>, %80, %cst_28 [2] : vector<2x8x8xf32> to vector<2x8xf32>
    %82 = vector.shape_cast %81 : vector<2x8xf32> to vector<2x8x1xf32>
    %83 = vector.broadcast %82 : vector<2x8x1xf32> to vector<2x8x8xf32>
    %84 = arith.subf %80, %83 : vector<2x8x8xf32>
    %85 = math.exp %84 : vector<2x8x8xf32>
    %cst_29 = arith.constant dense<0.000000e+00> : vector<2x8xf32>
    %86 = vector.multi_reduction <add>, %85, %cst_29 [2] : vector<2x8x8xf32> to vector<2x8xf32>
    %87 = vector.shape_cast %86 : vector<2x8xf32> to vector<2x8x1xf32>
    %88 = tpu.reciprocal %87 {approx = true} : vector<2x8x1xf32> -> vector<2x8x1xf32>
    %89 = vector.broadcast %88 : vector<2x8x1xf32> to vector<2x8x8xf32>
    %90 = arith.mulf %85, %89 : vector<2x8x8xf32>
    %91 = arith.truncf %90 : vector<2x8x8xf32> to vector<2x8x8xbf16>
    "tpu.trace_start"() <{level = 10 : i32, message = "bqk,bkd->bqd"}> : () -> ()
    %cst_30 = arith.constant dense<0.000000e+00> : vector<2x8x8xf32>
    %92 = tpu.matmul %91, %78, %cst_30 {dimension_numbers = #tpu.dot_dimension_numbers<[2], [1], [1], [2], [0, 0, 0, 1, 1, 2], [0], [0]>} : vector<2x8x8xbf16>, vector<2x8x8xbf16>, vector<2x8x8xf32> -> vector<2x8x8xf32>
    "tpu.trace_stop"() : () -> ()
    %93 = tpu.concatenate %41, %58, %75, %92 in 2 : vector<2x8x8xf32>, vector<2x8x8xf32>, vector<2x8x8xf32>, vector<2x8x8xf32> -> vector<2x8x32xf32>
    %94 = vector.shape_cast %93 : vector<2x8x32xf32> to vector<16x32xf32>
    %95 = arith.truncf %94 : vector<16x32xf32> to vector<16x32xbf16>
    %c0_31 = arith.constant 0 : index
    %c0_32 = arith.constant 0 : index
    %c0_33 = arith.constant 0 : index
    %96 = vector.load %arg7[%c0_31, %c0_32, %c0_33] : memref<2x32x32xbf16, #tpu.memory_space<vmem>>, vector<1x32x32xbf16>
    %97 = vector.shape_cast %96 : vector<1x32x32xbf16> to vector<32x32xbf16>
    %cst_34 = arith.constant dense<0.000000e+00> : vector<16x32xf32>
    %98 = tpu.matmul %95, %97, %cst_34 {dimension_numbers = #tpu.dot_dimension_numbers<[1], [0], [0], [1], [0, 0, 1, 1], [], []>} : vector<16x32xbf16>, vector<32x32xbf16>, vector<16x32xf32> -> vector<16x32xf32>
    %c0_35 = arith.constant 0 : index
    %c0_36 = arith.constant 0 : index
    %c0_37 = arith.constant 0 : index
    %99 = vector.load %arg8[%c0_35, %c0_36, %c0_37] : memref<2x1x32xf32, #tpu.memory_space<vmem>>, vector<1x1x32xf32>
    %100 = vector.shape_cast %99 : vector<1x1x32xf32> to vector<1x32xf32>
    %101 = vector.broadcast %100 : vector<1x32xf32> to vector<16x32xf32>
    %102 = arith.addf %98, %101 : vector<16x32xf32>
    %103 = arith.addf %8, %102 : vector<16x32xf32>
    %c0_38 = arith.constant 0 : index
    %c0_39 = arith.constant 0 : index
    %c0_40 = arith.constant 0 : index
    %104 = vector.load %arg13[%c0_38, %c0_39, %c0_40] : memref<2x1x32xf32, #tpu.memory_space<vmem>>, vector<1x1x32xf32>
    %105 = vector.shape_cast %104 : vector<1x1x32xf32> to vector<1x32xf32>
    %c0_41 = arith.constant 0 : index
    %c0_42 = arith.constant 0 : index
    %c0_43 = arith.constant 0 : index
    %106 = vector.load %arg14[%c0_41, %c0_42, %c0_43] : memref<2x1x32xf32, #tpu.memory_space<vmem>>, vector<1x1x32xf32>
    %107 = vector.shape_cast %106 : vector<1x1x32xf32> to vector<1x32xf32>
    %cst_44 = arith.constant dense<0.000000e+00> : vector<16xf32>
    %108 = vector.multi_reduction <add>, %103, %cst_44 [1] : vector<16x32xf32> to vector<16xf32>
    %109 = vector.shape_cast %108 : vector<16xf32> to vector<16x1xf32>
    %cst_45 = arith.constant 3.200000e+01 : f32
    %110 = vector.broadcast %cst_45 : f32 to vector<16x1xf32>
    %111 = arith.divf %109, %110 : vector<16x1xf32>
    %112 = vector.broadcast %111 : vector<16x1xf32> to vector<16x32xf32>
    %113 = arith.subf %103, %112 : vector<16x32xf32>
    %114 = arith.mulf %113, %113 : vector<16x32xf32>
    %cst_46 = arith.constant dense<0.000000e+00> : vector<16xf32>
    %115 = vector.multi_reduction <add>, %114, %cst_46 [1] : vector<16x32xf32> to vector<16xf32>
    %116 = vector.shape_cast %115 : vector<16xf32> to vector<16x1xf32>
    %cst_47 = arith.constant 3.200000e+01 : f32
    %117 = vector.broadcast %cst_47 : f32 to vector<16x1xf32>
    %118 = arith.divf %116, %117 : vector<16x1xf32>
    %119 = vector.broadcast %111 : vector<16x1xf32> to vector<16x32xf32>
    %120 = arith.subf %103, %119 : vector<16x32xf32>
    %cst_48 = arith.constant 9.99999974E-6 : f32
    %121 = vector.broadcast %cst_48 : f32 to vector<16x1xf32>
    %122 = arith.addf %118, %121 : vector<16x1xf32>
    %123 = math.rsqrt %122 : vector<16x1xf32>
    %124 = vector.broadcast %123 : vector<16x1xf32> to vector<16x32xf32>
    %125 = arith.mulf %120, %124 : vector<16x32xf32>
    %126 = vector.broadcast %105 : vector<1x32xf32> to vector<16x32xf32>
    %127 = arith.mulf %125, %126 : vector<16x32xf32>
    %128 = vector.broadcast %107 : vector<1x32xf32> to vector<16x32xf32>
    %129 = arith.addf %127, %128 : vector<16x32xf32>
    %130 = arith.truncf %129 : vector<16x32xf32> to vector<16x32xbf16>
    %c0_49 = arith.constant 0 : index
    %c0_50 = arith.constant 0 : index
    %c0_51 = arith.constant 0 : index
    %131 = vector.load %arg9[%c0_49, %c0_50, %c0_51] : memref<2x32x64xbf16, #tpu.memory_space<vmem>>, vector<1x32x64xbf16>
    %132 = vector.shape_cast %131 : vector<1x32x64xbf16> to vector<32x64xbf16>
    %cst_52 = arith.constant dense<0.000000e+00> : vector<16x64xf32>
    %133 = tpu.matmul %130, %132, %cst_52 {dimension_numbers = #tpu.dot_dimension_numbers<[1], [0], [0], [1], [0, 0, 1, 1], [], []>} : vector<16x32xbf16>, vector<32x64xbf16>, vector<16x64xf32> -> vector<16x64xf32>
    %c0_53 = arith.constant 0 : index
    %c0_54 = arith.constant 0 : index
    %c0_55 = arith.constant 0 : index
    %134 = vector.load %arg10[%c0_53, %c0_54, %c0_55] : memref<2x1x64xf32, #tpu.memory_space<vmem>>, vector<1x1x64xf32>
    %135 = vector.shape_cast %134 : vector<1x1x64xf32> to vector<1x64xf32>
    %136 = vector.broadcast %135 : vector<1x64xf32> to vector<16x64xf32>
    %137 = arith.addf %133, %136 : vector<16x64xf32>
    %cst_56 = arith.constant 0.000000e+00 : f32
    %138 = vector.broadcast %cst_56 : f32 to vector<16x64xf32>
    %139 = arith.maximumf %137, %138 : vector<16x64xf32>
    %140 = arith.truncf %139 : vector<16x64xf32> to vector<16x64xbf16>
    %c0_57 = arith.constant 0 : index
    %c0_58 = arith.constant 0 : index
    %c0_59 = arith.constant 0 : index
    %141 = vector.load %arg11[%c0_57, %c0_58, %c0_59] : memref<2x64x32xbf16, #tpu.memory_space<vmem>>, vector<1x64x32xbf16>
    %142 = vector.shape_cast %141 : vector<1x64x32xbf16> to vector<64x32xbf16>
    %cst_60 = arith.constant dense<0.000000e+00> : vector<16x32xf32>
    %143 = tpu.matmul %140, %142, %cst_60 {dimension_numbers = #tpu.dot_dimension_numbers<[1], [0], [0], [1], [0, 0, 1, 1], [], []>} : vector<16x64xbf16>, vector<64x32xbf16>, vector<16x32xf32> -> vector<16x32xf32>
    %c0_61 = arith.constant 0 : index
    %c0_62 = arith.constant 0 : index
    %c0_63 = arith.constant 0 : index
    %144 = vector.load %arg12[%c0_61, %c0_62, %c0_63] : memref<2x1x32xf32, #tpu.memory_space<vmem>>, vector<1x1x32xf32>
    %145 = vector.shape_cast %144 : vector<1x1x32xf32> to vector<1x32xf32>
    %146 = vector.broadcast %145 : vector<1x32xf32> to vector<16x32xf32>
    %147 = arith.addf %143, %146 : vector<16x32xf32>
    %148 = arith.addf %129, %147 : vector<16x32xf32>
    %c0_64 = arith.constant 0 : index
    %c0_65 = arith.constant 0 : index
    %c0_66 = arith.constant 0 : index
    %149 = vector.load %arg15[%c0_64, %c0_65, %c0_66] : memref<2x1x32xf32, #tpu.memory_space<vmem>>, vector<1x1x32xf32>
    %150 = vector.shape_cast %149 : vector<1x1x32xf32> to vector<1x32xf32>
    %c0_67 = arith.constant 0 : index
    %c0_68 = arith.constant 0 : index
    %c0_69 = arith.constant 0 : index
    %151 = vector.load %arg16[%c0_67, %c0_68, %c0_69] : memref<2x1x32xf32, #tpu.memory_space<vmem>>, vector<1x1x32xf32>
    %152 = vector.shape_cast %151 : vector<1x1x32xf32> to vector<1x32xf32>
    %cst_70 = arith.constant dense<0.000000e+00> : vector<16xf32>
    %153 = vector.multi_reduction <add>, %148, %cst_70 [1] : vector<16x32xf32> to vector<16xf32>
    %154 = vector.shape_cast %153 : vector<16xf32> to vector<16x1xf32>
    %cst_71 = arith.constant 3.200000e+01 : f32
    %155 = vector.broadcast %cst_71 : f32 to vector<16x1xf32>
    %156 = arith.divf %154, %155 : vector<16x1xf32>
    %157 = vector.broadcast %156 : vector<16x1xf32> to vector<16x32xf32>
    %158 = arith.subf %148, %157 : vector<16x32xf32>
    %159 = arith.mulf %158, %158 : vector<16x32xf32>
    %cst_72 = arith.constant dense<0.000000e+00> : vector<16xf32>
    %160 = vector.multi_reduction <add>, %159, %cst_72 [1] : vector<16x32xf32> to vector<16xf32>
    %161 = vector.shape_cast %160 : vector<16xf32> to vector<16x1xf32>
    %cst_73 = arith.constant 3.200000e+01 : f32
    %162 = vector.broadcast %cst_73 : f32 to vector<16x1xf32>
    %163 = arith.divf %161, %162 : vector<16x1xf32>
    %164 = vector.broadcast %156 : vector<16x1xf32> to vector<16x32xf32>
    %165 = arith.subf %148, %164 : vector<16x32xf32>
    %cst_74 = arith.constant 9.99999974E-6 : f32
    %166 = vector.broadcast %cst_74 : f32 to vector<16x1xf32>
    %167 = arith.addf %163, %166 : vector<16x1xf32>
    %168 = math.rsqrt %167 : vector<16x1xf32>
    %169 = vector.broadcast %168 : vector<16x1xf32> to vector<16x32xf32>
    %170 = arith.mulf %165, %169 : vector<16x32xf32>
    %171 = vector.broadcast %150 : vector<1x32xf32> to vector<16x32xf32>
    %172 = arith.mulf %170, %171 : vector<16x32xf32>
    %173 = vector.broadcast %152 : vector<1x32xf32> to vector<16x32xf32>
    %174 = arith.addf %172, %173 : vector<16x32xf32>
    %175 = arith.truncf %174 : vector<16x32xf32> to vector<16x32xbf16>
    %c1 = arith.constant 1 : index
    %c0_75 = arith.constant 0 : index
    %c0_76 = arith.constant 0 : index
    %176 = vector.load %arg5[%c1, %c0_75, %c0_76] : memref<2x32x96xbf16, #tpu.memory_space<vmem>>, vector<1x32x96xbf16>
    %177 = vector.shape_cast %176 : vector<1x32x96xbf16> to vector<32x96xbf16>
    %cst_77 = arith.constant dense<0.000000e+00> : vector<16x96xf32>
    %178 = tpu.matmul %175, %177, %cst_77 {dimension_numbers = #tpu.dot_dimension_numbers<[1], [0], [0], [1], [0, 0, 1, 1], [], []>} : vector<16x32xbf16>, vector<32x96xbf16>, vector<16x96xf32> -> vector<16x96xf32>
    %c1_78 = arith.constant 1 : index
    %c0_79 = arith.constant 0 : index
    %c0_80 = arith.constant 0 : index
    %179 = vector.load %arg6[%c1_78, %c0_79, %c0_80] : memref<2x1x96xf32, #tpu.memory_space<vmem>>, vector<1x1x96xf32>
    %180 = vector.shape_cast %179 : vector<1x1x96xf32> to vector<1x96xf32>
    %181 = vector.broadcast %180 : vector<1x96xf32> to vector<16x96xf32>
    %182 = arith.addf %178, %181 : vector<16x96xf32>
    %183 = vector.shape_cast %182 : vector<16x96xf32> to vector<2x8x96xf32>
    %184 = arith.truncf %183 : vector<2x8x96xf32> to vector<2x8x96xbf16>
    %185 = vector.extract_strided_slice %184 {offsets = [0, 0, 0], sizes = [2, 8, 8], strides = [1, 1, 1]} : vector<2x8x96xbf16> to vector<2x8x8xbf16>
    %186 = vector.extract_strided_slice %184 {offsets = [0, 0, 32], sizes = [2, 8, 8], strides = [1, 1, 1]} : vector<2x8x96xbf16> to vector<2x8x8xbf16>
    %187 = vector.extract_strided_slice %184 {offsets = [0, 0, 64], sizes = [2, 8, 8], strides = [1, 1, 1]} : vector<2x8x96xbf16> to vector<2x8x8xbf16>
    "tpu.trace_start"() <{level = 10 : i32, message = "bqd,bkd->bqk"}> : () -> ()
    %cst_81 = arith.constant dense<0.000000e+00> : vector<2x8x8xf32>
    %188 = tpu.matmul %185, %186, %cst_81 {dimension_numbers = #tpu.dot_dimension_numbers<[2], [2], [1], [1], [0, 0, 0, 1, 1, 1], [0], [0]>} : vector<2x8x8xbf16>, vector<2x8x8xbf16>, vector<2x8x8xf32> -> vector<2x8x8xf32>
    "tpu.trace_stop"() : () -> ()
    %189 = arith.addf %188, %14 : vector<2x8x8xf32>
    %cst_82 = arith.constant dense<0xFF800000> : vector<2x8xf32>
    %190 = vector.multi_reduction <maximumf>, %189, %cst_82 [2] : vector<2x8x8xf32> to vector<2x8xf32>
    %191 = vector.shape_cast %190 : vector<2x8xf32> to vector<2x8x1xf32>
    %192 = vector.broadcast %191 : vector<2x8x1xf32> to vector<2x8x8xf32>
    %193 = arith.subf %189, %192 : vector<2x8x8xf32>
    %194 = math.exp %193 : vector<2x8x8xf32>
    %cst_83 = arith.constant dense<0.000000e+00> : vector<2x8xf32>
    %195 = vector.multi_reduction <add>, %194, %cst_83 [2] : vector<2x8x8xf32> to vector<2x8xf32>
    %196 = vector.shape_cast %195 : vector<2x8xf32> to vector<2x8x1xf32>
    %197 = tpu.reciprocal %196 {approx = true} : vector<2x8x1xf32> -> vector<2x8x1xf32>
    %198 = vector.broadcast %197 : vector<2x8x1xf32> to vector<2x8x8xf32>
    %199 = arith.mulf %194, %198 : vector<2x8x8xf32>
    %200 = arith.truncf %199 : vector<2x8x8xf32> to vector<2x8x8xbf16>
    "tpu.trace_start"() <{level = 10 : i32, message = "bqk,bkd->bqd"}> : () -> ()
    %cst_84 = arith.constant dense<0.000000e+00> : vector<2x8x8xf32>
    %201 = tpu.matmul %200, %187, %cst_84 {dimension_numbers = #tpu.dot_dimension_numbers<[2], [1], [1], [2], [0, 0, 0, 1, 1, 2], [0], [0]>} : vector<2x8x8xbf16>, vector<2x8x8xbf16>, vector<2x8x8xf32> -> vector<2x8x8xf32>
    "tpu.trace_stop"() : () -> ()
    %202 = vector.extract_strided_slice %184 {offsets = [0, 0, 8], sizes = [2, 8, 8], strides = [1, 1, 1]} : vector<2x8x96xbf16> to vector<2x8x8xbf16>
    %203 = vector.extract_strided_slice %184 {offsets = [0, 0, 40], sizes = [2, 8, 8], strides = [1, 1, 1]} : vector<2x8x96xbf16> to vector<2x8x8xbf16>
    %204 = vector.extract_strided_slice %184 {offsets = [0, 0, 72], sizes = [2, 8, 8], strides = [1, 1, 1]} : vector<2x8x96xbf16> to vector<2x8x8xbf16>
    "tpu.trace_start"() <{level = 10 : i32, message = "bqd,bkd->bqk"}> : () -> ()
    %cst_85 = arith.constant dense<0.000000e+00> : vector<2x8x8xf32>
    %205 = tpu.matmul %202, %203, %cst_85 {dimension_numbers = #tpu.dot_dimension_numbers<[2], [2], [1], [1], [0, 0, 0, 1, 1, 1], [0], [0]>} : vector<2x8x8xbf16>, vector<2x8x8xbf16>, vector<2x8x8xf32> -> vector<2x8x8xf32>
    "tpu.trace_stop"() : () -> ()
    %206 = arith.addf %205, %14 : vector<2x8x8xf32>
    %cst_86 = arith.constant dense<0xFF800000> : vector<2x8xf32>
    %207 = vector.multi_reduction <maximumf>, %206, %cst_86 [2] : vector<2x8x8xf32> to vector<2x8xf32>
    %208 = vector.shape_cast %207 : vector<2x8xf32> to vector<2x8x1xf32>
    %209 = vector.broadcast %208 : vector<2x8x1xf32> to vector<2x8x8xf32>
    %210 = arith.subf %206, %209 : vector<2x8x8xf32>
    %211 = math.exp %210 : vector<2x8x8xf32>
    %cst_87 = arith.constant dense<0.000000e+00> : vector<2x8xf32>
    %212 = vector.multi_reduction <add>, %211, %cst_87 [2] : vector<2x8x8xf32> to vector<2x8xf32>
    %213 = vector.shape_cast %212 : vector<2x8xf32> to vector<2x8x1xf32>
    %214 = tpu.reciprocal %213 {approx = true} : vector<2x8x1xf32> -> vector<2x8x1xf32>
    %215 = vector.broadcast %214 : vector<2x8x1xf32> to vector<2x8x8xf32>
    %216 = arith.mulf %211, %215 : vector<2x8x8xf32>
    %217 = arith.truncf %216 : vector<2x8x8xf32> to vector<2x8x8xbf16>
    "tpu.trace_start"() <{level = 10 : i32, message = "bqk,bkd->bqd"}> : () -> ()
    %cst_88 = arith.constant dense<0.000000e+00> : vector<2x8x8xf32>
    %218 = tpu.matmul %217, %204, %cst_88 {dimension_numbers = #tpu.dot_dimension_numbers<[2], [1], [1], [2], [0, 0, 0, 1, 1, 2], [0], [0]>} : vector<2x8x8xbf16>, vector<2x8x8xbf16>, vector<2x8x8xf32> -> vector<2x8x8xf32>
    "tpu.trace_stop"() : () -> ()
    %219 = vector.extract_strided_slice %184 {offsets = [0, 0, 16], sizes = [2, 8, 8], strides = [1, 1, 1]} : vector<2x8x96xbf16> to vector<2x8x8xbf16>
    %220 = vector.extract_strided_slice %184 {offsets = [0, 0, 48], sizes = [2, 8, 8], strides = [1, 1, 1]} : vector<2x8x96xbf16> to vector<2x8x8xbf16>
    %221 = vector.extract_strided_slice %184 {offsets = [0, 0, 80], sizes = [2, 8, 8], strides = [1, 1, 1]} : vector<2x8x96xbf16> to vector<2x8x8xbf16>
    "tpu.trace_start"() <{level = 10 : i32, message = "bqd,bkd->bqk"}> : () -> ()
    %cst_89 = arith.constant dense<0.000000e+00> : vector<2x8x8xf32>
    %222 = tpu.matmul %219, %220, %cst_89 {dimension_numbers = #tpu.dot_dimension_numbers<[2], [2], [1], [1], [0, 0, 0, 1, 1, 1], [0], [0]>} : vector<2x8x8xbf16>, vector<2x8x8xbf16>, vector<2x8x8xf32> -> vector<2x8x8xf32>
    "tpu.trace_stop"() : () -> ()
    %223 = arith.addf %222, %14 : vector<2x8x8xf32>
    %cst_90 = arith.constant dense<0xFF800000> : vector<2x8xf32>
    %224 = vector.multi_reduction <maximumf>, %223, %cst_90 [2] : vector<2x8x8xf32> to vector<2x8xf32>
    %225 = vector.shape_cast %224 : vector<2x8xf32> to vector<2x8x1xf32>
    %226 = vector.broadcast %225 : vector<2x8x1xf32> to vector<2x8x8xf32>
    %227 = arith.subf %223, %226 : vector<2x8x8xf32>
    %228 = math.exp %227 : vector<2x8x8xf32>
    %cst_91 = arith.constant dense<0.000000e+00> : vector<2x8xf32>
    %229 = vector.multi_reduction <add>, %228, %cst_91 [2] : vector<2x8x8xf32> to vector<2x8xf32>
    %230 = vector.shape_cast %229 : vector<2x8xf32> to vector<2x8x1xf32>
    %231 = tpu.reciprocal %230 {approx = true} : vector<2x8x1xf32> -> vector<2x8x1xf32>
    %232 = vector.broadcast %231 : vector<2x8x1xf32> to vector<2x8x8xf32>
    %233 = arith.mulf %228, %232 : vector<2x8x8xf32>
    %234 = arith.truncf %233 : vector<2x8x8xf32> to vector<2x8x8xbf16>
    "tpu.trace_start"() <{level = 10 : i32, message = "bqk,bkd->bqd"}> : () -> ()
    %cst_92 = arith.constant dense<0.000000e+00> : vector<2x8x8xf32>
    %235 = tpu.matmul %234, %221, %cst_92 {dimension_numbers = #tpu.dot_dimension_numbers<[2], [1], [1], [2], [0, 0, 0, 1, 1, 2], [0], [0]>} : vector<2x8x8xbf16>, vector<2x8x8xbf16>, vector<2x8x8xf32> -> vector<2x8x8xf32>
    "tpu.trace_stop"() : () -> ()
    %236 = vector.extract_strided_slice %184 {offsets = [0, 0, 24], sizes = [2, 8, 8], strides = [1, 1, 1]} : vector<2x8x96xbf16> to vector<2x8x8xbf16>
    %237 = vector.extract_strided_slice %184 {offsets = [0, 0, 56], sizes = [2, 8, 8], strides = [1, 1, 1]} : vector<2x8x96xbf16> to vector<2x8x8xbf16>
    %238 = vector.extract_strided_slice %184 {offsets = [0, 0, 88], sizes = [2, 8, 8], strides = [1, 1, 1]} : vector<2x8x96xbf16> to vector<2x8x8xbf16>
    "tpu.trace_start"() <{level = 10 : i32, message = "bqd,bkd->bqk"}> : () -> ()
    %cst_93 = arith.constant dense<0.000000e+00> : vector<2x8x8xf32>
    %239 = tpu.matmul %236, %237, %cst_93 {dimension_numbers = #tpu.dot_dimension_numbers<[2], [2], [1], [1], [0, 0, 0, 1, 1, 1], [0], [0]>} : vector<2x8x8xbf16>, vector<2x8x8xbf16>, vector<2x8x8xf32> -> vector<2x8x8xf32>
    "tpu.trace_stop"() : () -> ()
    %240 = arith.addf %239, %14 : vector<2x8x8xf32>
    %cst_94 = arith.constant dense<0xFF800000> : vector<2x8xf32>
    %241 = vector.multi_reduction <maximumf>, %240, %cst_94 [2] : vector<2x8x8xf32> to vector<2x8xf32>
    %242 = vector.shape_cast %241 : vector<2x8xf32> to vector<2x8x1xf32>
    %243 = vector.broadcast %242 : vector<2x8x1xf32> to vector<2x8x8xf32>
    %244 = arith.subf %240, %243 : vector<2x8x8xf32>
    %245 = math.exp %244 : vector<2x8x8xf32>
    %cst_95 = arith.constant dense<0.000000e+00> : vector<2x8xf32>
    %246 = vector.multi_reduction <add>, %245, %cst_95 [2] : vector<2x8x8xf32> to vector<2x8xf32>
    %247 = vector.shape_cast %246 : vector<2x8xf32> to vector<2x8x1xf32>
    %248 = tpu.reciprocal %247 {approx = true} : vector<2x8x1xf32> -> vector<2x8x1xf32>
    %249 = vector.broadcast %248 : vector<2x8x1xf32> to vector<2x8x8xf32>
    %250 = arith.mulf %245, %249 : vector<2x8x8xf32>
    %251 = arith.truncf %250 : vector<2x8x8xf32> to vector<2x8x8xbf16>
    "tpu.trace_start"() <{level = 10 : i32, message = "bqk,bkd->bqd"}> : () -> ()
    %cst_96 = arith.constant dense<0.000000e+00> : vector<2x8x8xf32>
    %252 = tpu.matmul %251, %238, %cst_96 {dimension_numbers = #tpu.dot_dimension_numbers<[2], [1], [1], [2], [0, 0, 0, 1, 1, 2], [0], [0]>} : vector<2x8x8xbf16>, vector<2x8x8xbf16>, vector<2x8x8xf32> -> vector<2x8x8xf32>
    "tpu.trace_stop"() : () -> ()
    %253 = tpu.concatenate %201, %218, %235, %252 in 2 : vector<2x8x8xf32>, vector<2x8x8xf32>, vector<2x8x8xf32>, vector<2x8x8xf32> -> vector<2x8x32xf32>
    %254 = vector.shape_cast %253 : vector<2x8x32xf32> to vector<16x32xf32>
    %255 = arith.truncf %254 : vector<16x32xf32> to vector<16x32xbf16>
    %c1_97 = arith.constant 1 : index
    %c0_98 = arith.constant 0 : index
    %c0_99 = arith.constant 0 : index
    %256 = vector.load %arg7[%c1_97, %c0_98, %c0_99] : memref<2x32x32xbf16, #tpu.memory_space<vmem>>, vector<1x32x32xbf16>
    %257 = vector.shape_cast %256 : vector<1x32x32xbf16> to vector<32x32xbf16>
    %cst_100 = arith.constant dense<0.000000e+00> : vector<16x32xf32>
    %258 = tpu.matmul %255, %257, %cst_100 {dimension_numbers = #tpu.dot_dimension_numbers<[1], [0], [0], [1], [0, 0, 1, 1], [], []>} : vector<16x32xbf16>, vector<32x32xbf16>, vector<16x32xf32> -> vector<16x32xf32>
    %c1_101 = arith.constant 1 : index
    %c0_102 = arith.constant 0 : index
    %c0_103 = arith.constant 0 : index
    %259 = vector.load %arg8[%c1_101, %c0_102, %c0_103] : memref<2x1x32xf32, #tpu.memory_space<vmem>>, vector<1x1x32xf32>
    %260 = vector.shape_cast %259 : vector<1x1x32xf32> to vector<1x32xf32>
    %261 = vector.broadcast %260 : vector<1x32xf32> to vector<16x32xf32>
    %262 = arith.addf %258, %261 : vector<16x32xf32>
    %263 = arith.addf %174, %262 : vector<16x32xf32>
    %c1_104 = arith.constant 1 : index
    %c0_105 = arith.constant 0 : index
    %c0_106 = arith.constant 0 : index
    %264 = vector.load %arg13[%c1_104, %c0_105, %c0_106] : memref<2x1x32xf32, #tpu.memory_space<vmem>>, vector<1x1x32xf32>
    %265 = vector.shape_cast %264 : vector<1x1x32xf32> to vector<1x32xf32>
    %c1_107 = arith.constant 1 : index
    %c0_108 = arith.constant 0 : index
    %c0_109 = arith.constant 0 : index
    %266 = vector.load %arg14[%c1_107, %c0_108, %c0_109] : memref<2x1x32xf32, #tpu.memory_space<vmem>>, vector<1x1x32xf32>
    %267 = vector.shape_cast %266 : vector<1x1x32xf32> to vector<1x32xf32>
    %cst_110 = arith.constant dense<0.000000e+00> : vector<16xf32>
    %268 = vector.multi_reduction <add>, %263, %cst_110 [1] : vector<16x32xf32> to vector<16xf32>
    %269 = vector.shape_cast %268 : vector<16xf32> to vector<16x1xf32>
    %cst_111 = arith.constant 3.200000e+01 : f32
    %270 = vector.broadcast %cst_111 : f32 to vector<16x1xf32>
    %271 = arith.divf %269, %270 : vector<16x1xf32>
    %272 = vector.broadcast %271 : vector<16x1xf32> to vector<16x32xf32>
    %273 = arith.subf %263, %272 : vector<16x32xf32>
    %274 = arith.mulf %273, %273 : vector<16x32xf32>
    %cst_112 = arith.constant dense<0.000000e+00> : vector<16xf32>
    %275 = vector.multi_reduction <add>, %274, %cst_112 [1] : vector<16x32xf32> to vector<16xf32>
    %276 = vector.shape_cast %275 : vector<16xf32> to vector<16x1xf32>
    %cst_113 = arith.constant 3.200000e+01 : f32
    %277 = vector.broadcast %cst_113 : f32 to vector<16x1xf32>
    %278 = arith.divf %276, %277 : vector<16x1xf32>
    %279 = vector.broadcast %271 : vector<16x1xf32> to vector<16x32xf32>
    %280 = arith.subf %263, %279 : vector<16x32xf32>
    %cst_114 = arith.constant 9.99999974E-6 : f32
    %281 = vector.broadcast %cst_114 : f32 to vector<16x1xf32>
    %282 = arith.addf %278, %281 : vector<16x1xf32>
    %283 = math.rsqrt %282 : vector<16x1xf32>
    %284 = vector.broadcast %283 : vector<16x1xf32> to vector<16x32xf32>
    %285 = arith.mulf %280, %284 : vector<16x32xf32>
    %286 = vector.broadcast %265 : vector<1x32xf32> to vector<16x32xf32>
    %287 = arith.mulf %285, %286 : vector<16x32xf32>
    %288 = vector.broadcast %267 : vector<1x32xf32> to vector<16x32xf32>
    %289 = arith.addf %287, %288 : vector<16x32xf32>
    %290 = arith.truncf %289 : vector<16x32xf32> to vector<16x32xbf16>
    %c1_115 = arith.constant 1 : index
    %c0_116 = arith.constant 0 : index
    %c0_117 = arith.constant 0 : index
    %291 = vector.load %arg9[%c1_115, %c0_116, %c0_117] : memref<2x32x64xbf16, #tpu.memory_space<vmem>>, vector<1x32x64xbf16>
    %292 = vector.shape_cast %291 : vector<1x32x64xbf16> to vector<32x64xbf16>
    %cst_118 = arith.constant dense<0.000000e+00> : vector<16x64xf32>
    %293 = tpu.matmul %290, %292, %cst_118 {dimension_numbers = #tpu.dot_dimension_numbers<[1], [0], [0], [1], [0, 0, 1, 1], [], []>} : vector<16x32xbf16>, vector<32x64xbf16>, vector<16x64xf32> -> vector<16x64xf32>
    %c1_119 = arith.constant 1 : index
    %c0_120 = arith.constant 0 : index
    %c0_121 = arith.constant 0 : index
    %294 = vector.load %arg10[%c1_119, %c0_120, %c0_121] : memref<2x1x64xf32, #tpu.memory_space<vmem>>, vector<1x1x64xf32>
    %295 = vector.shape_cast %294 : vector<1x1x64xf32> to vector<1x64xf32>
    %296 = vector.broadcast %295 : vector<1x64xf32> to vector<16x64xf32>
    %297 = arith.addf %293, %296 : vector<16x64xf32>
    %cst_122 = arith.constant 0.000000e+00 : f32
    %298 = vector.broadcast %cst_122 : f32 to vector<16x64xf32>
    %299 = arith.maximumf %297, %298 : vector<16x64xf32>
    %300 = arith.truncf %299 : vector<16x64xf32> to vector<16x64xbf16>
    %c1_123 = arith.constant 1 : index
    %c0_124 = arith.constant 0 : index
    %c0_125 = arith.constant 0 : index
    %301 = vector.load %arg11[%c1_123, %c0_124, %c0_125] : memref<2x64x32xbf16, #tpu.memory_space<vmem>>, vector<1x64x32xbf16>
    %302 = vector.shape_cast %301 : vector<1x64x32xbf16> to vector<64x32xbf16>
    %cst_126 = arith.constant dense<0.000000e+00> : vector<16x32xf32>
    %303 = tpu.matmul %300, %302, %cst_126 {dimension_numbers = #tpu.dot_dimension_numbers<[1], [0], [0], [1], [0, 0, 1, 1], [], []>} : vector<16x64xbf16>, vector<64x32xbf16>, vector<16x32xf32> -> vector<16x32xf32>
    %c1_127 = arith.constant 1 : index
    %c0_128 = arith.constant 0 : index
    %c0_129 = arith.constant 0 : index
    %304 = vector.load %arg12[%c1_127, %c0_128, %c0_129] : memref<2x1x32xf32, #tpu.memory_space<vmem>>, vector<1x1x32xf32>
    %305 = vector.shape_cast %304 : vector<1x1x32xf32> to vector<1x32xf32>
    %306 = vector.broadcast %305 : vector<1x32xf32> to vector<16x32xf32>
    %307 = arith.addf %303, %306 : vector<16x32xf32>
    %308 = arith.addf %289, %307 : vector<16x32xf32>
    %c1_130 = arith.constant 1 : index
    %c0_131 = arith.constant 0 : index
    %c0_132 = arith.constant 0 : index
    %309 = vector.load %arg15[%c1_130, %c0_131, %c0_132] : memref<2x1x32xf32, #tpu.memory_space<vmem>>, vector<1x1x32xf32>
    %310 = vector.shape_cast %309 : vector<1x1x32xf32> to vector<1x32xf32>
    %c1_133 = arith.constant 1 : index
    %c0_134 = arith.constant 0 : index
    %c0_135 = arith.constant 0 : index
    %311 = vector.load %arg16[%c1_133, %c0_134, %c0_135] : memref<2x1x32xf32, #tpu.memory_space<vmem>>, vector<1x1x32xf32>
    %312 = vector.shape_cast %311 : vector<1x1x32xf32> to vector<1x32xf32>
    %cst_136 = arith.constant dense<0.000000e+00> : vector<16xf32>
    %313 = vector.multi_reduction <add>, %308, %cst_136 [1] : vector<16x32xf32> to vector<16xf32>
    %314 = vector.shape_cast %313 : vector<16xf32> to vector<16x1xf32>
    %cst_137 = arith.constant 3.200000e+01 : f32
    %315 = vector.broadcast %cst_137 : f32 to vector<16x1xf32>
    %316 = arith.divf %314, %315 : vector<16x1xf32>
    %317 = vector.broadcast %316 : vector<16x1xf32> to vector<16x32xf32>
    %318 = arith.subf %308, %317 : vector<16x32xf32>
    %319 = arith.mulf %318, %318 : vector<16x32xf32>
    %cst_138 = arith.constant dense<0.000000e+00> : vector<16xf32>
    %320 = vector.multi_reduction <add>, %319, %cst_138 [1] : vector<16x32xf32> to vector<16xf32>
    %321 = vector.shape_cast %320 : vector<16xf32> to vector<16x1xf32>
    %cst_139 = arith.constant 3.200000e+01 : f32
    %322 = vector.broadcast %cst_139 : f32 to vector<16x1xf32>
    %323 = arith.divf %321, %322 : vector<16x1xf32>
    %324 = vector.broadcast %316 : vector<16x1xf32> to vector<16x32xf32>
    %325 = arith.subf %308, %324 : vector<16x32xf32>
    %cst_140 = arith.constant 9.99999974E-6 : f32
    %326 = vector.broadcast %cst_140 : f32 to vector<16x1xf32>
    %327 = arith.addf %323, %326 : vector<16x1xf32>
    %328 = math.rsqrt %327 : vector<16x1xf32>
    %329 = vector.broadcast %328 : vector<16x1xf32> to vector<16x32xf32>
    %330 = arith.mulf %325, %329 : vector<16x32xf32>
    %331 = vector.broadcast %310 : vector<1x32xf32> to vector<16x32xf32>
    %332 = arith.mulf %330, %331 : vector<16x32xf32>
    %333 = vector.broadcast %312 : vector<1x32xf32> to vector<16x32xf32>
    %334 = arith.addf %332, %333 : vector<16x32xf32>
    %335 = arith.truncf %334 : vector<16x32xf32> to vector<16x32xbf16>
    %c0_141 = arith.constant 0 : index
    %c0_142 = arith.constant 0 : index
    %336 = vector.load %arg17[%c0_141, %c0_142] : memref<32x16xbf16, #tpu.memory_space<vmem>>, vector<32x16xbf16>
    %cst_143 = arith.constant dense<0.000000e+00> : vector<16x16xf32>
    %337 = tpu.matmul %335, %336, %cst_143 {dimension_numbers = #tpu.dot_dimension_numbers<[1], [0], [0], [1], [0, 0, 1, 1], [], []>} : vector<16x32xbf16>, vector<32x16xbf16>, vector<16x16xf32> -> vector<16x16xf32>
    %c0_144 = arith.constant 0 : index
    %c0_145 = arith.constant 0 : index
    %338 = vector.load %arg18[%c0_144, %c0_145] : memref<1x16xf32, #tpu.memory_space<vmem>>, vector<1x16xf32>
    %339 = vector.broadcast %338 : vector<1x16xf32> to vector<16x16xf32>
    %340 = arith.addf %337, %339 : vector<16x16xf32>
    %c0_146 = arith.constant 0 : index
    %c0_147 = arith.constant 0 : index
    %341 = vector.load %arg19[%c0_146, %c0_147] : memref<16x16xf32, #tpu.memory_space<vmem>>, vector<16x16xf32>
    tpu.vector_store %arg19[%c0_146, %c0_147], %340 {strides = array<i32>} : memref<16x16xf32, #tpu.memory_space<vmem>>, vector<16x16xf32>,
    return
  }
  func.func @transform_0(%arg0: i32) -> (i32, i32) {
    %c0_i32 = arith.constant 0 : i32
    %c0_i32_0 = arith.constant 0 : i32
    %c0_i32_1 = arith.constant 0 : i32
    return %c0_i32, %c0_i32_0 : i32, i32
  }
  func.func @transform_1(%arg0: i32) -> (i32, i32) {
    %c0_i32 = arith.constant 0 : i32
    %c0_i32_0 = arith.constant 0 : i32
    %c0_i32_1 = arith.constant 0 : i32
    return %c0_i32, %c0_i32_0 : i32, i32
  }
  func.func @transform_2(%arg0: i32) -> (i32, i32) {
    %c0_i32 = arith.constant 0 : i32
    %c0_i32_0 = arith.constant 0 : i32
    %c0_i32_1 = arith.constant 0 : i32
    return %c0_i32, %c0_i32_0 : i32, i32
  }
  func.func @transform_3(%arg0: i32) -> (i32, i32, i32) {
    %c0_i32 = arith.constant 0 : i32
    %c0_i32_0 = arith.constant 0 : i32
    %c0_i32_1 = arith.constant 0 : i32
    %c0_i32_2 = arith.constant 0 : i32
    return %c0_i32, %c0_i32_0, %c0_i32_1 : i32, i32, i32
  }
  func.func @transform_4(%arg0: i32) -> (i32, i32, i32) {
    %c0_i32 = arith.constant 0 : i32
    %c0_i32_0 = arith.constant 0 : i32
    %c0_i32_1 = arith.constant 0 : i32
    %c0_i32_2 = arith.constant 0 : i32
    return %c0_i32, %c0_i32_0, %c0_i32_1 : i32, i32, i32
  }
  func.func @transform_5(%arg0: i32) -> (i32, i32, i32) {
    %c0_i32 = arith.constant 0 : i32
    %c0_i32_0 = arith.constant 0 : i32
    %c0_i32_1 = arith.constant 0 : i32
    %c0_i32_2 = arith.constant 0 : i32
    return %c0_i32, %c0_i32_0, %c0_i32_1 : i32, i32, i32
  }
  func.func @transform_6(%arg0: i32) -> (i32, i32, i32) {
    %c0_i32 = arith.constant 0 : i32
    %c0_i32_0 = arith.constant 0 : i32
    %c0_i32_1 = arith.constant 0 : i32
    %c0_i32_2 = arith.constant 0 : i32
    return %c0_i32, %c0_i32_0, %c0_i32_1 : i32, i32, i32
  }
  func.func @transform_7(%arg0: i32) -> (i32, i32, i32) {
    %c0_i32 = arith.constant 0 : i32
    %c0_i32_0 = arith.constant 0 : i32
    %c0_i32_1 = arith.constant 0 : i32
    %c0_i32_2 = arith.constant 0 : i32
    return %c0_i32, %c0_i32_0, %c0_i32_1 : i32, i32, i32
  }
  func.func @transform_8(%arg0: i32) -> (i32, i32, i32) {
    %c0_i32 = arith.constant 0 : i32
    %c0_i32_0 = arith.constant 0 : i32
    %c0_i32_1 = arith.constant 0 : i32
    %c0_i32_2 = arith.constant 0 : i32
    return %c0_i32, %c0_i32_0, %c0_i32_1 : i32, i32, i32
  }
  func.func @transform_9(%arg0: i32) -> (i32, i32, i32) {
    %c0_i32 = arith.constant 0 : i32
    %c0_i32_0 = arith.constant 0 : i32
    %c0_i32_1 = arith.constant 0 : i32
    %c0_i32_2 = arith.constant 0 : i32
    return %c0_i32, %c0_i32_0, %c0_i32_1 : i32, i32, i32
  }
  func.func @transform_10(%arg0: i32) -> (i32, i32, i32) {
    %c0_i32 = arith.constant 0 : i32
    %c0_i32_0 = arith.constant 0 : i32
    %c0_i32_1 = arith.constant 0 : i32
    %c0_i32_2 = arith.constant 0 : i32
    return %c0_i32, %c0_i32_0, %c0_i32_1 : i32, i32, i32
  }
  func.func @transform_11(%arg0: i32) -> (i32, i32, i32) {
    %c0_i32 = arith.constant 0 : i32
    %c0_i32_0 = arith.constant 0 : i32
    %c0_i32_1 = arith.constant 0 : i32
    %c0_i32_2 = arith.constant 0 : i32
    return %c0_i32, %c0_i32_0, %c0_i32_1 : i32, i32, i32
  }
  func.func @transform_12(%arg0: i32) -> (i32, i32, i32) {
    %c0_i32 = arith.constant 0 : i32
    %c0_i32_0 = arith.constant 0 : i32
    %c0_i32_1 = arith.constant 0 : i32
    %c0_i32_2 = arith.constant 0 : i32
    return %c0_i32, %c0_i32_0, %c0_i32_1 : i32, i32, i32
  }
  func.func @transform_13(%arg0: i32) -> (i32, i32, i32) {
    %c0_i32 = arith.constant 0 : i32
    %c0_i32_0 = arith.constant 0 : i32
    %c0_i32_1 = arith.constant 0 : i32
    %c0_i32_2 = arith.constant 0 : i32
    return %c0_i32, %c0_i32_0, %c0_i32_1 : i32, i32, i32
  }
  func.func @transform_14(%arg0: i32) -> (i32, i32, i32) {
    %c0_i32 = arith.constant 0 : i32
    %c0_i32_0 = arith.constant 0 : i32
    %c0_i32_1 = arith.constant 0 : i32
    %c0_i32_2 = arith.constant 0 : i32
    return %c0_i32, %c0_i32_0, %c0_i32_1 : i32, i32, i32
  }
  func.func @transform_15(%arg0: i32) -> (i32, i32, i32) {
    %c0_i32 = arith.constant 0 : i32
    %c0_i32_0 = arith.constant 0 : i32
    %c0_i32_1 = arith.constant 0 : i32
    %c0_i32_2 = arith.constant 0 : i32
    return %c0_i32, %c0_i32_0, %c0_i32_1 : i32, i32, i32
  }
  func.func @transform_16(%arg0: i32) -> (i32, i32) {
    %c0_i32 = arith.constant 0 : i32
    %c0_i32_0 = arith.constant 0 : i32
    %c0_i32_1 = arith.constant 0 : i32
    return %c0_i32, %c0_i32_0 : i32, i32
  }
  func.func @transform_17(%arg0: i32) -> (i32, i32) {
    %c0_i32 = arith.constant 0 : i32
    %c0_i32_0 = arith.constant 0 : i32
    %c0_i32_1 = arith.constant 0 : i32
    return %c0_i32, %c0_i32_0 : i32, i32
  }
  func.func @transform_18(%arg0: i32) -> (i32, i32) {
    %c0_i32 = arith.constant 0 : i32
    %c0_i32_0 = arith.constant 0 : i32
    %c0_i32_1 = arith.constant 0 : i32
    return %c0_i32, %c0_i32_0 : i32, i32
  }
}

</mosaic_0001>

<llo_original>
// kernel: dqn_transformer_embedding.1
$region0: #{dqn_transformer_embedding.1}
  #allocation0 [shape = 'u32[]', space=smem, size = 0x4, offset = 0x4, fixed_abs, tag = 'smem constant byte address 0x4 - core index']
  #allocation1 [shape = 'u32[144,128]{1,0:T(1,128)}', space=vmem, size = 0x12000, scoped, tag = 'internal scratch']
  %s0 = inlined_call_operand.vmem [shape: f32[16,32], index: 0, kind: input, shape index: {}]
  %s1 = inlined_call_operand.vmem [shape: f32[8,32], index: 1, kind: input, shape index: {}]
  %s2 = inlined_call_operand.vmem [shape: f32[8,8], index: 2, kind: input, shape index: {}]
  %s3 = inlined_call_operand.vmem [shape: f32[2,1,8], index: 3, kind: input, shape index: {}]
  %s4 = inlined_call_operand.vmem [shape: bf16[2,32,96], index: 4, kind: input, shape index: {}]
  %s5 = inlined_call_operand.vmem [shape: f32[2,1,96], index: 5, kind: input, shape index: {}]
  %s6 = inlined_call_operand.vmem [shape: bf16[2,32,32], index: 6, kind: input, shape index: {}]
  %s7 = inlined_call_operand.vmem [shape: f32[2,1,32], index: 7, kind: input, shape index: {}]
  %s8 = inlined_call_operand.vmem [shape: bf16[2,32,64], index: 8, kind: input, shape index: {}]
  %s9 = inlined_call_operand.vmem [shape: f32[2,1,64], index: 9, kind: input, shape index: {}]
  %s10 = inlined_call_operand.vmem [shape: bf16[2,64,32], index: 10, kind: input, shape index: {}]
  %s11 = inlined_call_operand.vmem [shape: f32[2,1,32], index: 11, kind: input, shape index: {}]
  %s12 = inlined_call_operand.vmem [shape: f32[2,1,32], index: 12, kind: input, shape index: {}]
  %s13 = inlined_call_operand.vmem [shape: f32[2,1,32], index: 13, kind: input, shape index: {}]
  %s14 = inlined_call_operand.vmem [shape: f32[2,1,32], index: 14, kind: input, shape index: {}]
  %s15 = inlined_call_operand.vmem [shape: f32[2,1,32], index: 15, kind: input, shape index: {}]
  %s16 = inlined_call_operand.vmem [shape: bf16[32,16], index: 16, kind: input, shape index: {}]
  %s17 = inlined_call_operand.vmem [shape: f32[1,16], index: 17, kind: input, shape index: {}]
  %s18 = inlined_call_operand.hbm [shape: f32[16,16], index: 18, kind: output, shape index: {}]
  %s19 = sld [smem:[#allocation0]]
  $region82: #{dqn_transformer_embedding.1} parent=0
    _
  %s21 = ssub.s32 1, %s19
  %s22 = scalar_select 0, %s21, %s19
  $region1: #{dqn_transformer_embedding.1} parent=0
    #allocation2 [shape = 'u8[8192]{0}', space=vmem, size = 0x2000, scoped, tag = 'output window, operand 0, single buffered']
    #allocation3 [shape = 's32[1]{0}', space=sflag, size = 0x4, scoped, tag = 'scoped memory for dqn_transformer_embedding.1']
    %23 = vsyncpa [#allocation3], 0
    // Predicated region
    $region2: #{dqn_transformer_embedding.1} parent=1 // pred_check
      _
    $region3: #{dqn_transformer_embedding.1} parent=1 // pred_check_branch
      %25 = sbr.rel (0) target = $region5
    $region4: #{dqn_transformer_embedding.1} parent=1 // pred_region
      _
    $region5: #{dqn_transformer_embedding.1} parent=1 // pred_fallthru
      _
    // Predicated region
    $region6: #{dqn_transformer_embedding.1} parent=1 // pred_check
      _
    $region7: #{dqn_transformer_embedding.1} parent=1 // pred_check_branch
      %27 = sbr.rel (0) target = $region9
    $region8: #{dqn_transformer_embedding.1} parent=1 // pred_region
      _
    $region9: #{dqn_transformer_embedding.1} parent=1 // pred_fallthru
      _
    // Predicated region
    $region10: #{dqn_transformer_embedding.1} parent=1 // pred_check
      _
    $region11: #{dqn_transformer_embedding.1} parent=1 // pred_check_branch
      %29 = sbr.rel (0) target = $region13
    $region12: #{dqn_transformer_embedding.1} parent=1 // pred_region
      _
    $region13: #{dqn_transformer_embedding.1} parent=1 // pred_fallthru
      _
    // Predicated region
    $region14: #{dqn_transformer_embedding.1} parent=1 // pred_check
      _
    $region15: #{dqn_transformer_embedding.1} parent=1 // pred_check_branch
      %31 = sbr.rel (0) target = $region17
    $region16: #{dqn_transformer_embedding.1} parent=1 // pred_region
      _
    $region17: #{dqn_transformer_embedding.1} parent=1 // pred_fallthru
      _
    // Predicated region
    $region18: #{dqn_transformer_embedding.1} parent=1 // pred_check
      _
    $region19: #{dqn_transformer_embedding.1} parent=1 // pred_check_branch
      %33 = sbr.rel (0) target = $region21
    $region20: #{dqn_transformer_embedding.1} parent=1 // pred_region
      _
    $region21: #{dqn_transformer_embedding.1} parent=1 // pred_fallthru
      _
    // Predicated region
    $region22: #{dqn_transformer_embedding.1} parent=1 // pred_check
      _
    $region23: #{dqn_transformer_embedding.1} parent=1 // pred_check_branch
      %35 = sbr.rel (0) target = $region25
    $region24: #{dqn_transformer_embedding.1} parent=1 // pred_region
      _
    $region25: #{dqn_transformer_embedding.1} parent=1 // pred_fallthru
      _
    // Predicated region
    $region26: #{dqn_transformer_embedding.1} parent=1 // pred_check
      _
    $region27: #{dqn_transformer_embedding.1} parent=1 // pred_check_branch
      %37 = sbr.rel (0) target = $region29
    $region28: #{dqn_transformer_embedding.1} parent=1 // pred_region
      _
    $region29: #{dqn_transformer_embedding.1} parent=1 // pred_fallthru
      _
    // Predicated region
    $region30: #{dqn_transformer_embedding.1} parent=1 // pred_check
      _
    $region31: #{dqn_transformer_embedding.1} parent=1 // pred_check_branch
      %39 = sbr.rel (0) target = $region33
    $region32: #{dqn_transformer_embedding.1} parent=1 // pred_region
      _
    $region33: #{dqn_transformer_embedding.1} parent=1 // pred_fallthru
      _
    // Predicated region
    $region34: #{dqn_transformer_embedding.1} parent=1 // pred_check
      _
    $region35: #{dqn_transformer_embedding.1} parent=1 // pred_check_branch
      %41 = sbr.rel (0) target = $region37
    $region36: #{dqn_transformer_embedding.1} parent=1 // pred_region
      _
    $region37: #{dqn_transformer_embedding.1} parent=1 // pred_fallthru
      _
    // Predicated region
    $region38: #{dqn_transformer_embedding.1} parent=1 // pred_check
      _
    $region39: #{dqn_transformer_embedding.1} parent=1 // pred_check_branch
      %43 = sbr.rel (0) target = $region41
    $region40: #{dqn_transformer_embedding.1} parent=1 // pred_region
      _
    $region41: #{dqn_transformer_embedding.1} parent=1 // pred_fallthru
      _
    // Predicated region
    $region42: #{dqn_transformer_embedding.1} parent=1 // pred_check
      _
    $region43: #{dqn_transformer_embedding.1} parent=1 // pred_check_branch
      %45 = sbr.rel (0) target = $region45
    $region44: #{dqn_transformer_embedding.1} parent=1 // pred_region
      _
    $region45: #{dqn_transformer_embedding.1} parent=1 // pred_fallthru
      _
    // Predicated region
    $region46: #{dqn_transformer_embedding.1} parent=1 // pred_check
      _
    $region47: #{dqn_transformer_embedding.1} parent=1 // pred_check_branch
      %47 = sbr.rel (0) target = $region49
    $region48: #{dqn_transformer_embedding.1} parent=1 // pred_region
      _
    $region49: #{dqn_transformer_embedding.1} parent=1 // pred_fallthru
      _
    // Predicated region
    $region50: #{dqn_transformer_embedding.1} parent=1 // pred_check
      _
    $region51: #{dqn_transformer_embedding.1} parent=1 // pred_check_branch
      %49 = sbr.rel (0) target = $region53
    $region52: #{dqn_transformer_embedding.1} parent=1 // pred_region
      _
    $region53: #{dqn_transformer_embedding.1} parent=1 // pred_fallthru
      _
    // Predicated region
    $region54: #{dqn_transformer_embedding.1} parent=1 // pred_check
      _
    $region55: #{dqn_transformer_embedding.1} parent=1 // pred_check_branch
      %51 = sbr.rel (0) target = $region57
    $region56: #{dqn_transformer_embedding.1} parent=1 // pred_region
      _
    $region57: #{dqn_transformer_embedding.1} parent=1 // pred_fallthru
      _
    // Predicated region
    $region58: #{dqn_transformer_embedding.1} parent=1 // pred_check
      _
    $region59: #{dqn_transformer_embedding.1} parent=1 // pred_check_branch
      %53 = sbr.rel (0) target = $region61
    $region60: #{dqn_transformer_embedding.1} parent=1 // pred_region
      _
    $region61: #{dqn_transformer_embedding.1} parent=1 // pred_fallthru
      _
    // Predicated region
    $region62: #{dqn_transformer_embedding.1} parent=1 // pred_check
      _
    $region63: #{dqn_transformer_embedding.1} parent=1 // pred_check_branch
      %55 = sbr.rel (0) target = $region65
    $region64: #{dqn_transformer_embedding.1} parent=1 // pred_region
      _
    $region65: #{dqn_transformer_embedding.1} parent=1 // pred_fallthru
      _
    // Predicated region
    $region66: #{dqn_transformer_embedding.1} parent=1 // pred_check
      _
    $region67: #{dqn_transformer_embedding.1} parent=1 // pred_check_branch
      %57 = sbr.rel (0) target = $region69
    $region68: #{dqn_transformer_embedding.1} parent=1 // pred_region
      _
    $region69: #{dqn_transformer_embedding.1} parent=1 // pred_fallthru
      _
    // Predicated region
    $region70: #{dqn_transformer_embedding.1} parent=1 // pred_check
      _
    $region71: #{dqn_transformer_embedding.1} parent=1 // pred_check_branch
      %59 = sbr.rel (0) target = $region73
    $region72: #{dqn_transformer_embedding.1} parent=1 // pred_region
      _
    $region73: #{dqn_transformer_embedding.1} parent=1 // pred_fallthru
      _
    %v61 = vld [vmem:[%s0] sm:$0xff]
    %v62 = vld [vmem:[%s0 + $0x8] sm:$0xff]
    %v63 = vmul.f32 %v61, 5.656854
    %v64 = vmul.f32 %v62, 5.656854
    %v65 = vld [vmem:[%s1] sm:$0xff]
    %v66 = vadd.f32 %v63, %v65
    %v67 = vadd.f32 %v64, %v65
    %v68 = vld [vmem:[%s2] sm:$0xff]
    %v69 = vld [vmem:[%s3] sm:$0x1]
    %v70 = vld [vmem:[%s3 + $0x1] sm:$0x1]
    %v73 = vlaneseq
    %v74 = vshrl.u32 %v73, 7
    %v75 = vsub.s32 0, %v74
    %v76 = vrot.slane %v69, %v75
    %v77 = vlaneseq
    %v78 = vshrl.u32 %v77, 7
    %v79 = vsub.s32 0, %v78
    %v80 = vrot.slane %v70, %v79
    %v83 = vadd.f32 %v68, %v76
    %v84 = vadd.f32 %v68, %v80
    %v85 = vpack.c.bf16 %v67, %v66
    %v86 = vld [vmem:[%s4] sm:$0xf]
    %v87 = vld [vmem:[%s4 + $0x4] sm:$0xf]
    %v88 = vld [vmem:[%s4 + $0x8] sm:$0xf]
    %v89 = vld [vmem:[%s4 + $0xc] sm:$0xf]
    %v90 = vld [vmem:[%s5] sm:$0x1]
    %v92 = vlaneseq
    %v93 = vshrl.u32 %v92, 7
    %v94 = vsub.s32 0, %v93
    %v95 = vrot.slane %v90, %v94
    %v101 = vunpack.c.l.b16 %v86
    %v102 = vunpack.c.l.b16 %v87
    %v103 = vunpack.c.l.b16 %v88
    %v104 = vunpack.c.l.b16 %v89
    %v105 = vpack.c.b16 %v102, %v101
    %v106 = vpack.c.b16 %v104, %v103
    %vm109 = vcmask 261120
    %v111 = vsel %vm109, %v85, 0
    %113 = vmatprep.subr.bf16.mxu0 0
    %114 = vmatpush1.bf16.msra.mxu0 %v105
    %115 = vmatprep.subr.bf16.mxu0 0
    %116 = vmatpush1.bf16.msra.mxu0 %v106
    %117 = vmatprep.subr.bf16.mxu0 0
    %118 = vmatpush1.bf16.msra.mxu0 0
    %119 = vmatprep.subr.bf16.mxu0 0
    %120 = vmatpush1.bf16.msra.mxu0 0
    %121 = vmatprep.subr.bf16.mxu0 0
    %122 = vmatpush1.bf16.msra.mxu0 0
    %123 = vmatprep.subr.bf16.mxu0 0
    %124 = vmatpush1.bf16.msra.mxu0 0
    %125 = vmatprep.subr.bf16.mxu0 0
    %126 = vmatpush1.bf16.msra.mxu0 0
    %127 = vmatprep.subr.bf16.mxu0 0
    %128 = vmatpush1.bf16.msra.mxu0 0
    %129 = vmatprep.subr.bf16.mxu0 0
    %130 = vmatpush1.bf16.msra.mxu0 0
    %131 = vmatprep.subr.bf16.mxu0 0
    %132 = vmatpush1.bf16.msra.mxu0 0
    %133 = vmatprep.subr.bf16.mxu0 0
    %134 = vmatpush1.bf16.msra.mxu0 0
    %135 = vmatprep.subr.bf16.mxu0 0
    %136 = vmatpush1.bf16.msra.mxu0 0
    %137 = vmatprep.subr.bf16.mxu0 0
    %138 = vmatpush1.bf16.msra.mxu0 0
    %139 = vmatprep.subr.bf16.mxu0 0
    %140 = vmatpush1.bf16.msra.mxu0 0
    %141 = vmatprep.subr.bf16.mxu0 0
    %142 = vmatpush1.bf16.msra.mxu0 0
    %143 = vmatprep.subr.bf16.mxu0 0
    %144 = vmatpush1.bf16.msra.mxu0 0
    %145 = vmatprep.mubr.bf16.mxu0 0
    %146 = vmatmul.mubr.bf16.gmra.mrb[0].mxu0 %v111
    %v147 = vpop.f32.mrb[0].mxu0
    %v148 = vadd.f32 %v95, %v147
    %v149 = vpop.f32.mrb[0].mxu0
    %v150 = vpop.f32.mrb[0].mxu0
    %v151 = vadd.f32 %v95, %v150
    %v152 = vpop.f32.mrb[0].mxu0
    %153 = vdwg.mxu0
    %v154 = vpack.c.bf16 %v148, %v148
    %v155 = vpack.c.bf16 %v151, %v151
    %157 = vrot.lane.b32.xlu0 %v154, 96
    %v158 = vpop.permute.xlu0 %157
    %vm159 = vcmask 64512
    %v161 = vsel %vm159, %v154, 0
    %v164 = vsel %vm159, %v158, 0
    %166 = vmatprep.subr.bf16.mxu0 0
    %167 = vmatpush1.bf16.xpose.msra.mxu0 %v164
    %168 = vmatprep.subr.bf16.mxu0 0
    %169 = vmatpush1.bf16.xpose.msra.mxu0 0
    %170 = vmatprep.subr.bf16.mxu0 0
    %171 = vmatpush1.bf16.xpose.msra.mxu0 0
    %172 = vmatprep.subr.bf16.mxu0 0
    %173 = vmatpush1.bf16.xpose.msra.mxu0 0
    %174 = vmatprep.subr.bf16.mxu0 0
    %175 = vmatpush1.bf16.xpose.msra.mxu0 0
    %176 = vmatprep.subr.bf16.mxu0 0
    %177 = vmatpush1.bf16.xpose.msra.mxu0 0
    %178 = vmatprep.subr.bf16.mxu0 0
    %179 = vmatpush1.bf16.xpose.msra.mxu0 0
    %180 = vmatprep.subr.bf16.mxu0 0
    %181 = vmatpush1.bf16.xpose.msra.mxu0 0
    %182 = vmatprep.subr.bf16.mxu0 0
    %183 = vmatpush1.bf16.xpose.msra.mxu0 0
    %184 = vmatprep.subr.bf16.mxu0 0
    %185 = vmatpush1.bf16.xpose.msra.mxu0 0
    %186 = vmatprep.subr.bf16.mxu0 0
    %187 = vmatpush1.bf16.xpose.msra.mxu0 0
    %188 = vmatprep.subr.bf16.mxu0 0
    %189 = vmatpush1.bf16.xpose.msra.mxu0 0
    %190 = vmatprep.subr.bf16.mxu0 0
    %191 = vmatpush1.bf16.xpose.msra.mxu0 0
    %192 = vmatprep.subr.bf16.mxu0 0
    %193 = vmatpush1.bf16.xpose.msra.mxu0 0
    %194 = vmatprep.subr.bf16.mxu0 0
    %195 = vmatpush1.bf16.xpose.msra.mxu0 0
    %196 = vmatprep.subr.bf16.mxu0 0
    %197 = vmatpush1.bf16.xpose.msra.mxu0 0
    %198 = vmatprep.mubr.bf16.mxu0 0
    %199 = vmatmul.mubr.bf16.gmra.mrb[0].mxu0 %v161
    %v200 = vpop.f32.mrb[0].mxu0
    %v201 = vadd.f32 %v83, %v200
    %v202 = vpop.f32.mrb[0].mxu0
    %v203 = vpop.f32.mrb[0].mxu0
    %v204 = vpop.f32.mrb[0].mxu0
    %205 = vdwg.mxu0
    %207 = vrot.lane.b32.xlu0 %v155, 96
    %v208 = vpop.permute.xlu0 %207
    %v210 = vsel %vm159, %v155, 0
    %v213 = vsel %vm159, %v208, 0
    %215 = vmatprep.subr.bf16.mxu0 0
    %216 = vmatpush1.bf16.xpose.msra.mxu0 %v213
    %217 = vmatprep.subr.bf16.mxu0 0
    %218 = vmatpush1.bf16.xpose.msra.mxu0 0
    %219 = vmatprep.subr.bf16.mxu0 0
    %220 = vmatpush1.bf16.xpose.msra.mxu0 0
    %221 = vmatprep.subr.bf16.mxu0 0
    %222 = vmatpush1.bf16.xpose.msra.mxu0 0
    %223 = vmatprep.subr.bf16.mxu0 0
    %224 = vmatpush1.bf16.xpose.msra.mxu0 0
    %225 = vmatprep.subr.bf16.mxu0 0
    %226 = vmatpush1.bf16.xpose.msra.mxu0 0
    %227 = vmatprep.subr.bf16.mxu0 0
    %228 = vmatpush1.bf16.xpose.msra.mxu0 0
    %229 = vmatprep.subr.bf16.mxu0 0
    %230 = vmatpush1.bf16.xpose.msra.mxu0 0
    %231 = vmatprep.subr.bf16.mxu0 0
    %232 = vmatpush1.bf16.xpose.msra.mxu0 0
    %233 = vmatprep.subr.bf16.mxu0 0
    %234 = vmatpush1.bf16.xpose.msra.mxu0 0
    %235 = vmatprep.subr.bf16.mxu0 0
    %236 = vmatpush1.bf16.xpose.msra.mxu0 0
    %237 = vmatprep.subr.bf16.mxu0 0
    %238 = vmatpush1.bf16.xpose.msra.mxu0 0
    %239 = vmatprep.subr.bf16.mxu0 0
    %240 = vmatpush1.bf16.xpose.msra.mxu0 0
    %241 = vmatprep.subr.bf16.mxu0 0
    %242 = vmatpush1.bf16.xpose.msra.mxu0 0
    %243 = vmatprep.subr.bf16.mxu0 0
    %244 = vmatpush1.bf16.xpose.msra.mxu0 0
    %245 = vmatprep.subr.bf16.mxu0 0
    %246 = vmatpush1.bf16.xpose.msra.mxu0 0
    %247 = vmatprep.mubr.bf16.mxu0 0
    %248 = vmatmul.mubr.bf16.gmra.mrb[0].mxu0 %v210
    %v249 = vpop.f32.mrb[0].mxu0
    %v250 = vadd.f32 %v84, %v249
    %v251 = vpop.f32.mrb[0].mxu0
    %v252 = vpop.f32.mrb[0].mxu0
    %v253 = vpop.f32.mrb[0].mxu0
    %254 = vdwg.mxu0
    %v255 = vsel %vm159, %v201, -inf
    %256 = vmax.xlane.f32.xlu0 %v255
    %v257 = vpop.xlane.xlu0 %256
    %v258 = vsel %vm159, %v250, -inf
    %259 = vmax.xlane.f32.xlu0 %v258
    %v260 = vpop.xlane.xlu0 %259
    %v261 = vsub.f32 %v201, %v257
    %v262 = vsub.f32 %v250, %v260
    %v263 = vmul.f32 %v261, 1.442695
    %v264 = vpow.pop %v263
    %v265 = vmul.f32 %v262, 1.442695
    %v266 = vpow.pop %v265
    %v267 = vsel %vm159, %v264, 0.0
    %268 = vadd.xlane.f32.xlu0 %v267
    %v269 = vpop.xlane.xlu0 %268
    %v270 = vsel %vm159, %v266, 0.0
    %271 = vadd.xlane.f32.xlu0 %v270
    %v272 = vpop.xlane.xlu0 %271
    %v273 = vrcp.pop %v269
    %v274 = vrcp.pop %v272
    %v275 = vmul.f32 %v264, %v273
    %v276 = vmul.f32 %v266, %v274
    %v277 = vpack.c.bf16 %v275, %v275
    %v278 = vpack.c.bf16 %v276, %v276
    %279 = vrot.lane.b32.xlu0 %v154, 64
    %v280 = vpop.permute.xlu0 %279
    %v282 = vsel %vm159, %v277, 0
    %vm284 = vcmask 1043456
    %v286 = vsel %vm284, %v280, 0
    %288 = vmatprep.subr.bf16.mxu0 0
    %289 = vmatpush1.bf16.msra.mxu0 %v286
    %290 = vmatprep.subr.bf16.mxu0 0
    %291 = vmatpush1.bf16.msra.mxu0 0
    %292 = vmatprep.subr.bf16.mxu0 0
    %293 = vmatpush1.bf16.msra.mxu0 0
    %294 = vmatprep.subr.bf16.mxu0 0
    %295 = vmatpush1.bf16.msra.mxu0 0
    %296 = vmatprep.subr.bf16.mxu0 0
    %297 = vmatpush1.bf16.msra.mxu0 0
    %298 = vmatprep.subr.bf16.mxu0 0
    %299 = vmatpush1.bf16.msra.mxu0 0
    %300 = vmatprep.subr.bf16.mxu0 0
    %301 = vmatpush1.bf16.msra.mxu0 0
    %302 = vmatprep.subr.bf16.mxu0 0
    %303 = vmatpush1.bf16.msra.mxu0 0
    %304 = vmatprep.subr.bf16.mxu0 0
    %305 = vmatpush1.bf16.msra.mxu0 0
    %306 = vmatprep.subr.bf16.mxu0 0
    %307 = vmatpush1.bf16.msra.mxu0 0
    %308 = vmatprep.subr.bf16.mxu0 0
    %309 = vmatpush1.bf16.msra.mxu0 0
    %310 = vmatprep.subr.bf16.mxu0 0
    %311 = vmatpush1.bf16.msra.mxu0 0
    %312 = vmatprep.subr.bf16.mxu0 0
    %313 = vmatpush1.bf16.msra.mxu0 0
    %314 = vmatprep.subr.bf16.mxu0 0
    %315 = vmatpush1.bf16.msra.mxu0 0
    %316 = vmatprep.subr.bf16.mxu0 0
    %317 = vmatpush1.bf16.msra.mxu0 0
    %318 = vmatprep.subr.bf16.mxu0 0
    %319 = vmatpush1.bf16.msra.mxu0 0
    %320 = vmatprep.mubr.bf16.mxu0 0
    %321 = vmatmul.mubr.bf16.gmra.mrb[0].mxu0 %v282
    %v322 = vpop.f32.mrb[0].mxu0
    %v323 = vadd.f32 0.0, %v322
    %v324 = vpop.f32.mrb[0].mxu0
    %v325 = vpop.f32.mrb[0].mxu0
    %v326 = vpop.f32.mrb[0].mxu0
    %327 = vdwg.mxu0
    %328 = vrot.lane.b32.xlu0 %v155, 64
    %v329 = vpop.permute.xlu0 %328
    %v331 = vsel %vm159, %v278, 0
    %v334 = vsel %vm284, %v329, 0
    %336 = vmatprep.subr.bf16.mxu0 0
    %337 = vmatpush1.bf16.msra.mxu0 %v334
    %338 = vmatprep.subr.bf16.mxu0 0
    %339 = vmatpush1.bf16.msra.mxu0 0
    %340 = vmatprep.subr.bf16.mxu0 0
    %341 = vmatpush1.bf16.msra.mxu0 0
    %342 = vmatprep.subr.bf16.mxu0 0
    %343 = vmatpush1.bf16.msra.mxu0 0
    %344 = vmatprep.subr.bf16.mxu0 0
    %345 = vmatpush1.bf16.msra.mxu0 0
    %346 = vmatprep.subr.bf16.mxu0 0
    %347 = vmatpush1.bf16.msra.mxu0 0
    %348 = vmatprep.subr.bf16.mxu0 0
    %349 = vmatpush1.bf16.msra.mxu0 0
    %350 = vmatprep.subr.bf16.mxu0 0
    %351 = vmatpush1.bf16.msra.mxu0 0
    %352 = vmatprep.subr.bf16.mxu0 0
    %353 = vmatpush1.bf16.msra.mxu0 0
    %354 = vmatprep.subr.bf16.mxu0 0
    %355 = vmatpush1.bf16.msra.mxu0 0
    %356 = vmatprep.subr.bf16.mxu0 0
    %357 = vmatpush1.bf16.msra.mxu0 0
    %358 = vmatprep.subr.bf16.mxu0 0
    %359 = vmatpush1.bf16.msra.mxu0 0
    %360 = vmatprep.subr.bf16.mxu0 0
    %361 = vmatpush1.bf16.msra.mxu0 0
    %362 = vmatprep.subr.bf16.mxu0 0
    %363 = vmatpush1.bf16.msra.mxu0 0
    %364 = vmatprep.subr.bf16.mxu0 0
    %365 = vmatpush1.bf16.msra.mxu0 0
    %366 = vmatprep.subr.bf16.mxu0 0
    %367 = vmatpush1.bf16.msra.mxu0 0
    %368 = vmatprep.mubr.bf16.mxu0 0
    %369 = vmatmul.mubr.bf16.gmra.mrb[0].mxu0 %v331
    %v370 = vpop.f32.mrb[0].mxu0
    %v371 = vadd.f32 0.0, %v370
    %v372 = vpop.f32.mrb[0].mxu0
    %v373 = vpop.f32.mrb[0].mxu0
    %v374 = vpop.f32.mrb[0].mxu0
    %375 = vdwg.mxu0
    %376 = vrot.lane.b32.xlu0 %v154, 120
    %v377 = vpop.permute.xlu0 %376
    %378 = vrot.lane.b32.xlu0 %v154, 88
    %v379 = vpop.permute.xlu0 %378
    %v381 = vsel %vm159, %v377, 0
    %v384 = vsel %vm159, %v379, 0
    %386 = vmatprep.subr.bf16.mxu0 0
    %387 = vmatpush1.bf16.xpose.msra.mxu0 %v384
    %388 = vmatprep.subr.bf16.mxu0 0
    %389 = vmatpush1.bf16.xpose.msra.mxu0 0
    %390 = vmatprep.subr.bf16.mxu0 0
    %391 = vmatpush1.bf16.xpose.msra.mxu0 0
    %392 = vmatprep.subr.bf16.mxu0 0
    %393 = vmatpush1.bf16.xpose.msra.mxu0 0
    %394 = vmatprep.subr.bf16.mxu0 0
    %395 = vmatpush1.bf16.xpose.msra.mxu0 0
    %396 = vmatprep.subr.bf16.mxu0 0
    %397 = vmatpush1.bf16.xpose.msra.mxu0 0
    %398 = vmatprep.subr.bf16.mxu0 0
    %399 = vmatpush1.bf16.xpose.msra.mxu0 0
    %400 = vmatprep.subr.bf16.mxu0 0
    %401 = vmatpush1.bf16.xpose.msra.mxu0 0
    %402 = vmatprep.subr.bf16.mxu0 0
    %403 = vmatpush1.bf16.xpose.msra.mxu0 0
    %404 = vmatprep.subr.bf16.mxu0 0
    %405 = vmatpush1.bf16.xpose.msra.mxu0 0
    %406 = vmatprep.subr.bf16.mxu0 0
    %407 = vmatpush1.bf16.xpose.msra.mxu0 0
    %408 = vmatprep.subr.bf16.mxu0 0
    %409 = vmatpush1.bf16.xpose.msra.mxu0 0
    %410 = vmatprep.subr.bf16.mxu0 0
    %411 = vmatpush1.bf16.xpose.msra.mxu0 0
    %412 = vmatprep.subr.bf16.mxu0 0
    %413 = vmatpush1.bf16.xpose.msra.mxu0 0
    %414 = vmatprep.subr.bf16.mxu0 0
    %415 = vmatpush1.bf16.xpose.msra.mxu0 0
    %416 = vmatprep.subr.bf16.mxu0 0
    %417 = vmatpush1.bf16.xpose.msra.mxu0 0
    %418 = vmatprep.mubr.bf16.mxu0 0
    %419 = vmatmul.mubr.bf16.gmra.mrb[0].mxu0 %v381
    %v420 = vpop.f32.mrb[0].mxu0
    %v421 = vadd.f32 %v83, %v420
    %v422 = vpop.f32.mrb[0].mxu0
    %v423 = vpop.f32.mrb[0].mxu0
    %v424 = vpop.f32.mrb[0].mxu0
    %425 = vdwg.mxu0
    %426 = vrot.lane.b32.xlu0 %v155, 120
    %v427 = vpop.permute.xlu0 %426
    %428 = vrot.lane.b32.xlu0 %v155, 88
    %v429 = vpop.permute.xlu0 %428
    %v431 = vsel %vm159, %v427, 0
    %v434 = vsel %vm159, %v429, 0
    %436 = vmatprep.subr.bf16.mxu0 0
    %437 = vmatpush1.bf16.xpose.msra.mxu0 %v434
    %438 = vmatprep.subr.bf16.mxu0 0
    %439 = vmatpush1.bf16.xpose.msra.mxu0 0
    %440 = vmatprep.subr.bf16.mxu0 0
    %441 = vmatpush1.bf16.xpose.msra.mxu0 0
    %442 = vmatprep.subr.bf16.mxu0 0
    %443 = vmatpush1.bf16.xpose.msra.mxu0 0
    %444 = vmatprep.subr.bf16.mxu0 0
    %445 = vmatpush1.bf16.xpose.msra.mxu0 0
    %446 = vmatprep.subr.bf16.mxu0 0
    %447 = vmatpush1.bf16.xpose.msra.mxu0 0
    %448 = vmatprep.subr.bf16.mxu0 0
    %449 = vmatpush1.bf16.xpose.msra.mxu0 0
    %450 = vmatprep.subr.bf16.mxu0 0
    %451 = vmatpush1.bf16.xpose.msra.mxu0 0
    %452 = vmatprep.subr.bf16.mxu0 0
    %453 = vmatpush1.bf16.xpose.msra.mxu0 0
    %454 = vmatprep.subr.bf16.mxu0 0
    %455 = vmatpush1.bf16.xpose.msra.mxu0 0
    %456 = vmatprep.subr.bf16.mxu0 0
    %457 = vmatpush1.bf16.xpose.msra.mxu0 0
    %458 = vmatprep.subr.bf16.mxu0 0
    %459 = vmatpush1.bf16.xpose.msra.mxu0 0
    %460 = vmatprep.subr.bf16.mxu0 0
    %461 = vmatpush1.bf16.xpose.msra.mxu0 0
    %462 = vmatprep.subr.bf16.mxu0 0
    %463 = vmatpush1.bf16.xpose.msra.mxu0 0
    %464 = vmatprep.subr.bf16.mxu0 0
    %465 = vmatpush1.bf16.xpose.msra.mxu0 0
    %466 = vmatprep.subr.bf16.mxu0 0
    %467 = vmatpush1.bf16.xpose.msra.mxu0 0
    %468 = vmatprep.mubr.bf16.mxu0 0
    %469 = vmatmul.mubr.bf16.gmra.mrb[0].mxu0 %v431
    %v470 = vpop.f32.mrb[0].mxu0
    %v471 = vadd.f32 %v84, %v470
    %v472 = vpop.f32.mrb[0].mxu0
    %v473 = vpop.f32.mrb[0].mxu0
    %v474 = vpop.f32.mrb[0].mxu0
    %475 = vdwg.mxu0
    %v476 = vsel %vm159, %v421, -inf
    %477 = vmax.xlane.f32.xlu0 %v476
    %v478 = vpop.xlane.xlu0 %477
    %v479 = vsel %vm159, %v471, -inf
    %480 = vmax.xlane.f32.xlu0 %v479
    %v481 = vpop.xlane.xlu0 %480
    %v482 = vsub.f32 %v421, %v478
    %v483 = vsub.f32 %v471, %v481
    %v484 = vmul.f32 %v482, 1.442695
    %v485 = vpow.pop %v484
    %v486 = vmul.f32 %v483, 1.442695
    %v487 = vpow.pop %v486
    %v488 = vsel %vm159, %v485, 0.0
    %489 = vadd.xlane.f32.xlu0 %v488
    %v490 = vpop.xlane.xlu0 %489
    %v491 = vsel %vm159, %v487, 0.0
    %492 = vadd.xlane.f32.xlu0 %v491
    %v493 = vpop.xlane.xlu0 %492
    %v494 = vrcp.pop %v490
    %v495 = vrcp.pop %v493
    %v496 = vmul.f32 %v485, %v494
    %v497 = vmul.f32 %v487, %v495
    %v498 = vpack.c.bf16 %v496, %v496
    %v499 = vpack.c.bf16 %v497, %v497
    %500 = vrot.lane.b32.xlu0 %v154, 56
    %v501 = vpop.permute.xlu0 %500
    %v503 = vsel %vm159, %v498, 0
    %v506 = vsel %vm284, %v501, 0
    %508 = vmatprep.subr.bf16.mxu0 0
    %509 = vmatpush1.bf16.msra.mxu0 %v506
    %510 = vmatprep.subr.bf16.mxu0 0
    %511 = vmatpush1.bf16.msra.mxu0 0
    %512 = vmatprep.subr.bf16.mxu0 0
    %513 = vmatpush1.bf16.msra.mxu0 0
    %514 = vmatprep.subr.bf16.mxu0 0
    %515 = vmatpush1.bf16.msra.mxu0 0
    %516 = vmatprep.subr.bf16.mxu0 0
    %517 = vmatpush1.bf16.msra.mxu0 0
    %518 = vmatprep.subr.bf16.mxu0 0
    %519 = vmatpush1.bf16.msra.mxu0 0
    %520 = vmatprep.subr.bf16.mxu0 0
    %521 = vmatpush1.bf16.msra.mxu0 0
    %522 = vmatprep.subr.bf16.mxu0 0
    %523 = vmatpush1.bf16.msra.mxu0 0
    %524 = vmatprep.subr.bf16.mxu0 0
    %525 = vmatpush1.bf16.msra.mxu0 0
    %526 = vmatprep.subr.bf16.mxu0 0
    %527 = vmatpush1.bf16.msra.mxu0 0
    %528 = vmatprep.subr.bf16.mxu0 0
    %529 = vmatpush1.bf16.msra.mxu0 0
    %530 = vmatprep.subr.bf16.mxu0 0
    %531 = vmatpush1.bf16.msra.mxu0 0
    %532 = vmatprep.subr.bf16.mxu0 0
    %533 = vmatpush1.bf16.msra.mxu0 0
    %534 = vmatprep.subr.bf16.mxu0 0
    %535 = vmatpush1.bf16.msra.mxu0 0
    %536 = vmatprep.subr.bf16.mxu0 0
    %537 = vmatpush1.bf16.msra.mxu0 0
    %538 = vmatprep.subr.bf16.mxu0 0
    %539 = vmatpush1.bf16.msra.mxu0 0
    %540 = vmatprep.mubr.bf16.mxu0 0
    %541 = vmatmul.mubr.bf16.gmra.mrb[0].mxu0 %v503
    %v542 = vpop.f32.mrb[0].mxu0
    %v543 = vadd.f32 0.0, %v542
    %v544 = vpop.f32.mrb[0].mxu0
    %v545 = vpop.f32.mrb[0].mxu0
    %v546 = vpop.f32.mrb[0].mxu0
    %547 = vdwg.mxu0
    %548 = vrot.lane.b32.xlu0 %v155, 56
    %v549 = vpop.permute.xlu0 %548
    %v551 = vsel %vm159, %v499, 0
    %v554 = vsel %vm284, %v549, 0
    %556 = vmatprep.subr.bf16.mxu0 0
    %557 = vmatpush1.bf16.msra.mxu0 %v554
    %558 = vmatprep.subr.bf16.mxu0 0
    %559 = vmatpush1.bf16.msra.mxu0 0
    %560 = vmatprep.subr.bf16.mxu0 0
    %561 = vmatpush1.bf16.msra.mxu0 0
    %562 = vmatprep.subr.bf16.mxu0 0
    %563 = vmatpush1.bf16.msra.mxu0 0
    %564 = vmatprep.subr.bf16.mxu0 0
    %565 = vmatpush1.bf16.msra.mxu0 0
    %566 = vmatprep.subr.bf16.mxu0 0
    %567 = vmatpush1.bf16.msra.mxu0 0
    %568 = vmatprep.subr.bf16.mxu0 0
    %569 = vmatpush1.bf16.msra.mxu0 0
    %570 = vmatprep.subr.bf16.mxu0 0
    %571 = vmatpush1.bf16.msra.mxu0 0
    %572 = vmatprep.subr.bf16.mxu0 0
    %573 = vmatpush1.bf16.msra.mxu0 0
    %574 = vmatprep.subr.bf16.mxu0 0
    %575 = vmatpush1.bf16.msra.mxu0 0
    %576 = vmatprep.subr.bf16.mxu0 0
    %577 = vmatpush1.bf16.msra.mxu0 0
    %578 = vmatprep.subr.bf16.mxu0 0
    %579 = vmatpush1.bf16.msra.mxu0 0
    %580 = vmatprep.subr.bf16.mxu0 0
    %581 = vmatpush1.bf16.msra.mxu0 0
    %582 = vmatprep.subr.bf16.mxu0 0
    %583 = vmatpush1.bf16.msra.mxu0 0
    %584 = vmatprep.subr.bf16.mxu0 0
    %585 = vmatpush1.bf16.msra.mxu0 0
    %586 = vmatprep.subr.bf16.mxu0 0
    %587 = vmatpush1.bf16.msra.mxu0 0
    %588 = vmatprep.mubr.bf16.mxu0 0
    %589 = vmatmul.mubr.bf16.gmra.mrb[0].mxu0 %v551
    %v590 = vpop.f32.mrb[0].mxu0
    %v591 = vadd.f32 0.0, %v590
    %v592 = vpop.f32.mrb[0].mxu0
    %v593 = vpop.f32.mrb[0].mxu0
    %v594 = vpop.f32.mrb[0].mxu0
    %595 = vdwg.mxu0
    %596 = vrot.lane.b32.xlu0 %v154, 112
    %v597 = vpop.permute.xlu0 %596
    %598 = vrot.lane.b32.xlu0 %v154, 80
    %v599 = vpop.permute.xlu0 %598
    %v601 = vsel %vm159, %v597, 0
    %v604 = vsel %vm159, %v599, 0
    %606 = vmatprep.subr.bf16.mxu0 0
    %607 = vmatpush1.bf16.xpose.msra.mxu0 %v604
    %608 = vmatprep.subr.bf16.mxu0 0
    %609 = vmatpush1.bf16.xpose.msra.mxu0 0
    %610 = vmatprep.subr.bf16.mxu0 0
    %611 = vmatpush1.bf16.xpose.msra.mxu0 0
    %612 = vmatprep.subr.bf16.mxu0 0
    %613 = vmatpush1.bf16.xpose.msra.mxu0 0
    %614 = vmatprep.subr.bf16.mxu0 0
    %615 = vmatpush1.bf16.xpose.msra.mxu0 0
    %616 = vmatprep.subr.bf16.mxu0 0
    %617 = vmatpush1.bf16.xpose.msra.mxu0 0
    %618 = vmatprep.subr.bf16.mxu0 0
    %619 = vmatpush1.bf16.xpose.msra.mxu0 0
    %620 = vmatprep.subr.bf16.mxu0 0
    %621 = vmatpush1.bf16.xpose.msra.mxu0 0
    %622 = vmatprep.subr.bf16.mxu0 0
    %623 = vmatpush1.bf16.xpose.msra.mxu0 0
    %624 = vmatprep.subr.bf16.mxu0 0
    %625 = vmatpush1.bf16.xpose.msra.mxu0 0
    %626 = vmatprep.subr.bf16.mxu0 0
    %627 = vmatpush1.bf16.xpose.msra.mxu0 0
    %628 = vmatprep.subr.bf16.mxu0 0
    %629 = vmatpush1.bf16.xpose.msra.mxu0 0
    %630 = vmatprep.subr.bf16.mxu0 0
    %631 = vmatpush1.bf16.xpose.msra.mxu0 0
    %632 = vmatprep.subr.bf16.mxu0 0
    %633 = vmatpush1.bf16.xpose.msra.mxu0 0
    %634 = vmatprep.subr.bf16.mxu0 0
    %635 = vmatpush1.bf16.xpose.msra.mxu0 0
    %636 = vmatprep.subr.bf16.mxu0 0
    %637 = vmatpush1.bf16.xpose.msra.mxu0 0
    %638 = vmatprep.mubr.bf16.mxu0 0
    %639 = vmatmul.mubr.bf16.gmra.mrb[0].mxu0 %v601
    %v640 = vpop.f32.mrb[0].mxu0
    %v641 = vadd.f32 %v83, %v640
    %v642 = vpop.f32.mrb[0].mxu0
    %v643 = vpop.f32.mrb[0].mxu0
    %v644 = vpop.f32.mrb[0].mxu0
    %645 = vdwg.mxu0
    %646 = vrot.lane.b32.xlu0 %v155, 112
    %v647 = vpop.permute.xlu0 %646
    %648 = vrot.lane.b32.xlu0 %v155, 80
    %v649 = vpop.permute.xlu0 %648
    %v651 = vsel %vm159, %v647, 0
    %v654 = vsel %vm159, %v649, 0
    %656 = vmatprep.subr.bf16.mxu0 0
    %657 = vmatpush1.bf16.xpose.msra.mxu0 %v654
    %658 = vmatprep.subr.bf16.mxu0 0
    %659 = vmatpush1.bf16.xpose.msra.mxu0 0
    %660 = vmatprep.subr.bf16.mxu0 0
    %661 = vmatpush1.bf16.xpose.msra.mxu0 0
    %662 = vmatprep.subr.bf16.mxu0 0
    %663 = vmatpush1.bf16.xpose.msra.mxu0 0
    %664 = vmatprep.subr.bf16.mxu0 0
    %665 = vmatpush1.bf16.xpose.msra.mxu0 0
    %666 = vmatprep.subr.bf16.mxu0 0
    %667 = vmatpush1.bf16.xpose.msra.mxu0 0
    %668 = vmatprep.subr.bf16.mxu0 0
    %669 = vmatpush1.bf16.xpose.msra.mxu0 0
    %670 = vmatprep.subr.bf16.mxu0 0
    %671 = vmatpush1.bf16.xpose.msra.mxu0 0
    %672 = vmatprep.subr.bf16.mxu0 0
    %673 = vmatpush1.bf16.xpose.msra.mxu0 0
    %674 = vmatprep.subr.bf16.mxu0 0
    %675 = vmatpush1.bf16.xpose.msra.mxu0 0
    %676 = vmatprep.subr.bf16.mxu0 0
    %677 = vmatpush1.bf16.xpose.msra.mxu0 0
    %678 = vmatprep.subr.bf16.mxu0 0
    %679 = vmatpush1.bf16.xpose.msra.mxu0 0
    %680 = vmatprep.subr.bf16.mxu0 0
    %681 = vmatpush1.bf16.xpose.msra.mxu0 0
    %682 = vmatprep.subr.bf16.mxu0 0
    %683 = vmatpush1.bf16.xpose.msra.mxu0 0
    %684 = vmatprep.subr.bf16.mxu0 0
    %685 = vmatpush1.bf16.xpose.msra.mxu0 0
    %686 = vmatprep.subr.bf16.mxu0 0
    %687 = vmatpush1.bf16.xpose.msra.mxu0 0
    %688 = vmatprep.mubr.bf16.mxu0 0
    %689 = vmatmul.mubr.bf16.gmra.mrb[0].mxu0 %v651
    %v690 = vpop.f32.mrb[0].mxu0
    %v691 = vadd.f32 %v84, %v690
    %v692 = vpop.f32.mrb[0].mxu0
    %v693 = vpop.f32.mrb[0].mxu0
    %v694 = vpop.f32.mrb[0].mxu0
    %695 = vdwg.mxu0
    %v696 = vsel %vm159, %v641, -inf
    %697 = vmax.xlane.f32.xlu0 %v696
    %v698 = vpop.xlane.xlu0 %697
    %v699 = vsel %vm159, %v691, -inf
    %700 = vmax.xlane.f32.xlu0 %v699
    %v701 = vpop.xlane.xlu0 %700
    %v702 = vsub.f32 %v641, %v698
    %v703 = vsub.f32 %v691, %v701
    %v704 = vmul.f32 %v702, 1.442695
    %v705 = vpow.pop %v704
    %v706 = vmul.f32 %v703, 1.442695
    %v707 = vpow.pop %v706
    %v708 = vsel %vm159, %v705, 0.0
    %709 = vadd.xlane.f32.xlu0 %v708
    %v710 = vpop.xlane.xlu0 %709
    %v711 = vsel %vm159, %v707, 0.0
    %712 = vadd.xlane.f32.xlu0 %v711
    %v713 = vpop.xlane.xlu0 %712
    %v714 = vrcp.pop %v710
    %v715 = vrcp.pop %v713
    %v716 = vmul.f32 %v705, %v714
    %v717 = vmul.f32 %v707, %v715
    %v718 = vpack.c.bf16 %v716, %v716
    %v719 = vpack.c.bf16 %v717, %v717
    %720 = vrot.lane.b32.xlu0 %v154, 48
    %v721 = vpop.permute.xlu0 %720
    %v723 = vsel %vm159, %v718, 0
    %v726 = vsel %vm284, %v721, 0
    %728 = vmatprep.subr.bf16.mxu0 0
    %729 = vmatpush1.bf16.msra.mxu0 %v726
    %730 = vmatprep.subr.bf16.mxu0 0
    %731 = vmatpush1.bf16.msra.mxu0 0
    %732 = vmatprep.subr.bf16.mxu0 0
    %733 = vmatpush1.bf16.msra.mxu0 0
    %734 = vmatprep.subr.bf16.mxu0 0
    %735 = vmatpush1.bf16.msra.mxu0 0
    %736 = vmatprep.subr.bf16.mxu0 0
    %737 = vmatpush1.bf16.msra.mxu0 0
    %738 = vmatprep.subr.bf16.mxu0 0
    %739 = vmatpush1.bf16.msra.mxu0 0
    %740 = vmatprep.subr.bf16.mxu0 0
    %741 = vmatpush1.bf16.msra.mxu0 0
    %742 = vmatprep.subr.bf16.mxu0 0
    %743 = vmatpush1.bf16.msra.mxu0 0
    %744 = vmatprep.subr.bf16.mxu0 0
    %745 = vmatpush1.bf16.msra.mxu0 0
    %746 = vmatprep.subr.bf16.mxu0 0
    %747 = vmatpush1.bf16.msra.mxu0 0
    %748 = vmatprep.subr.bf16.mxu0 0
    %749 = vmatpush1.bf16.msra.mxu0 0
    %750 = vmatprep.subr.bf16.mxu0 0
    %751 = vmatpush1.bf16.msra.mxu0 0
    %752 = vmatprep.subr.bf16.mxu0 0
    %753 = vmatpush1.bf16.msra.mxu0 0
    %754 = vmatprep.subr.bf16.mxu0 0
    %755 = vmatpush1.bf16.msra.mxu0 0
    %756 = vmatprep.subr.bf16.mxu0 0
    %757 = vmatpush1.bf16.msra.mxu0 0
    %758 = vmatprep.subr.bf16.mxu0 0
    %759 = vmatpush1.bf16.msra.mxu0 0
    %760 = vmatprep.mubr.bf16.mxu0 0
    %761 = vmatmul.mubr.bf16.gmra.mrb[0].mxu0 %v723
    %v762 = vpop.f32.mrb[0].mxu0
    %v763 = vadd.f32 0.0, %v762
    %v764 = vpop.f32.mrb[0].mxu0
    %v765 = vpop.f32.mrb[0].mxu0
    %v766 = vpop.f32.mrb[0].mxu0
    %767 = vdwg.mxu0
    %768 = vrot.lane.b32.xlu0 %v155, 48
    %v769 = vpop.permute.xlu0 %768
    %v771 = vsel %vm159, %v719, 0
    %v774 = vsel %vm284, %v769, 0
    %776 = vmatprep.subr.bf16.mxu0 0
    %777 = vmatpush1.bf16.msra.mxu0 %v774
    %778 = vmatprep.subr.bf16.mxu0 0
    %779 = vmatpush1.bf16.msra.mxu0 0
    %780 = vmatprep.subr.bf16.mxu0 0
    %781 = vmatpush1.bf16.msra.mxu0 0
    %782 = vmatprep.subr.bf16.mxu0 0
    %783 = vmatpush1.bf16.msra.mxu0 0
    %784 = vmatprep.subr.bf16.mxu0 0
    %785 = vmatpush1.bf16.msra.mxu0 0
    %786 = vmatprep.subr.bf16.mxu0 0
    %787 = vmatpush1.bf16.msra.mxu0 0
    %788 = vmatprep.subr.bf16.mxu0 0
    %789 = vmatpush1.bf16.msra.mxu0 0
    %790 = vmatprep.subr.bf16.mxu0 0
    %791 = vmatpush1.bf16.msra.mxu0 0
    %792 = vmatprep.subr.bf16.mxu0 0
    %793 = vmatpush1.bf16.msra.mxu0 0
    %794 = vmatprep.subr.bf16.mxu0 0
    %795 = vmatpush1.bf16.msra.mxu0 0
    %796 = vmatprep.subr.bf16.mxu0 0
    %797 = vmatpush1.bf16.msra.mxu0 0
    %798 = vmatprep.subr.bf16.mxu0 0
    %799 = vmatpush1.bf16.msra.mxu0 0
    %800 = vmatprep.subr.bf16.mxu0 0
    %801 = vmatpush1.bf16.msra.mxu0 0
    %802 = vmatprep.subr.bf16.mxu0 0
    %803 = vmatpush1.bf16.msra.mxu0 0
    %804 = vmatprep.subr.bf16.mxu0 0
    %805 = vmatpush1.bf16.msra.mxu0 0
    %806 = vmatprep.subr.bf16.mxu0 0
    %807 = vmatpush1.bf16.msra.mxu0 0
    %808 = vmatprep.mubr.bf16.mxu0 0
    %809 = vmatmul.mubr.bf16.gmra.mrb[0].mxu0 %v771
    %v810 = vpop.f32.mrb[0].mxu0
    %v811 = vadd.f32 0.0, %v810
    %v812 = vpop.f32.mrb[0].mxu0
    %v813 = vpop.f32.mrb[0].mxu0
    %v814 = vpop.f32.mrb[0].mxu0
    %815 = vdwg.mxu0
    %816 = vrot.lane.b32.xlu0 %v154, 104
    %v817 = vpop.permute.xlu0 %816
    %818 = vrot.lane.b32.xlu0 %v154, 72
    %v819 = vpop.permute.xlu0 %818
    %v821 = vsel %vm159, %v817, 0
    %v824 = vsel %vm159, %v819, 0
    %826 = vmatprep.subr.bf16.mxu0 0
    %827 = vmatpush1.bf16.xpose.msra.mxu0 %v824
    %828 = vmatprep.subr.bf16.mxu0 0
    %829 = vmatpush1.bf16.xpose.msra.mxu0 0
    %830 = vmatprep.subr.bf16.mxu0 0
    %831 = vmatpush1.bf16.xpose.msra.mxu0 0
    %832 = vmatprep.subr.bf16.mxu0 0
    %833 = vmatpush1.bf16.xpose.msra.mxu0 0
    %834 = vmatprep.subr.bf16.mxu0 0
    %835 = vmatpush1.bf16.xpose.msra.mxu0 0
    %836 = vmatprep.subr.bf16.mxu0 0
    %837 = vmatpush1.bf16.xpose.msra.mxu0 0
    %838 = vmatprep.subr.bf16.mxu0 0
    %839 = vmatpush1.bf16.xpose.msra.mxu0 0
    %840 = vmatprep.subr.bf16.mxu0 0
    %841 = vmatpush1.bf16.xpose.msra.mxu0 0
    %842 = vmatprep.subr.bf16.mxu0 0
    %843 = vmatpush1.bf16.xpose.msra.mxu0 0
    %844 = vmatprep.subr.bf16.mxu0 0
    %845 = vmatpush1.bf16.xpose.msra.mxu0 0
    %846 = vmatprep.subr.bf16.mxu0 0
    %847 = vmatpush1.bf16.xpose.msra.mxu0 0
    %848 = vmatprep.subr.bf16.mxu0 0
    %849 = vmatpush1.bf16.xpose.msra.mxu0 0
    %850 = vmatprep.subr.bf16.mxu0 0
    %851 = vmatpush1.bf16.xpose.msra.mxu0 0
    %852 = vmatprep.subr.bf16.mxu0 0
    %853 = vmatpush1.bf16.xpose.msra.mxu0 0
    %854 = vmatprep.subr.bf16.mxu0 0
    %855 = vmatpush1.bf16.xpose.msra.mxu0 0
    %856 = vmatprep.subr.bf16.mxu0 0
    %857 = vmatpush1.bf16.xpose.msra.mxu0 0
    %858 = vmatprep.mubr.bf16.mxu0 0
    %859 = vmatmul.mubr.bf16.gmra.mrb[0].mxu0 %v821
    %v860 = vpop.f32.mrb[0].mxu0
    %v861 = vadd.f32 %v83, %v860
    %v862 = vpop.f32.mrb[0].mxu0
    %v863 = vpop.f32.mrb[0].mxu0
    %v864 = vpop.f32.mrb[0].mxu0
    %865 = vdwg.mxu0
    %866 = vrot.lane.b32.xlu0 %v155, 104
    %v867 = vpop.permute.xlu0 %866
    %868 = vrot.lane.b32.xlu0 %v155, 72
    %v869 = vpop.permute.xlu0 %868
    %v871 = vsel %vm159, %v867, 0
    %v874 = vsel %vm159, %v869, 0
    %876 = vmatprep.subr.bf16.mxu0 0
    %877 = vmatpush1.bf16.xpose.msra.mxu0 %v874
    %878 = vmatprep.subr.bf16.mxu0 0
    %879 = vmatpush1.bf16.xpose.msra.mxu0 0
    %880 = vmatprep.subr.bf16.mxu0 0
    %881 = vmatpush1.bf16.xpose.msra.mxu0 0
    %882 = vmatprep.subr.bf16.mxu0 0
    %883 = vmatpush1.bf16.xpose.msra.mxu0 0
    %884 = vmatprep.subr.bf16.mxu0 0
    %885 = vmatpush1.bf16.xpose.msra.mxu0 0
    %886 = vmatprep.subr.bf16.mxu0 0
    %887 = vmatpush1.bf16.xpose.msra.mxu0 0
    %888 = vmatprep.subr.bf16.mxu0 0
    %889 = vmatpush1.bf16.xpose.msra.mxu0 0
    %890 = vmatprep.subr.bf16.mxu0 0
    %891 = vmatpush1.bf16.xpose.msra.mxu0 0
    %892 = vmatprep.subr.bf16.mxu0 0
    %893 = vmatpush1.bf16.xpose.msra.mxu0 0
    %894 = vmatprep.subr.bf16.mxu0 0
    %895 = vmatpush1.bf16.xpose.msra.mxu0 0
    %896 = vmatprep.subr.bf16.mxu0 0
    %897 = vmatpush1.bf16.xpose.msra.mxu0 0
    %898 = vmatprep.subr.bf16.mxu0 0
    %899 = vmatpush1.bf16.xpose.msra.mxu0 0
    %900 = vmatprep.subr.bf16.mxu0 0
    %901 = vmatpush1.bf16.xpose.msra.mxu0 0
    %902 = vmatprep.subr.bf16.mxu0 0
    %903 = vmatpush1.bf16.xpose.msra.mxu0 0
    %904 = vmatprep.subr.bf16.mxu0 0
    %905 = vmatpush1.bf16.xpose.msra.mxu0 0
    %906 = vmatprep.subr.bf16.mxu0 0
    %907 = vmatpush1.bf16.xpose.msra.mxu0 0
    %908 = vmatprep.mubr.bf16.mxu0 0
    %909 = vmatmul.mubr.bf16.gmra.mrb[0].mxu0 %v871
    %v910 = vpop.f32.mrb[0].mxu0
    %v911 = vadd.f32 %v84, %v910
    %v912 = vpop.f32.mrb[0].mxu0
    %v913 = vpop.f32.mrb[0].mxu0
    %v914 = vpop.f32.mrb[0].mxu0
    %915 = vdwg.mxu0
    %v916 = vsel %vm159, %v861, -inf
    %917 = vmax.xlane.f32.xlu0 %v916
    %v918 = vpop.xlane.xlu0 %917
    %v919 = vsel %vm159, %v911, -inf
    %920 = vmax.xlane.f32.xlu0 %v919
    %v921 = vpop.xlane.xlu0 %920
    %v922 = vsub.f32 %v861, %v918
    %v923 = vsub.f32 %v911, %v921
    %v924 = vmul.f32 %v922, 1.442695
    %v925 = vpow.pop %v924
    %v926 = vmul.f32 %v923, 1.442695
    %v927 = vpow.pop %v926
    %v928 = vsel %vm159, %v925, 0.0
    %929 = vadd.xlane.f32.xlu0 %v928
    %v930 = vpop.xlane.xlu0 %929
    %v931 = vsel %vm159, %v927, 0.0
    %932 = vadd.xlane.f32.xlu0 %v931
    %v933 = vpop.xlane.xlu0 %932
    %v934 = vrcp.pop %v930
    %v935 = vrcp.pop %v933
    %v936 = vmul.f32 %v925, %v934
    %v937 = vmul.f32 %v927, %v935
    %v938 = vpack.c.bf16 %v936, %v936
    %v939 = vpack.c.bf16 %v937, %v937
    %940 = vrot.lane.b32.xlu0 %v154, 40
    %v941 = vpop.permute.xlu0 %940
    %v943 = vsel %vm159, %v938, 0
    %v946 = vsel %vm284, %v941, 0
    %948 = vmatprep.subr.bf16.mxu0 0
    %949 = vmatpush1.bf16.msra.mxu0 %v946
    %950 = vmatprep.subr.bf16.mxu0 0
    %951 = vmatpush1.bf16.msra.mxu0 0
    %952 = vmatprep.subr.bf16.mxu0 0
    %953 = vmatpush1.bf16.msra.mxu0 0
    %954 = vmatprep.subr.bf16.mxu0 0
    %955 = vmatpush1.bf16.msra.mxu0 0
    %956 = vmatprep.subr.bf16.mxu0 0
    %957 = vmatpush1.bf16.msra.mxu0 0
    %958 = vmatprep.subr.bf16.mxu0 0
    %959 = vmatpush1.bf16.msra.mxu0 0
    %960 = vmatprep.subr.bf16.mxu0 0
    %961 = vmatpush1.bf16.msra.mxu0 0
    %962 = vmatprep.subr.bf16.mxu0 0
    %963 = vmatpush1.bf16.msra.mxu0 0
    %964 = vmatprep.subr.bf16.mxu0 0
    %965 = vmatpush1.bf16.msra.mxu0 0
    %966 = vmatprep.subr.bf16.mxu0 0
    %967 = vmatpush1.bf16.msra.mxu0 0
    %968 = vmatprep.subr.bf16.mxu0 0
    %969 = vmatpush1.bf16.msra.mxu0 0
    %970 = vmatprep.subr.bf16.mxu0 0
    %971 = vmatpush1.bf16.msra.mxu0 0
    %972 = vmatprep.subr.bf16.mxu0 0
    %973 = vmatpush1.bf16.msra.mxu0 0
    %974 = vmatprep.subr.bf16.mxu0 0
    %975 = vmatpush1.bf16.msra.mxu0 0
    %976 = vmatprep.subr.bf16.mxu0 0
    %977 = vmatpush1.bf16.msra.mxu0 0
    %978 = vmatprep.subr.bf16.mxu0 0
    %979 = vmatpush1.bf16.msra.mxu0 0
    %980 = vmatprep.mubr.bf16.mxu0 0
    %981 = vmatmul.mubr.bf16.gmra.mrb[0].mxu0 %v943
    %v982 = vpop.f32.mrb[0].mxu0
    %v983 = vadd.f32 0.0, %v982
    %v984 = vpop.f32.mrb[0].mxu0
    %v985 = vpop.f32.mrb[0].mxu0
    %v986 = vpop.f32.mrb[0].mxu0
    %987 = vdwg.mxu0
    %988 = vrot.lane.b32.xlu0 %v155, 40
    %v989 = vpop.permute.xlu0 %988
    %v991 = vsel %vm159, %v939, 0
    %v994 = vsel %vm284, %v989, 0
    %996 = vmatprep.subr.bf16.mxu0 0
    %997 = vmatpush1.bf16.msra.mxu0 %v994
    %998 = vmatprep.subr.bf16.mxu0 0
    %999 = vmatpush1.bf16.msra.mxu0 0
    %1000 = vmatprep.subr.bf16.mxu0 0
    %1001 = vmatpush1.bf16.msra.mxu0 0
    %1002 = vmatprep.subr.bf16.mxu0 0
    %1003 = vmatpush1.bf16.msra.mxu0 0
    %1004 = vmatprep.subr.bf16.mxu0 0
    %1005 = vmatpush1.bf16.msra.mxu0 0
    %1006 = vmatprep.subr.bf16.mxu0 0
    %1007 = vmatpush1.bf16.msra.mxu0 0
    %1008 = vmatprep.subr.bf16.mxu0 0
    %1009 = vmatpush1.bf16.msra.mxu0 0
    %1010 = vmatprep.subr.bf16.mxu0 0
    %1011 = vmatpush1.bf16.msra.mxu0 0
    %1012 = vmatprep.subr.bf16.mxu0 0
    %1013 = vmatpush1.bf16.msra.mxu0 0
    %1014 = vmatprep.subr.bf16.mxu0 0
    %1015 = vmatpush1.bf16.msra.mxu0 0
    %1016 = vmatprep.subr.bf16.mxu0 0
    %1017 = vmatpush1.bf16.msra.mxu0 0
    %1018 = vmatprep.subr.bf16.mxu0 0
    %1019 = vmatpush1.bf16.msra.mxu0 0
    %1020 = vmatprep.subr.bf16.mxu0 0
    %1021 = vmatpush1.bf16.msra.mxu0 0
    %1022 = vmatprep.subr.bf16.mxu0 0
    %1023 = vmatpush1.bf16.msra.mxu0 0
    %1024 = vmatprep.subr.bf16.mxu0 0
    %1025 = vmatpush1.bf16.msra.mxu0 0
    %1026 = vmatprep.subr.bf16.mxu0 0
    %1027 = vmatpush1.bf16.msra.mxu0 0
    %1028 = vmatprep.mubr.bf16.mxu0 0
    %1029 = vmatmul.mubr.bf16.gmra.mrb[0].mxu0 %v991
    %v1030 = vpop.f32.mrb[0].mxu0
    %v1031 = vadd.f32 0.0, %v1030
    %v1032 = vpop.f32.mrb[0].mxu0
    %v1033 = vpop.f32.mrb[0].mxu0
    %v1034 = vpop.f32.mrb[0].mxu0
    %1035 = vdwg.mxu0
    %1038 = vrot.lane.b32.xlu0 %v543, 8
    %v1039 = vpop.permute.xlu0 %1038
    %1040 = vrot.lane.b32.xlu0 %v591, 8
    %v1041 = vpop.permute.xlu0 %1040
    %1046 = vrot.lane.b32.xlu0 %v763, 16
    %v1047 = vpop.permute.xlu0 %1046
    %1048 = vrot.lane.b32.xlu0 %v811, 16
    %v1049 = vpop.permute.xlu0 %1048
    %1054 = vrot.lane.b32.xlu0 %v983, 24
    %v1055 = vpop.permute.xlu0 %1054
    %1056 = vrot.lane.b32.xlu0 %v1031, 24
    %v1057 = vpop.permute.xlu0 %1056
    %v1060 = vsel %vm159, %v323, %v1039
    %v1061 = vsel %vm159, %v371, %v1041
    %vm1062 = vcmask 130048
    %v1063 = vsel %vm1062, %v1060, %v1047
    %v1064 = vsel %vm1062, %v1061, %v1049
    %vm1065 = vcmask 195584
    %v1066 = vsel %vm1065, %v1063, %v1055
    %v1067 = vsel %vm1065, %v1064, %v1057
    %v1068 = vpack.c.bf16 %v1067, %v1066
    %v1069 = vld [vmem:[%s6] sm:$0xf]
    %v1070 = vld [vmem:[%s6 + $0x4] sm:$0xf]
    %v1071 = vld [vmem:[%s6 + $0x8] sm:$0xf]
    %v1072 = vld [vmem:[%s6 + $0xc] sm:$0xf]
    %v1073 = vld [vmem:[%s7] sm:$0x1]
    %v1075 = vlaneseq
    %v1076 = vshrl.u32 %v1075, 7
    %v1077 = vsub.s32 0, %v1076
    %v1078 = vrot.slane %v1073, %v1077
    %v1084 = vunpack.c.l.b16 %v1069
    %v1085 = vunpack.c.l.b16 %v1070
    %v1086 = vunpack.c.l.b16 %v1071
    %v1087 = vunpack.c.l.b16 %v1072
    %v1088 = vpack.c.b16 %v1085, %v1084
    %v1089 = vpack.c.b16 %v1087, %v1086
    %v1093 = vsel %vm109, %v1068, 0
    %1095 = vmatprep.subr.bf16.mxu0 0
    %1096 = vmatpush1.bf16.msra.mxu0 %v1088
    %1097 = vmatprep.subr.bf16.mxu0 0
    %1098 = vmatpush1.bf16.msra.mxu0 %v1089
    %1099 = vmatprep.subr.bf16.mxu0 0
    %1100 = vmatpush1.bf16.msra.mxu0 0
    %1101 = vmatprep.subr.bf16.mxu0 0
    %1102 = vmatpush1.bf16.msra.mxu0 0
    %1103 = vmatprep.subr.bf16.mxu0 0
    %1104 = vmatpush1.bf16.msra.mxu0 0
    %1105 = vmatprep.subr.bf16.mxu0 0
    %1106 = vmatpush1.bf16.msra.mxu0 0
    %1107 = vmatprep.subr.bf16.mxu0 0
    %1108 = vmatpush1.bf16.msra.mxu0 0
    %1109 = vmatprep.subr.bf16.mxu0 0
    %1110 = vmatpush1.bf16.msra.mxu0 0
    %1111 = vmatprep.subr.bf16.mxu0 0
    %1112 = vmatpush1.bf16.msra.mxu0 0
    %1113 = vmatprep.subr.bf16.mxu0 0
    %1114 = vmatpush1.bf16.msra.mxu0 0
    %1115 = vmatprep.subr.bf16.mxu0 0
    %1116 = vmatpush1.bf16.msra.mxu0 0
    %1117 = vmatprep.subr.bf16.mxu0 0
    %1118 = vmatpush1.bf16.msra.mxu0 0
    %1119 = vmatprep.subr.bf16.mxu0 0
    %1120 = vmatpush1.bf16.msra.mxu0 0
    %1121 = vmatprep.subr.bf16.mxu0 0
    %1122 = vmatpush1.bf16.msra.mxu0 0
    %1123 = vmatprep.subr.bf16.mxu0 0
    %1124 = vmatpush1.bf16.msra.mxu0 0
    %1125 = vmatprep.subr.bf16.mxu0 0
    %1126 = vmatpush1.bf16.msra.mxu0 0
    %1127 = vmatprep.mubr.bf16.mxu0 0
    %1128 = vmatmul.mubr.bf16.gmra.mrb[0].mxu0 %v1093
    %v1129 = vpop.f32.mrb[0].mxu0
    %v1130 = vadd.f32 %v1078, %v1129
    %v1131 = vpop.f32.mrb[0].mxu0
    %v1132 = vpop.f32.mrb[0].mxu0
    %v1133 = vadd.f32 %v1078, %v1132
    %v1134 = vpop.f32.mrb[0].mxu0
    %1135 = vdwg.mxu0
    %v1136 = vadd.f32 %v66, %v1130
    %v1137 = vadd.f32 %v67, %v1133
    %v1138 = vld [vmem:[%s12] sm:$0x1]
    %v1139 = vld [vmem:[%s13] sm:$0x1]
    %v1140 = vsel %vm109, %v1136, 0.0
    %1141 = vadd.xlane.f32.xlu0 %v1140
    %v1142 = vpop.xlane.xlu0 %1141
    %v1143 = vsel %vm109, %v1137, 0.0
    %1144 = vadd.xlane.f32.xlu0 %v1143
    %v1145 = vpop.xlane.xlu0 %1144
    %v1146 = vrcp.pop 32.0
    %v1147 = vmul.f32 %v1142, %v1146
    %v1148 = vmul.f32 %v1145, %v1146
    %v1149 = vsub.f32 %v1136, %v1147
    %v1150 = vsub.f32 %v1137, %v1148
    %v1151 = vmul.f32 %v1149, %v1149
    %v1152 = vmul.f32 %v1150, %v1150
    %v1153 = vsel %vm109, %v1151, 0.0
    %1154 = vadd.xlane.f32.xlu0 %v1153
    %v1155 = vpop.xlane.xlu0 %1154
    %v1156 = vsel %vm109, %v1152, 0.0
    %1157 = vadd.xlane.f32.xlu0 %v1156
    %v1158 = vpop.xlane.xlu0 %1157
    %v1159 = vmul.f32 %v1155, %v1146
    %v1160 = vmul.f32 %v1158, %v1146
    %v1161 = vadd.f32 %v1159, 1e-05
    %v1162 = vadd.f32 %v1160, 1e-05
    %v1163 = vrsqrt.pop %v1161
    %v1164 = vrsqrt.pop %v1162
    %v1165 = vmul.f32 %v1149, %v1163
    %v1166 = vmul.f32 %v1150, %v1164
    %v1168 = vlaneseq
    %v1169 = vshrl.u32 %v1168, 7
    %v1170 = vsub.s32 0, %v1169
    %v1171 = vrot.slane %v1138, %v1170
    %v1173 = vmul.f32 %v1165, %v1171
    %v1174 = vmul.f32 %v1166, %v1171
    %v1176 = vlaneseq
    %v1177 = vshrl.u32 %v1176, 7
    %v1178 = vsub.s32 0, %v1177
    %v1179 = vrot.slane %v1139, %v1178
    %v1181 = vadd.f32 %v1173, %v1179
    %v1182 = vadd.f32 %v1174, %v1179
    %v1183 = vpack.c.bf16 %v1182, %v1181
    %v1184 = vld [vmem:[%s8] sm:$0xf]
    %v1185 = vld [vmem:[%s8 + $0x4] sm:$0xf]
    %v1186 = vld [vmem:[%s8 + $0x8] sm:$0xf]
    %v1187 = vld [vmem:[%s8 + $0xc] sm:$0xf]
    %v1188 = vld [vmem:[%s9] sm:$0x1]
    %v1190 = vlaneseq
    %v1191 = vshrl.u32 %v1190, 7
    %v1192 = vsub.s32 0, %v1191
    %v1193 = vrot.slane %v1188, %v1192
    %v1199 = vunpack.c.l.b16 %v1184
    %v1200 = vunpack.c.l.b16 %v1185
    %v1201 = vunpack.c.l.b16 %v1186
    %v1202 = vunpack.c.l.b16 %v1187
    %v1203 = vpack.c.b16 %v1200, %v1199
    %v1204 = vpack.c.b16 %v1202, %v1201
    %v1208 = vsel %vm109, %v1183, 0
    %1210 = vmatprep.subr.bf16.mxu0 0
    %1211 = vmatpush1.bf16.msra.mxu0 %v1203
    %1212 = vmatprep.subr.bf16.mxu0 0
    %1213 = vmatpush1.bf16.msra.mxu0 %v1204
    %1214 = vmatprep.subr.bf16.mxu0 0
    %1215 = vmatpush1.bf16.msra.mxu0 0
    %1216 = vmatprep.subr.bf16.mxu0 0
    %1217 = vmatpush1.bf16.msra.mxu0 0
    %1218 = vmatprep.subr.bf16.mxu0 0
    %1219 = vmatpush1.bf16.msra.mxu0 0
    %1220 = vmatprep.subr.bf16.mxu0 0
    %1221 = vmatpush1.bf16.msra.mxu0 0
    %1222 = vmatprep.subr.bf16.mxu0 0
    %1223 = vmatpush1.bf16.msra.mxu0 0
    %1224 = vmatprep.subr.bf16.mxu0 0
    %1225 = vmatpush1.bf16.msra.mxu0 0
    %1226 = vmatprep.subr.bf16.mxu0 0
    %1227 = vmatpush1.bf16.msra.mxu0 0
    %1228 = vmatprep.subr.bf16.mxu0 0
    %1229 = vmatpush1.bf16.msra.mxu0 0
    %1230 = vmatprep.subr.bf16.mxu0 0
    %1231 = vmatpush1.bf16.msra.mxu0 0
    %1232 = vmatprep.subr.bf16.mxu0 0
    %1233 = vmatpush1.bf16.msra.mxu0 0
    %1234 = vmatprep.subr.bf16.mxu0 0
    %1235 = vmatpush1.bf16.msra.mxu0 0
    %1236 = vmatprep.subr.bf16.mxu0 0
    %1237 = vmatpush1.bf16.msra.mxu0 0
    %1238 = vmatprep.subr.bf16.mxu0 0
    %1239 = vmatpush1.bf16.msra.mxu0 0
    %1240 = vmatprep.subr.bf16.mxu0 0
    %1241 = vmatpush1.bf16.msra.mxu0 0
    %1242 = vmatprep.mubr.bf16.mxu0 0
    %1243 = vmatmul.mubr.bf16.gmra.mrb[0].mxu0 %v1208
    %v1244 = vpop.f32.mrb[0].mxu0
    %v1245 = vadd.f32 %v1193, %v1244
    %v1246 = vpop.f32.mrb[0].mxu0
    %v1247 = vpop.f32.mrb[0].mxu0
    %v1248 = vadd.f32 %v1193, %v1247
    %v1249 = vpop.f32.mrb[0].mxu0
    %1250 = vdwg.mxu0
    %v1251 = vmax.f32 %v1245, 0.0
    %v1252 = vmax.f32 %v1248, 0.0
    %v1253 = vpack.c.bf16 %v1252, %v1251
    %v1254 = vld [vmem:[%s10] sm:$0xf]
    %v1255 = vld [vmem:[%s10 + $0x4] sm:$0xf]
    %v1256 = vld [vmem:[%s10 + $0x8] sm:$0xf]
    %v1257 = vld [vmem:[%s10 + $0xc] sm:$0xf]
    %v1258 = vld [vmem:[%s10 + $0x10] sm:$0xf]
    %v1259 = vld [vmem:[%s10 + $0x14] sm:$0xf]
    %v1260 = vld [vmem:[%s10 + $0x18] sm:$0xf]
    %v1261 = vld [vmem:[%s10 + $0x1c] sm:$0xf]
    %v1262 = vld [vmem:[%s11] sm:$0x1]
    %v1264 = vlaneseq
    %v1265 = vshrl.u32 %v1264, 7
    %v1266 = vsub.s32 0, %v1265
    %v1267 = vrot.slane %v1262, %v1266
    %v1277 = vunpack.c.l.b16 %v1254
    %v1278 = vunpack.c.l.b16 %v1255
    %v1279 = vunpack.c.l.b16 %v1256
    %v1280 = vunpack.c.l.b16 %v1257
    %v1281 = vunpack.c.l.b16 %v1258
    %v1282 = vunpack.c.l.b16 %v1259
    %v1283 = vunpack.c.l.b16 %v1260
    %v1284 = vunpack.c.l.b16 %v1261
    %v1285 = vpack.c.b16 %v1278, %v1277
    %v1286 = vpack.c.b16 %v1280, %v1279
    %v1287 = vpack.c.b16 %v1282, %v1281
    %v1288 = vpack.c.b16 %v1284, %v1283
    %vm1293 = vcmask 523264
    %v1295 = vsel %vm1293, %v1253, 0
    %1297 = vmatprep.subr.bf16.mxu0 0
    %1298 = vmatpush1.bf16.msra.mxu0 %v1285
    %1299 = vmatprep.subr.bf16.mxu0 0
    %1300 = vmatpush1.bf16.msra.mxu0 %v1286
    %1301 = vmatprep.subr.bf16.mxu0 0
    %1302 = vmatpush1.bf16.msra.mxu0 %v1287
    %1303 = vmatprep.subr.bf16.mxu0 0
    %1304 = vmatpush1.bf16.msra.mxu0 %v1288
    %1305 = vmatprep.subr.bf16.mxu0 0
    %1306 = vmatpush1.bf16.msra.mxu0 0
    %1307 = vmatprep.subr.bf16.mxu0 0
    %1308 = vmatpush1.bf16.msra.mxu0 0
    %1309 = vmatprep.subr.bf16.mxu0 0
    %1310 = vmatpush1.bf16.msra.mxu0 0
    %1311 = vmatprep.subr.bf16.mxu0 0
    %1312 = vmatpush1.bf16.msra.mxu0 0
    %1313 = vmatprep.subr.bf16.mxu0 0
    %1314 = vmatpush1.bf16.msra.mxu0 0
    %1315 = vmatprep.subr.bf16.mxu0 0
    %1316 = vmatpush1.bf16.msra.mxu0 0
    %1317 = vmatprep.subr.bf16.mxu0 0
    %1318 = vmatpush1.bf16.msra.mxu0 0
    %1319 = vmatprep.subr.bf16.mxu0 0
    %1320 = vmatpush1.bf16.msra.mxu0 0
    %1321 = vmatprep.subr.bf16.mxu0 0
    %1322 = vmatpush1.bf16.msra.mxu0 0
    %1323 = vmatprep.subr.bf16.mxu0 0
    %1324 = vmatpush1.bf16.msra.mxu0 0
    %1325 = vmatprep.subr.bf16.mxu0 0
    %1326 = vmatpush1.bf16.msra.mxu0 0
    %1327 = vmatprep.subr.bf16.mxu0 0
    %1328 = vmatpush1.bf16.msra.mxu0 0
    %1329 = vmatprep.mubr.bf16.mxu0 0
    %1330 = vmatmul.mubr.bf16.gmra.mrb[0].mxu0 %v1295
    %v1331 = vpop.f32.mrb[0].mxu0
    %v1332 = vadd.f32 %v1267, %v1331
    %v1333 = vpop.f32.mrb[0].mxu0
    %v1334 = vpop.f32.mrb[0].mxu0
    %v1335 = vadd.f32 %v1267, %v1334
    %v1336 = vpop.f32.mrb[0].mxu0
    %1337 = vdwg.mxu0
    %v1338 = vadd.f32 %v1181, %v1332
    %v1339 = vadd.f32 %v1182, %v1335
    %v1340 = vld [vmem:[%s14] sm:$0x1]
    %v1341 = vld [vmem:[%s15] sm:$0x1]
    %v1342 = vsel %vm109, %v1338, 0.0
    %1343 = vadd.xlane.f32.xlu0 %v1342
    %v1344 = vpop.xlane.xlu0 %1343
    %v1345 = vsel %vm109, %v1339, 0.0
    %1346 = vadd.xlane.f32.xlu0 %v1345
    %v1347 = vpop.xlane.xlu0 %1346
    %v1348 = vmul.f32 %v1344, %v1146
    %v1349 = vmul.f32 %v1347, %v1146
    %v1350 = vsub.f32 %v1338, %v1348
    %v1351 = vsub.f32 %v1339, %v1349
    %v1352 = vmul.f32 %v1350, %v1350
    %v1353 = vmul.f32 %v1351, %v1351
    %v1354 = vsel %vm109, %v1352, 0.0
    %1355 = vadd.xlane.f32.xlu0 %v1354
    %v1356 = vpop.xlane.xlu0 %1355
    %v1357 = vsel %vm109, %v1353, 0.0
    %1358 = vadd.xlane.f32.xlu0 %v1357
    %v1359 = vpop.xlane.xlu0 %1358
    %v1360 = vmul.f32 %v1356, %v1146
    %v1361 = vmul.f32 %v1359, %v1146
    %v1362 = vadd.f32 %v1360, 1e-05
    %v1363 = vadd.f32 %v1361, 1e-05
    %v1364 = vrsqrt.pop %v1362
    %v1365 = vrsqrt.pop %v1363
    %v1366 = vmul.f32 %v1350, %v1364
    %v1367 = vmul.f32 %v1351, %v1365
    %v1369 = vlaneseq
    %v1370 = vshrl.u32 %v1369, 7
    %v1371 = vsub.s32 0, %v1370
    %v1372 = vrot.slane %v1340, %v1371
    %v1374 = vmul.f32 %v1366, %v1372
    %v1375 = vmul.f32 %v1367, %v1372
    %v1377 = vlaneseq
    %v1378 = vshrl.u32 %v1377, 7
    %v1379 = vsub.s32 0, %v1378
    %v1380 = vrot.slane %v1341, %v1379
    %v1382 = vadd.f32 %v1374, %v1380
    %v1383 = vadd.f32 %v1375, %v1380
    %v1384 = vpack.c.bf16 %v1383, %v1382
    %s1385 = scalar_lea.vmem %s4, 16
    %v1386 = vld [vmem:[%s1385] sm:$0xf]
    %v1387 = vld [vmem:[%s1385 + $0x4] sm:$0xf]
    %v1388 = vld [vmem:[%s1385 + $0x8] sm:$0xf]
    %v1389 = vld [vmem:[%s1385 + $0xc] sm:$0xf]
    %s1390 = scalar_lea.vmem %s5, 1
    %v1391 = vld [vmem:[%s1390] sm:$0x1]
    %v1393 = vlaneseq
    %v1394 = vshrl.u32 %v1393, 7
    %v1395 = vsub.s32 0, %v1394
    %v1396 = vrot.slane %v1391, %v1395
    %v1402 = vunpack.c.l.b16 %v1386
    %v1403 = vunpack.c.l.b16 %v1387
    %v1404 = vunpack.c.l.b16 %v1388
    %v1405 = vunpack.c.l.b16 %v1389
    %v1406 = vpack.c.b16 %v1403, %v1402
    %v1407 = vpack.c.b16 %v1405, %v1404
    %v1411 = vsel %vm109, %v1384, 0
    %1413 = vmatprep.subr.bf16.mxu0 0
    %1414 = vmatpush1.bf16.msra.mxu0 %v1406
    %1415 = vmatprep.subr.bf16.mxu0 0
    %1416 = vmatpush1.bf16.msra.mxu0 %v1407
    %1417 = vmatprep.subr.bf16.mxu0 0
    %1418 = vmatpush1.bf16.msra.mxu0 0
    %1419 = vmatprep.subr.bf16.mxu0 0
    %1420 = vmatpush1.bf16.msra.mxu0 0
    %1421 = vmatprep.subr.bf16.mxu0 0
    %1422 = vmatpush1.bf16.msra.mxu0 0
    %1423 = vmatprep.subr.bf16.mxu0 0
    %1424 = vmatpush1.bf16.msra.mxu0 0
    %1425 = vmatprep.subr.bf16.mxu0 0
    %1426 = vmatpush1.bf16.msra.mxu0 0
    %1427 = vmatprep.subr.bf16.mxu0 0
    %1428 = vmatpush1.bf16.msra.mxu0 0
    %1429 = vmatprep.subr.bf16.mxu0 0
    %1430 = vmatpush1.bf16.msra.mxu0 0
    %1431 = vmatprep.subr.bf16.mxu0 0
    %1432 = vmatpush1.bf16.msra.mxu0 0
    %1433 = vmatprep.subr.bf16.mxu0 0
    %1434 = vmatpush1.bf16.msra.mxu0 0
    %1435 = vmatprep.subr.bf16.mxu0 0
    %1436 = vmatpush1.bf16.msra.mxu0 0
    %1437 = vmatprep.subr.bf16.mxu0 0
    %1438 = vmatpush1.bf16.msra.mxu0 0
    %1439 = vmatprep.subr.bf16.mxu0 0
    %1440 = vmatpush1.bf16.msra.mxu0 0
    %1441 = vmatprep.subr.bf16.mxu0 0
    %1442 = vmatpush1.bf16.msra.mxu0 0
    %1443 = vmatprep.subr.bf16.mxu0 0
    %1444 = vmatpush1.bf16.msra.mxu0 0
    %1445 = vmatprep.mubr.bf16.mxu0 0
    %1446 = vmatmul.mubr.bf16.gmra.mrb[0].mxu0 %v1411
    %v1447 = vpop.f32.mrb[0].mxu0
    %v1448 = vadd.f32 %v1396, %v1447
    %v1449 = vpop.f32.mrb[0].mxu0
    %v1450 = vpop.f32.mrb[0].mxu0
    %v1451 = vadd.f32 %v1396, %v1450
    %v1452 = vpop.f32.mrb[0].mxu0
    %1453 = vdwg.mxu0
    %v1454 = vpack.c.bf16 %v1448, %v1448
    %v1455 = vpack.c.bf16 %v1451, %v1451
    %1457 = vrot.lane.b32.xlu0 %v1454, 96
    %v1458 = vpop.permute.xlu0 %1457
    %v1460 = vsel %vm159, %v1454, 0
    %v1463 = vsel %vm159, %v1458, 0
    %1465 = vmatprep.subr.bf16.mxu0 0
    %1466 = vmatpush1.bf16.xpose.msra.mxu0 %v1463
    %1467 = vmatprep.subr.bf16.mxu0 0
    %1468 = vmatpush1.bf16.xpose.msra.mxu0 0
    %1469 = vmatprep.subr.bf16.mxu0 0
    %1470 = vmatpush1.bf16.xpose.msra.mxu0 0
    %1471 = vmatprep.subr.bf16.mxu0 0
    %1472 = vmatpush1.bf16.xpose.msra.mxu0 0
    %1473 = vmatprep.subr.bf16.mxu0 0
    %1474 = vmatpush1.bf16.xpose.msra.mxu0 0
    %1475 = vmatprep.subr.bf16.mxu0 0
    %1476 = vmatpush1.bf16.xpose.msra.mxu0 0
    %1477 = vmatprep.subr.bf16.mxu0 0
    %1478 = vmatpush1.bf16.xpose.msra.mxu0 0
    %1479 = vmatprep.subr.bf16.mxu0 0
    %1480 = vmatpush1.bf16.xpose.msra.mxu0 0
    %1481 = vmatprep.subr.bf16.mxu0 0
    %1482 = vmatpush1.bf16.xpose.msra.mxu0 0
    %1483 = vmatprep.subr.bf16.mxu0 0
    %1484 = vmatpush1.bf16.xpose.msra.mxu0 0
    %1485 = vmatprep.subr.bf16.mxu0 0
    %1486 = vmatpush1.bf16.xpose.msra.mxu0 0
    %1487 = vmatprep.subr.bf16.mxu0 0
    %1488 = vmatpush1.bf16.xpose.msra.mxu0 0
    %1489 = vmatprep.subr.bf16.mxu0 0
    %1490 = vmatpush1.bf16.xpose.msra.mxu0 0
    %1491 = vmatprep.subr.bf16.mxu0 0
    %1492 = vmatpush1.bf16.xpose.msra.mxu0 0
    %1493 = vmatprep.subr.bf16.mxu0 0
    %1494 = vmatpush1.bf16.xpose.msra.mxu0 0
    %1495 = vmatprep.subr.bf16.mxu0 0
    %1496 = vmatpush1.bf16.xpose.msra.mxu0 0
    %1497 = vmatprep.mubr.bf16.mxu0 0
    %1498 = vmatmul.mubr.bf16.gmra.mrb[0].mxu0 %v1460
    %v1499 = vpop.f32.mrb[0].mxu0
    %v1500 = vadd.f32 %v83, %v1499
    %v1501 = vpop.f32.mrb[0].mxu0
    %v1502 = vpop.f32.mrb[0].mxu0
    %v1503 = vpop.f32.mrb[0].mxu0
    %1504 = vdwg.mxu0
    %1506 = vrot.lane.b32.xlu0 %v1455, 96
    %v1507 = vpop.permute.xlu0 %1506
    %v1509 = vsel %vm159, %v1455, 0
    %v1512 = vsel %vm159, %v1507, 0
    %1514 = vmatprep.subr.bf16.mxu0 0
    %1515 = vmatpush1.bf16.xpose.msra.mxu0 %v1512
    %1516 = vmatprep.subr.bf16.mxu0 0
    %1517 = vmatpush1.bf16.xpose.msra.mxu0 0
    %1518 = vmatprep.subr.bf16.mxu0 0
    %1519 = vmatpush1.bf16.xpose.msra.mxu0 0
    %1520 = vmatprep.subr.bf16.mxu0 0
    %1521 = vmatpush1.bf16.xpose.msra.mxu0 0
    %1522 = vmatprep.subr.bf16.mxu0 0
    %1523 = vmatpush1.bf16.xpose.msra.mxu0 0
    %1524 = vmatprep.subr.bf16.mxu0 0
    %1525 = vmatpush1.bf16.xpose.msra.mxu0 0
    %1526 = vmatprep.subr.bf16.mxu0 0
    %1527 = vmatpush1.bf16.xpose.msra.mxu0 0
    %1528 = vmatprep.subr.bf16.mxu0 0
    %1529 = vmatpush1.bf16.xpose.msra.mxu0 0
    %1530 = vmatprep.subr.bf16.mxu0 0
    %1531 = vmatpush1.bf16.xpose.msra.mxu0 0
    %1532 = vmatprep.subr.bf16.mxu0 0
    %1533 = vmatpush1.bf16.xpose.msra.mxu0 0
    %1534 = vmatprep.subr.bf16.mxu0 0
    %1535 = vmatpush1.bf16.xpose.msra.mxu0 0
    %1536 = vmatprep.subr.bf16.mxu0 0
    %1537 = vmatpush1.bf16.xpose.msra.mxu0 0
    %1538 = vmatprep.subr.bf16.mxu0 0
    %1539 = vmatpush1.bf16.xpose.msra.mxu0 0
    %1540 = vmatprep.subr.bf16.mxu0 0
    %1541 = vmatpush1.bf16.xpose.msra.mxu0 0
    %1542 = vmatprep.subr.bf16.mxu0 0
    %1543 = vmatpush1.bf16.xpose.msra.mxu0 0
    %1544 = vmatprep.subr.bf16.mxu0 0
    %1545 = vmatpush1.bf16.xpose.msra.mxu0 0
    %1546 = vmatprep.mubr.bf16.mxu0 0
    %1547 = vmatmul.mubr.bf16.gmra.mrb[0].mxu0 %v1509
    %v1548 = vpop.f32.mrb[0].mxu0
    %v1549 = vadd.f32 %v84, %v1548
    %v1550 = vpop.f32.mrb[0].mxu0
    %v1551 = vpop.f32.mrb[0].mxu0
    %v1552 = vpop.f32.mrb[0].mxu0
    %1553 = vdwg.mxu0
    %v1554 = vsel %vm159, %v1500, -inf
    %1555 = vmax.xlane.f32.xlu0 %v1554
    %v1556 = vpop.xlane.xlu0 %1555
    %v1557 = vsel %vm159, %v1549, -inf
    %1558 = vmax.xlane.f32.xlu0 %v1557
    %v1559 = vpop.xlane.xlu0 %1558
    %v1560 = vsub.f32 %v1500, %v1556
    %v1561 = vsub.f32 %v1549, %v1559
    %v1562 = vmul.f32 %v1560, 1.442695
    %v1563 = vpow.pop %v1562
    %v1564 = vmul.f32 %v1561, 1.442695
    %v1565 = vpow.pop %v1564
    %v1566 = vsel %vm159, %v1563, 0.0
    %1567 = vadd.xlane.f32.xlu0 %v1566
    %v1568 = vpop.xlane.xlu0 %1567
    %v1569 = vsel %vm159, %v1565, 0.0
    %1570 = vadd.xlane.f32.xlu0 %v1569
    %v1571 = vpop.xlane.xlu0 %1570
    %v1572 = vrcp.pop %v1568
    %v1573 = vrcp.pop %v1571
    %v1574 = vmul.f32 %v1563, %v1572
    %v1575 = vmul.f32 %v1565, %v1573
    %v1576 = vpack.c.bf16 %v1574, %v1574
    %v1577 = vpack.c.bf16 %v1575, %v1575
    %1578 = vrot.lane.b32.xlu0 %v1454, 64
    %v1579 = vpop.permute.xlu0 %1578
    %v1581 = vsel %vm159, %v1576, 0
    %v1584 = vsel %vm284, %v1579, 0
    %1586 = vmatprep.subr.bf16.mxu0 0
    %1587 = vmatpush1.bf16.msra.mxu0 %v1584
    %1588 = vmatprep.subr.bf16.mxu0 0
    %1589 = vmatpush1.bf16.msra.mxu0 0
    %1590 = vmatprep.subr.bf16.mxu0 0
    %1591 = vmatpush1.bf16.msra.mxu0 0
    %1592 = vmatprep.subr.bf16.mxu0 0
    %1593 = vmatpush1.bf16.msra.mxu0 0
    %1594 = vmatprep.subr.bf16.mxu0 0
    %1595 = vmatpush1.bf16.msra.mxu0 0
    %1596 = vmatprep.subr.bf16.mxu0 0
    %1597 = vmatpush1.bf16.msra.mxu0 0
    %1598 = vmatprep.subr.bf16.mxu0 0
    %1599 = vmatpush1.bf16.msra.mxu0 0
    %1600 = vmatprep.subr.bf16.mxu0 0
    %1601 = vmatpush1.bf16.msra.mxu0 0
    %1602 = vmatprep.subr.bf16.mxu0 0
    %1603 = vmatpush1.bf16.msra.mxu0 0
    %1604 = vmatprep.subr.bf16.mxu0 0
    %1605 = vmatpush1.bf16.msra.mxu0 0
    %1606 = vmatprep.subr.bf16.mxu0 0
    %1607 = vmatpush1.bf16.msra.mxu0 0
    %1608 = vmatprep.subr.bf16.mxu0 0
    %1609 = vmatpush1.bf16.msra.mxu0 0
    %1610 = vmatprep.subr.bf16.mxu0 0
    %1611 = vmatpush1.bf16.msra.mxu0 0
    %1612 = vmatprep.subr.bf16.mxu0 0
    %1613 = vmatpush1.bf16.msra.mxu0 0
    %1614 = vmatprep.subr.bf16.mxu0 0
    %1615 = vmatpush1.bf16.msra.mxu0 0
    %1616 = vmatprep.subr.bf16.mxu0 0
    %1617 = vmatpush1.bf16.msra.mxu0 0
    %1618 = vmatprep.mubr.bf16.mxu0 0
    %1619 = vmatmul.mubr.bf16.gmra.mrb[0].mxu0 %v1581
    %v1620 = vpop.f32.mrb[0].mxu0
    %v1621 = vadd.f32 0.0, %v1620
    %v1622 = vpop.f32.mrb[0].mxu0
    %v1623 = vpop.f32.mrb[0].mxu0
    %v1624 = vpop.f32.mrb[0].mxu0
    %1625 = vdwg.mxu0
    %1626 = vrot.lane.b32.xlu0 %v1455, 64
    %v1627 = vpop.permute.xlu0 %1626
    %v1629 = vsel %vm159, %v1577, 0
    %v1632 = vsel %vm284, %v1627, 0
    %1634 = vmatprep.subr.bf16.mxu0 0
    %1635 = vmatpush1.bf16.msra.mxu0 %v1632
    %1636 = vmatprep.subr.bf16.mxu0 0
    %1637 = vmatpush1.bf16.msra.mxu0 0
    %1638 = vmatprep.subr.bf16.mxu0 0
    %1639 = vmatpush1.bf16.msra.mxu0 0
    %1640 = vmatprep.subr.bf16.mxu0 0
    %1641 = vmatpush1.bf16.msra.mxu0 0
    %1642 = vmatprep.subr.bf16.mxu0 0
    %1643 = vmatpush1.bf16.msra.mxu0 0
    %1644 = vmatprep.subr.bf16.mxu0 0
    %1645 = vmatpush1.bf16.msra.mxu0 0
    %1646 = vmatprep.subr.bf16.mxu0 0
    %1647 = vmatpush1.bf16.msra.mxu0 0
    %1648 = vmatprep.subr.bf16.mxu0 0
    %1649 = vmatpush1.bf16.msra.mxu0 0
    %1650 = vmatprep.subr.bf16.mxu0 0
    %1651 = vmatpush1.bf16.msra.mxu0 0
    %1652 = vmatprep.subr.bf16.mxu0 0
    %1653 = vmatpush1.bf16.msra.mxu0 0
    %1654 = vmatprep.subr.bf16.mxu0 0
    %1655 = vmatpush1.bf16.msra.mxu0 0
    %1656 = vmatprep.subr.bf16.mxu0 0
    %1657 = vmatpush1.bf16.msra.mxu0 0
    %1658 = vmatprep.subr.bf16.mxu0 0
    %1659 = vmatpush1.bf16.msra.mxu0 0
    %1660 = vmatprep.subr.bf16.mxu0 0
    %1661 = vmatpush1.bf16.msra.mxu0 0
    %1662 = vmatprep.subr.bf16.mxu0 0
    %1663 = vmatpush1.bf16.msra.mxu0 0
    %1664 = vmatprep.subr.bf16.mxu0 0
    %1665 = vmatpush1.bf16.msra.mxu0 0
    %1666 = vmatprep.mubr.bf16.mxu0 0
    %1667 = vmatmul.mubr.bf16.gmra.mrb[0].mxu0 %v1629
    %v1668 = vpop.f32.mrb[0].mxu0
    %v1669 = vadd.f32 0.0, %v1668
    %v1670 = vpop.f32.mrb[0].mxu0
    %v1671 = vpop.f32.mrb[0].mxu0
    %v1672 = vpop.f32.mrb[0].mxu0
    %1673 = vdwg.mxu0
    %1674 = vrot.lane.b32.xlu0 %v1454, 120
    %v1675 = vpop.permute.xlu0 %1674
    %1676 = vrot.lane.b32.xlu0 %v1454, 88
    %v1677 = vpop.permute.xlu0 %1676
    %v1679 = vsel %vm159, %v1675, 0
    %v1682 = vsel %vm159, %v1677, 0
    %1684 = vmatprep.subr.bf16.mxu0 0
    %1685 = vmatpush1.bf16.xpose.msra.mxu0 %v1682
    %1686 = vmatprep.subr.bf16.mxu0 0
    %1687 = vmatpush1.bf16.xpose.msra.mxu0 0
    %1688 = vmatprep.subr.bf16.mxu0 0
    %1689 = vmatpush1.bf16.xpose.msra.mxu0 0
    %1690 = vmatprep.subr.bf16.mxu0 0
    %1691 = vmatpush1.bf16.xpose.msra.mxu0 0
    %1692 = vmatprep.subr.bf16.mxu0 0
    %1693 = vmatpush1.bf16.xpose.msra.mxu0 0
    %1694 = vmatprep.subr.bf16.mxu0 0
    %1695 = vmatpush1.bf16.xpose.msra.mxu0 0
    %1696 = vmatprep.subr.bf16.mxu0 0
    %1697 = vmatpush1.bf16.xpose.msra.mxu0 0
    %1698 = vmatprep.subr.bf16.mxu0 0
    %1699 = vmatpush1.bf16.xpose.msra.mxu0 0
    %1700 = vmatprep.subr.bf16.mxu0 0
    %1701 = vmatpush1.bf16.xpose.msra.mxu0 0
    %1702 = vmatprep.subr.bf16.mxu0 0
    %1703 = vmatpush1.bf16.xpose.msra.mxu0 0
    %1704 = vmatprep.subr.bf16.mxu0 0
    %1705 = vmatpush1.bf16.xpose.msra.mxu0 0
    %1706 = vmatprep.subr.bf16.mxu0 0
    %1707 = vmatpush1.bf16.xpose.msra.mxu0 0
    %1708 = vmatprep.subr.bf16.mxu0 0
    %1709 = vmatpush1.bf16.xpose.msra.mxu0 0
    %1710 = vmatprep.subr.bf16.mxu0 0
    %1711 = vmatpush1.bf16.xpose.msra.mxu0 0
    %1712 = vmatprep.subr.bf16.mxu0 0
    %1713 = vmatpush1.bf16.xpose.msra.mxu0 0
    %1714 = vmatprep.subr.bf16.mxu0 0
    %1715 = vmatpush1.bf16.xpose.msra.mxu0 0
    %1716 = vmatprep.mubr.bf16.mxu0 0
    %1717 = vmatmul.mubr.bf16.gmra.mrb[0].mxu0 %v1679
    %v1718 = vpop.f32.mrb[0].mxu0
    %v1719 = vadd.f32 %v83, %v1718
    %v1720 = vpop.f32.mrb[0].mxu0
    %v1721 = vpop.f32.mrb[0].mxu0
    %v1722 = vpop.f32.mrb[0].mxu0
    %1723 = vdwg.mxu0
    %1724 = vrot.lane.b32.xlu0 %v1455, 120
    %v1725 = vpop.permute.xlu0 %1724
    %1726 = vrot.lane.b32.xlu0 %v1455, 88
    %v1727 = vpop.permute.xlu0 %1726
    %v1729 = vsel %vm159, %v1725, 0
    %v1732 = vsel %vm159, %v1727, 0
    %1734 = vmatprep.subr.bf16.mxu0 0
    %1735 = vmatpush1.bf16.xpose.msra.mxu0 %v1732
    %1736 = vmatprep.subr.bf16.mxu0 0
    %1737 = vmatpush1.bf16.xpose.msra.mxu0 0
    %1738 = vmatprep.subr.bf16.mxu0 0
    %1739 = vmatpush1.bf16.xpose.msra.mxu0 0
    %1740 = vmatprep.subr.bf16.mxu0 0
    %1741 = vmatpush1.bf16.xpose.msra.mxu0 0
    %1742 = vmatprep.subr.bf16.mxu0 0
    %1743 = vmatpush1.bf16.xpose.msra.mxu0 0
    %1744 = vmatprep.subr.bf16.mxu0 0
    %1745 = vmatpush1.bf16.xpose.msra.mxu0 0
    %1746 = vmatprep.subr.bf16.mxu0 0
    %1747 = vmatpush1.bf16.xpose.msra.mxu0 0
    %1748 = vmatprep.subr.bf16.mxu0 0
    %1749 = vmatpush1.bf16.xpose.msra.mxu0 0
    %1750 = vmatprep.subr.bf16.mxu0 0
    %1751 = vmatpush1.bf16.xpose.msra.mxu0 0
    %1752 = vmatprep.subr.bf16.mxu0 0
    %1753 = vmatpush1.bf16.xpose.msra.mxu0 0
    %1754 = vmatprep.subr.bf16.mxu0 0
    %1755 = vmatpush1.bf16.xpose.msra.mxu0 0
    %1756 = vmatprep.subr.bf16.mxu0 0
    %1757 = vmatpush1.bf16.xpose.msra.mxu0 0
    %1758 = vmatprep.subr.bf16.mxu0 0
    %1759 = vmatpush1.bf16.xpose.msra.mxu0 0
    %1760 = vmatprep.subr.bf16.mxu0 0
    %1761 = vmatpush1.bf16.xpose.msra.mxu0 0
    %1762 = vmatprep.subr.bf16.mxu0 0
    %1763 = vmatpush1.bf16.xpose.msra.mxu0 0
    %1764 = vmatprep.subr.bf16.mxu0 0
    %1765 = vmatpush1.bf16.xpose.msra.mxu0 0
    %1766 = vmatprep.mubr.bf16.mxu0 0
    %1767 = vmatmul.mubr.bf16.gmra.mrb[0].mxu0 %v1729
    %v1768 = vpop.f32.mrb[0].mxu0
    %v1769 = vadd.f32 %v84, %v1768
    %v1770 = vpop.f32.mrb[0].mxu0
    %v1771 = vpop.f32.mrb[0].mxu0
    %v1772 = vpop.f32.mrb[0].mxu0
    %1773 = vdwg.mxu0
    %v1774 = vsel %vm159, %v1719, -inf
    %1775 = vmax.xlane.f32.xlu0 %v1774
    %v1776 = vpop.xlane.xlu0 %1775
    %v1777 = vsel %vm159, %v1769, -inf
    %1778 = vmax.xlane.f32.xlu0 %v1777
    %v1779 = vpop.xlane.xlu0 %1778
    %v1780 = vsub.f32 %v1719, %v1776
    %v1781 = vsub.f32 %v1769, %v1779
    %v1782 = vmul.f32 %v1780, 1.442695
    %v1783 = vpow.pop %v1782
    %v1784 = vmul.f32 %v1781, 1.442695
    %v1785 = vpow.pop %v1784
    %v1786 = vsel %vm159, %v1783, 0.0
    %1787 = vadd.xlane.f32.xlu0 %v1786
    %v1788 = vpop.xlane.xlu0 %1787
    %v1789 = vsel %vm159, %v1785, 0.0
    %1790 = vadd.xlane.f32.xlu0 %v1789
    %v1791 = vpop.xlane.xlu0 %1790
    %v1792 = vrcp.pop %v1788
    %v1793 = vrcp.pop %v1791
    %v1794 = vmul.f32 %v1783, %v1792
    %v1795 = vmul.f32 %v1785, %v1793
    %v1796 = vpack.c.bf16 %v1794, %v1794
    %v1797 = vpack.c.bf16 %v1795, %v1795
    %1798 = vrot.lane.b32.xlu0 %v1454, 56
    %v1799 = vpop.permute.xlu0 %1798
    %v1801 = vsel %vm159, %v1796, 0
    %v1804 = vsel %vm284, %v1799, 0
    %1806 = vmatprep.subr.bf16.mxu0 0
    %1807 = vmatpush1.bf16.msra.mxu0 %v1804
    %1808 = vmatprep.subr.bf16.mxu0 0
    %1809 = vmatpush1.bf16.msra.mxu0 0
    %1810 = vmatprep.subr.bf16.mxu0 0
    %1811 = vmatpush1.bf16.msra.mxu0 0
    %1812 = vmatprep.subr.bf16.mxu0 0
    %1813 = vmatpush1.bf16.msra.mxu0 0
    %1814 = vmatprep.subr.bf16.mxu0 0
    %1815 = vmatpush1.bf16.msra.mxu0 0
    %1816 = vmatprep.subr.bf16.mxu0 0
    %1817 = vmatpush1.bf16.msra.mxu0 0
    %1818 = vmatprep.subr.bf16.mxu0 0
    %1819 = vmatpush1.bf16.msra.mxu0 0
    %1820 = vmatprep.subr.bf16.mxu0 0
    %1821 = vmatpush1.bf16.msra.mxu0 0
    %1822 = vmatprep.subr.bf16.mxu0 0
    %1823 = vmatpush1.bf16.msra.mxu0 0
    %1824 = vmatprep.subr.bf16.mxu0 0
    %1825 = vmatpush1.bf16.msra.mxu0 0
    %1826 = vmatprep.subr.bf16.mxu0 0
    %1827 = vmatpush1.bf16.msra.mxu0 0
    %1828 = vmatprep.subr.bf16.mxu0 0
    %1829 = vmatpush1.bf16.msra.mxu0 0
    %1830 = vmatprep.subr.bf16.mxu0 0
    %1831 = vmatpush1.bf16.msra.mxu0 0
    %1832 = vmatprep.subr.bf16.mxu0 0
    %1833 = vmatpush1.bf16.msra.mxu0 0
    %1834 = vmatprep.subr.bf16.mxu0 0
    %1835 = vmatpush1.bf16.msra.mxu0 0
    %1836 = vmatprep.subr.bf16.mxu0 0
    %1837 = vmatpush1.bf16.msra.mxu0 0
    %1838 = vmatprep.mubr.bf16.mxu0 0
    %1839 = vmatmul.mubr.bf16.gmra.mrb[0].mxu0 %v1801
    %v1840 = vpop.f32.mrb[0].mxu0
    %v1841 = vadd.f32 0.0, %v1840
    %v1842 = vpop.f32.mrb[0].mxu0
    %v1843 = vpop.f32.mrb[0].mxu0
    %v1844 = vpop.f32.mrb[0].mxu0
    %1845 = vdwg.mxu0
    %1846 = vrot.lane.b32.xlu0 %v1455, 56
    %v1847 = vpop.permute.xlu0 %1846
    %v1849 = vsel %vm159, %v1797, 0
    %v1852 = vsel %vm284, %v1847, 0
    %1854 = vmatprep.subr.bf16.mxu0 0
    %1855 = vmatpush1.bf16.msra.mxu0 %v1852
    %1856 = vmatprep.subr.bf16.mxu0 0
    %1857 = vmatpush1.bf16.msra.mxu0 0
    %1858 = vmatprep.subr.bf16.mxu0 0
    %1859 = vmatpush1.bf16.msra.mxu0 0
    %1860 = vmatprep.subr.bf16.mxu0 0
    %1861 = vmatpush1.bf16.msra.mxu0 0
    %1862 = vmatprep.subr.bf16.mxu0 0
    %1863 = vmatpush1.bf16.msra.mxu0 0
    %1864 = vmatprep.subr.bf16.mxu0 0
    %1865 = vmatpush1.bf16.msra.mxu0 0
    %1866 = vmatprep.subr.bf16.mxu0 0
    %1867 = vmatpush1.bf16.msra.mxu0 0
    %1868 = vmatprep.subr.bf16.mxu0 0
    %1869 = vmatpush1.bf16.msra.mxu0 0
    %1870 = vmatprep.subr.bf16.mxu0 0
    %1871 = vmatpush1.bf16.msra.mxu0 0
    %1872 = vmatprep.subr.bf16.mxu0 0
    %1873 = vmatpush1.bf16.msra.mxu0 0
    %1874 = vmatprep.subr.bf16.mxu0 0
    %1875 = vmatpush1.bf16.msra.mxu0 0
    %1876 = vmatprep.subr.bf16.mxu0 0
    %1877 = vmatpush1.bf16.msra.mxu0 0
    %1878 = vmatprep.subr.bf16.mxu0 0
    %1879 = vmatpush1.bf16.msra.mxu0 0
    %1880 = vmatprep.subr.bf16.mxu0 0
    %1881 = vmatpush1.bf16.msra.mxu0 0
    %1882 = vmatprep.subr.bf16.mxu0 0
    %1883 = vmatpush1.bf16.msra.mxu0 0
    %1884 = vmatprep.subr.bf16.mxu0 0
    %1885 = vmatpush1.bf16.msra.mxu0 0
    %1886 = vmatprep.mubr.bf16.mxu0 0
    %1887 = vmatmul.mubr.bf16.gmra.mrb[0].mxu0 %v1849
    %v1888 = vpop.f32.mrb[0].mxu0
    %v1889 = vadd.f32 0.0, %v1888
    %v1890 = vpop.f32.mrb[0].mxu0
    %v1891 = vpop.f32.mrb[0].mxu0
    %v1892 = vpop.f32.mrb[0].mxu0
    %1893 = vdwg.mxu0
    %1894 = vrot.lane.b32.xlu0 %v1454, 112
    %v1895 = vpop.permute.xlu0 %1894
    %1896 = vrot.lane.b32.xlu0 %v1454, 80
    %v1897 = vpop.permute.xlu0 %1896
    %v1899 = vsel %vm159, %v1895, 0
    %v1902 = vsel %vm159, %v1897, 0
    %1904 = vmatprep.subr.bf16.mxu0 0
    %1905 = vmatpush1.bf16.xpose.msra.mxu0 %v1902
    %1906 = vmatprep.subr.bf16.mxu0 0
    %1907 = vmatpush1.bf16.xpose.msra.mxu0 0
    %1908 = vmatprep.subr.bf16.mxu0 0
    %1909 = vmatpush1.bf16.xpose.msra.mxu0 0
    %1910 = vmatprep.subr.bf16.mxu0 0
    %1911 = vmatpush1.bf16.xpose.msra.mxu0 0
    %1912 = vmatprep.subr.bf16.mxu0 0
    %1913 = vmatpush1.bf16.xpose.msra.mxu0 0
    %1914 = vmatprep.subr.bf16.mxu0 0
    %1915 = vmatpush1.bf16.xpose.msra.mxu0 0
    %1916 = vmatprep.subr.bf16.mxu0 0
    %1917 = vmatpush1.bf16.xpose.msra.mxu0 0
    %1918 = vmatprep.subr.bf16.mxu0 0
    %1919 = vmatpush1.bf16.xpose.msra.mxu0 0
    %1920 = vmatprep.subr.bf16.mxu0 0
    %1921 = vmatpush1.bf16.xpose.msra.mxu0 0
    %1922 = vmatprep.subr.bf16.mxu0 0
    %1923 = vmatpush1.bf16.xpose.msra.mxu0 0
    %1924 = vmatprep.subr.bf16.mxu0 0
    %1925 = vmatpush1.bf16.xpose.msra.mxu0 0
    %1926 = vmatprep.subr.bf16.mxu0 0
    %1927 = vmatpush1.bf16.xpose.msra.mxu0 0
    %1928 = vmatprep.subr.bf16.mxu0 0
    %1929 = vmatpush1.bf16.xpose.msra.mxu0 0
    %1930 = vmatprep.subr.bf16.mxu0 0
    %1931 = vmatpush1.bf16.xpose.msra.mxu0 0
    %1932 = vmatprep.subr.bf16.mxu0 0
    %1933 = vmatpush1.bf16.xpose.msra.mxu0 0
    %1934 = vmatprep.subr.bf16.mxu0 0
    %1935 = vmatpush1.bf16.xpose.msra.mxu0 0
    %1936 = vmatprep.mubr.bf16.mxu0 0
    %1937 = vmatmul.mubr.bf16.gmra.mrb[0].mxu0 %v1899
    %v1938 = vpop.f32.mrb[0].mxu0
    %v1939 = vadd.f32 %v83, %v1938
    %v1940 = vpop.f32.mrb[0].mxu0
    %v1941 = vpop.f32.mrb[0].mxu0
    %v1942 = vpop.f32.mrb[0].mxu0
    %1943 = vdwg.mxu0
    %1944 = vrot.lane.b32.xlu0 %v1455, 112
    %v1945 = vpop.permute.xlu0 %1944
    %1946 = vrot.lane.b32.xlu0 %v1455, 80
    %v1947 = vpop.permute.xlu0 %1946
    %v1949 = vsel %vm159, %v1945, 0
    %v1952 = vsel %vm159, %v1947, 0
    %1954 = vmatprep.subr.bf16.mxu0 0
    %1955 = vmatpush1.bf16.xpose.msra.mxu0 %v1952
    %1956 = vmatprep.subr.bf16.mxu0 0
    %1957 = vmatpush1.bf16.xpose.msra.mxu0 0
    %1958 = vmatprep.subr.bf16.mxu0 0
    %1959 = vmatpush1.bf16.xpose.msra.mxu0 0
    %1960 = vmatprep.subr.bf16.mxu0 0
    %1961 = vmatpush1.bf16.xpose.msra.mxu0 0
    %1962 = vmatprep.subr.bf16.mxu0 0
    %1963 = vmatpush1.bf16.xpose.msra.mxu0 0
    %1964 = vmatprep.subr.bf16.mxu0 0
    %1965 = vmatpush1.bf16.xpose.msra.mxu0 0
    %1966 = vmatprep.subr.bf16.mxu0 0
    %1967 = vmatpush1.bf16.xpose.msra.mxu0 0
    %1968 = vmatprep.subr.bf16.mxu0 0
    %1969 = vmatpush1.bf16.xpose.msra.mxu0 0
    %1970 = vmatprep.subr.bf16.mxu0 0
    %1971 = vmatpush1.bf16.xpose.msra.mxu0 0
    %1972 = vmatprep.subr.bf16.mxu0 0
    %1973 = vmatpush1.bf16.xpose.msra.mxu0 0
    %1974 = vmatprep.subr.bf16.mxu0 0
    %1975 = vmatpush1.bf16.xpose.msra.mxu0 0
    %1976 = vmatprep.subr.bf16.mxu0 0
    %1977 = vmatpush1.bf16.xpose.msra.mxu0 0
    %1978 = vmatprep.subr.bf16.mxu0 0
    %1979 = vmatpush1.bf16.xpose.msra.mxu0 0
    %1980 = vmatprep.subr.bf16.mxu0 0
    %1981 = vmatpush1.bf16.xpose.msra.mxu0 0
    %1982 = vmatprep.subr.bf16.mxu0 0
    %1983 = vmatpush1.bf16.xpose.msra.mxu0 0
    %1984 = vmatprep.subr.bf16.mxu0 0
    %1985 = vmatpush1.bf16.xpose.msra.mxu0 0
    %1986 = vmatprep.mubr.bf16.mxu0 0
    %1987 = vmatmul.mubr.bf16.gmra.mrb[0].mxu0 %v1949
    %v1988 = vpop.f32.mrb[0].mxu0
    %v1989 = vadd.f32 %v84, %v1988
    %v1990 = vpop.f32.mrb[0].mxu0
    %v1991 = vpop.f32.mrb[0].mxu0
    %v1992 = vpop.f32.mrb[0].mxu0
    %1993 = vdwg.mxu0
    %v1994 = vsel %vm159, %v1939, -inf
    %1995 = vmax.xlane.f32.xlu0 %v1994
    %v1996 = vpop.xlane.xlu0 %1995
    %v1997 = vsel %vm159, %v1989, -inf
    %1998 = vmax.xlane.f32.xlu0 %v1997
    %v1999 = vpop.xlane.xlu0 %1998
    %v2000 = vsub.f32 %v1939, %v1996
    %v2001 = vsub.f32 %v1989, %v1999
    %v2002 = vmul.f32 %v2000, 1.442695
    %v2003 = vpow.pop %v2002
    %v2004 = vmul.f32 %v2001, 1.442695
    %v2005 = vpow.pop %v2004
    %v2006 = vsel %vm159, %v2003, 0.0
    %2007 = vadd.xlane.f32.xlu0 %v2006
    %v2008 = vpop.xlane.xlu0 %2007
    %v2009 = vsel %vm159, %v2005, 0.0
    %2010 = vadd.xlane.f32.xlu0 %v2009
    %v2011 = vpop.xlane.xlu0 %2010
    %v2012 = vrcp.pop %v2008
    %v2013 = vrcp.pop %v2011
    %v2014 = vmul.f32 %v2003, %v2012
    %v2015 = vmul.f32 %v2005, %v2013
    %v2016 = vpack.c.bf16 %v2014, %v2014
    %v2017 = vpack.c.bf16 %v2015, %v2015
    %2018 = vrot.lane.b32.xlu0 %v1454, 48
    %v2019 = vpop.permute.xlu0 %2018
    %v2021 = vsel %vm159, %v2016, 0
    %v2024 = vsel %vm284, %v2019, 0
    %2026 = vmatprep.subr.bf16.mxu0 0
    %2027 = vmatpush1.bf16.msra.mxu0 %v2024
    %2028 = vmatprep.subr.bf16.mxu0 0
    %2029 = vmatpush1.bf16.msra.mxu0 0
    %2030 = vmatprep.subr.bf16.mxu0 0
    %2031 = vmatpush1.bf16.msra.mxu0 0
    %2032 = vmatprep.subr.bf16.mxu0 0
    %2033 = vmatpush1.bf16.msra.mxu0 0
    %2034 = vmatprep.subr.bf16.mxu0 0
    %2035 = vmatpush1.bf16.msra.mxu0 0
    %2036 = vmatprep.subr.bf16.mxu0 0
    %2037 = vmatpush1.bf16.msra.mxu0 0
    %2038 = vmatprep.subr.bf16.mxu0 0
    %2039 = vmatpush1.bf16.msra.mxu0 0
    %2040 = vmatprep.subr.bf16.mxu0 0
    %2041 = vmatpush1.bf16.msra.mxu0 0
    %2042 = vmatprep.subr.bf16.mxu0 0
    %2043 = vmatpush1.bf16.msra.mxu0 0
    %2044 = vmatprep.subr.bf16.mxu0 0
    %2045 = vmatpush1.bf16.msra.mxu0 0
    %2046 = vmatprep.subr.bf16.mxu0 0
    %2047 = vmatpush1.bf16.msra.mxu0 0
    %2048 = vmatprep.subr.bf16.mxu0 0
    %2049 = vmatpush1.bf16.msra.mxu0 0
    %2050 = vmatprep.subr.bf16.mxu0 0
    %2051 = vmatpush1.bf16.msra.mxu0 0
    %2052 = vmatprep.subr.bf16.mxu0 0
    %2053 = vmatpush1.bf16.msra.mxu0 0
    %2054 = vmatprep.subr.bf16.mxu0 0
    %2055 = vmatpush1.bf16.msra.mxu0 0
    %2056 = vmatprep.subr.bf16.mxu0 0
    %2057 = vmatpush1.bf16.msra.mxu0 0
    %2058 = vmatprep.mubr.bf16.mxu0 0
    %2059 = vmatmul.mubr.bf16.gmra.mrb[0].mxu0 %v2021
    %v2060 = vpop.f32.mrb[0].mxu0
    %v2061 = vadd.f32 0.0, %v2060
    %v2062 = vpop.f32.mrb[0].mxu0
    %v2063 = vpop.f32.mrb[0].mxu0
    %v2064 = vpop.f32.mrb[0].mxu0
    %2065 = vdwg.mxu0
    %2066 = vrot.lane.b32.xlu0 %v1455, 48
    %v2067 = vpop.permute.xlu0 %2066
    %v2069 = vsel %vm159, %v2017, 0
    %v2072 = vsel %vm284, %v2067, 0
    %2074 = vmatprep.subr.bf16.mxu0 0
    %2075 = vmatpush1.bf16.msra.mxu0 %v2072
    %2076 = vmatprep.subr.bf16.mxu0 0
    %2077 = vmatpush1.bf16.msra.mxu0 0
    %2078 = vmatprep.subr.bf16.mxu0 0
    %2079 = vmatpush1.bf16.msra.mxu0 0
    %2080 = vmatprep.subr.bf16.mxu0 0
    %2081 = vmatpush1.bf16.msra.mxu0 0
    %2082 = vmatprep.subr.bf16.mxu0 0
    %2083 = vmatpush1.bf16.msra.mxu0 0
    %2084 = vmatprep.subr.bf16.mxu0 0
    %2085 = vmatpush1.bf16.msra.mxu0 0
    %2086 = vmatprep.subr.bf16.mxu0 0
    %2087 = vmatpush1.bf16.msra.mxu0 0
    %2088 = vmatprep.subr.bf16.mxu0 0
    %2089 = vmatpush1.bf16.msra.mxu0 0
    %2090 = vmatprep.subr.bf16.mxu0 0
    %2091 = vmatpush1.bf16.msra.mxu0 0
    %2092 = vmatprep.subr.bf16.mxu0 0
    %2093 = vmatpush1.bf16.msra.mxu0 0
    %2094 = vmatprep.subr.bf16.mxu0 0
    %2095 = vmatpush1.bf16.msra.mxu0 0
    %2096 = vmatprep.subr.bf16.mxu0 0
    %2097 = vmatpush1.bf16.msra.mxu0 0
    %2098 = vmatprep.subr.bf16.mxu0 0
    %2099 = vmatpush1.bf16.msra.mxu0 0
    %2100 = vmatprep.subr.bf16.mxu0 0
    %2101 = vmatpush1.bf16.msra.mxu0 0
    %2102 = vmatprep.subr.bf16.mxu0 0
    %2103 = vmatpush1.bf16.msra.mxu0 0
    %2104 = vmatprep.subr.bf16.mxu0 0
    %2105 = vmatpush1.bf16.msra.mxu0 0
    %2106 = vmatprep.mubr.bf16.mxu0 0
    %2107 = vmatmul.mubr.bf16.gmra.mrb[0].mxu0 %v2069
    %v2108 = vpop.f32.mrb[0].mxu0
    %v2109 = vadd.f32 0.0, %v2108
    %v2110 = vpop.f32.mrb[0].mxu0
    %v2111 = vpop.f32.mrb[0].mxu0
    %v2112 = vpop.f32.mrb[0].mxu0
    %2113 = vdwg.mxu0
    %2114 = vrot.lane.b32.xlu0 %v1454, 104
    %v2115 = vpop.permute.xlu0 %2114
    %2116 = vrot.lane.b32.xlu0 %v1454, 72
    %v2117 = vpop.permute.xlu0 %2116
    %v2119 = vsel %vm159, %v2115, 0
    %v2122 = vsel %vm159, %v2117, 0
    %2124 = vmatprep.subr.bf16.mxu0 0
    %2125 = vmatpush1.bf16.xpose.msra.mxu0 %v2122
    %2126 = vmatprep.subr.bf16.mxu0 0
    %2127 = vmatpush1.bf16.xpose.msra.mxu0 0
    %2128 = vmatprep.subr.bf16.mxu0 0
    %2129 = vmatpush1.bf16.xpose.msra.mxu0 0
    %2130 = vmatprep.subr.bf16.mxu0 0
    %2131 = vmatpush1.bf16.xpose.msra.mxu0 0
    %2132 = vmatprep.subr.bf16.mxu0 0
    %2133 = vmatpush1.bf16.xpose.msra.mxu0 0
    %2134 = vmatprep.subr.bf16.mxu0 0
    %2135 = vmatpush1.bf16.xpose.msra.mxu0 0
    %2136 = vmatprep.subr.bf16.mxu0 0
    %2137 = vmatpush1.bf16.xpose.msra.mxu0 0
    %2138 = vmatprep.subr.bf16.mxu0 0
    %2139 = vmatpush1.bf16.xpose.msra.mxu0 0
    %2140 = vmatprep.subr.bf16.mxu0 0
    %2141 = vmatpush1.bf16.xpose.msra.mxu0 0
    %2142 = vmatprep.subr.bf16.mxu0 0
    %2143 = vmatpush1.bf16.xpose.msra.mxu0 0
    %2144 = vmatprep.subr.bf16.mxu0 0
    %2145 = vmatpush1.bf16.xpose.msra.mxu0 0
    %2146 = vmatprep.subr.bf16.mxu0 0
    %2147 = vmatpush1.bf16.xpose.msra.mxu0 0
    %2148 = vmatprep.subr.bf16.mxu0 0
    %2149 = vmatpush1.bf16.xpose.msra.mxu0 0
    %2150 = vmatprep.subr.bf16.mxu0 0
    %2151 = vmatpush1.bf16.xpose.msra.mxu0 0
    %2152 = vmatprep.subr.bf16.mxu0 0
    %2153 = vmatpush1.bf16.xpose.msra.mxu0 0
    %2154 = vmatprep.subr.bf16.mxu0 0
    %2155 = vmatpush1.bf16.xpose.msra.mxu0 0
    %2156 = vmatprep.mubr.bf16.mxu0 0
    %2157 = vmatmul.mubr.bf16.gmra.mrb[0].mxu0 %v2119
    %v2158 = vpop.f32.mrb[0].mxu0
    %v2159 = vadd.f32 %v83, %v2158
    %v2160 = vpop.f32.mrb[0].mxu0
    %v2161 = vpop.f32.mrb[0].mxu0
    %v2162 = vpop.f32.mrb[0].mxu0
    %2163 = vdwg.mxu0
    %2164 = vrot.lane.b32.xlu0 %v1455, 104
    %v2165 = vpop.permute.xlu0 %2164
    %2166 = vrot.lane.b32.xlu0 %v1455, 72
    %v2167 = vpop.permute.xlu0 %2166
    %v2169 = vsel %vm159, %v2165, 0
    %v2172 = vsel %vm159, %v2167, 0
    %2174 = vmatprep.subr.bf16.mxu0 0
    %2175 = vmatpush1.bf16.xpose.msra.mxu0 %v2172
    %2176 = vmatprep.subr.bf16.mxu0 0
    %2177 = vmatpush1.bf16.xpose.msra.mxu0 0
    %2178 = vmatprep.subr.bf16.mxu0 0
    %2179 = vmatpush1.bf16.xpose.msra.mxu0 0
    %2180 = vmatprep.subr.bf16.mxu0 0
    %2181 = vmatpush1.bf16.xpose.msra.mxu0 0
    %2182 = vmatprep.subr.bf16.mxu0 0
    %2183 = vmatpush1.bf16.xpose.msra.mxu0 0
    %2184 = vmatprep.subr.bf16.mxu0 0
    %2185 = vmatpush1.bf16.xpose.msra.mxu0 0
    %2186 = vmatprep.subr.bf16.mxu0 0
    %2187 = vmatpush1.bf16.xpose.msra.mxu0 0
    %2188 = vmatprep.subr.bf16.mxu0 0
    %2189 = vmatpush1.bf16.xpose.msra.mxu0 0
    %2190 = vmatprep.subr.bf16.mxu0 0
    %2191 = vmatpush1.bf16.xpose.msra.mxu0 0
    %2192 = vmatprep.subr.bf16.mxu0 0
    %2193 = vmatpush1.bf16.xpose.msra.mxu0 0
    %2194 = vmatprep.subr.bf16.mxu0 0
    %2195 = vmatpush1.bf16.xpose.msra.mxu0 0
    %2196 = vmatprep.subr.bf16.mxu0 0
    %2197 = vmatpush1.bf16.xpose.msra.mxu0 0
    %2198 = vmatprep.subr.bf16.mxu0 0
    %2199 = vmatpush1.bf16.xpose.msra.mxu0 0
    %2200 = vmatprep.subr.bf16.mxu0 0
    %2201 = vmatpush1.bf16.xpose.msra.mxu0 0
    %2202 = vmatprep.subr.bf16.mxu0 0
    %2203 = vmatpush1.bf16.xpose.msra.mxu0 0
    %2204 = vmatprep.subr.bf16.mxu0 0
    %2205 = vmatpush1.bf16.xpose.msra.mxu0 0
    %2206 = vmatprep.mubr.bf16.mxu0 0
    %2207 = vmatmul.mubr.bf16.gmra.mrb[0].mxu0 %v2169
    %v2208 = vpop.f32.mrb[0].mxu0
    %v2209 = vadd.f32 %v84, %v2208
    %v2210 = vpop.f32.mrb[0].mxu0
    %v2211 = vpop.f32.mrb[0].mxu0
    %v2212 = vpop.f32.mrb[0].mxu0
    %2213 = vdwg.mxu0
    %v2214 = vsel %vm159, %v2159, -inf
    %2215 = vmax.xlane.f32.xlu0 %v2214
    %v2216 = vpop.xlane.xlu0 %2215
    %v2217 = vsel %vm159, %v2209, -inf
    %2218 = vmax.xlane.f32.xlu0 %v2217
    %v2219 = vpop.xlane.xlu0 %2218
    %v2220 = vsub.f32 %v2159, %v2216
    %v2221 = vsub.f32 %v2209, %v2219
    %v2222 = vmul.f32 %v2220, 1.442695
    %v2223 = vpow.pop %v2222
    %v2224 = vmul.f32 %v2221, 1.442695
    %v2225 = vpow.pop %v2224
    %v2226 = vsel %vm159, %v2223, 0.0
    %2227 = vadd.xlane.f32.xlu0 %v2226
    %v2228 = vpop.xlane.xlu0 %2227
    %v2229 = vsel %vm159, %v2225, 0.0
    %2230 = vadd.xlane.f32.xlu0 %v2229
    %v2231 = vpop.xlane.xlu0 %2230
    %v2232 = vrcp.pop %v2228
    %v2233 = vrcp.pop %v2231
    %v2234 = vmul.f32 %v2223, %v2232
    %v2235 = vmul.f32 %v2225, %v2233
    %v2236 = vpack.c.bf16 %v2234, %v2234
    %v2237 = vpack.c.bf16 %v2235, %v2235
    %2238 = vrot.lane.b32.xlu0 %v1454, 40
    %v2239 = vpop.permute.xlu0 %2238
    %v2241 = vsel %vm159, %v2236, 0
    %v2244 = vsel %vm284, %v2239, 0
    %2246 = vmatprep.subr.bf16.mxu0 0
    %2247 = vmatpush1.bf16.msra.mxu0 %v2244
    %2248 = vmatprep.subr.bf16.mxu0 0
    %2249 = vmatpush1.bf16.msra.mxu0 0
    %2250 = vmatprep.subr.bf16.mxu0 0
    %2251 = vmatpush1.bf16.msra.mxu0 0
    %2252 = vmatprep.subr.bf16.mxu0 0
    %2253 = vmatpush1.bf16.msra.mxu0 0
    %2254 = vmatprep.subr.bf16.mxu0 0
    %2255 = vmatpush1.bf16.msra.mxu0 0
    %2256 = vmatprep.subr.bf16.mxu0 0
    %2257 = vmatpush1.bf16.msra.mxu0 0
    %2258 = vmatprep.subr.bf16.mxu0 0
    %2259 = vmatpush1.bf16.msra.mxu0 0
    %2260 = vmatprep.subr.bf16.mxu0 0
    %2261 = vmatpush1.bf16.msra.mxu0 0
    %2262 = vmatprep.subr.bf16.mxu0 0
    %2263 = vmatpush1.bf16.msra.mxu0 0
    %2264 = vmatprep.subr.bf16.mxu0 0
    %2265 = vmatpush1.bf16.msra.mxu0 0
    %2266 = vmatprep.subr.bf16.mxu0 0
    %2267 = vmatpush1.bf16.msra.mxu0 0
    %2268 = vmatprep.subr.bf16.mxu0 0
    %2269 = vmatpush1.bf16.msra.mxu0 0
    %2270 = vmatprep.subr.bf16.mxu0 0
    %2271 = vmatpush1.bf16.msra.mxu0 0
    %2272 = vmatprep.subr.bf16.mxu0 0
    %2273 = vmatpush1.bf16.msra.mxu0 0
    %2274 = vmatprep.subr.bf16.mxu0 0
    %2275 = vmatpush1.bf16.msra.mxu0 0
    %2276 = vmatprep.subr.bf16.mxu0 0
    %2277 = vmatpush1.bf16.msra.mxu0 0
    %2278 = vmatprep.mubr.bf16.mxu0 0
    %2279 = vmatmul.mubr.bf16.gmra.mrb[0].mxu0 %v2241
    %v2280 = vpop.f32.mrb[0].mxu0
    %v2281 = vadd.f32 0.0, %v2280
    %v2282 = vpop.f32.mrb[0].mxu0
    %v2283 = vpop.f32.mrb[0].mxu0
    %v2284 = vpop.f32.mrb[0].mxu0
    %2285 = vdwg.mxu0
    %2286 = vrot.lane.b32.xlu0 %v1455, 40
    %v2287 = vpop.permute.xlu0 %2286
    %v2289 = vsel %vm159, %v2237, 0
    %v2292 = vsel %vm284, %v2287, 0
    %2294 = vmatprep.subr.bf16.mxu0 0
    %2295 = vmatpush1.bf16.msra.mxu0 %v2292
    %2296 = vmatprep.subr.bf16.mxu0 0
    %2297 = vmatpush1.bf16.msra.mxu0 0
    %2298 = vmatprep.subr.bf16.mxu0 0
    %2299 = vmatpush1.bf16.msra.mxu0 0
    %2300 = vmatprep.subr.bf16.mxu0 0
    %2301 = vmatpush1.bf16.msra.mxu0 0
    %2302 = vmatprep.subr.bf16.mxu0 0
    %2303 = vmatpush1.bf16.msra.mxu0 0
    %2304 = vmatprep.subr.bf16.mxu0 0
    %2305 = vmatpush1.bf16.msra.mxu0 0
    %2306 = vmatprep.subr.bf16.mxu0 0
    %2307 = vmatpush1.bf16.msra.mxu0 0
    %2308 = vmatprep.subr.bf16.mxu0 0
    %2309 = vmatpush1.bf16.msra.mxu0 0
    %2310 = vmatprep.subr.bf16.mxu0 0
    %2311 = vmatpush1.bf16.msra.mxu0 0
    %2312 = vmatprep.subr.bf16.mxu0 0
    %2313 = vmatpush1.bf16.msra.mxu0 0
    %2314 = vmatprep.subr.bf16.mxu0 0
    %2315 = vmatpush1.bf16.msra.mxu0 0
    %2316 = vmatprep.subr.bf16.mxu0 0
    %2317 = vmatpush1.bf16.msra.mxu0 0
    %2318 = vmatprep.subr.bf16.mxu0 0
    %2319 = vmatpush1.bf16.msra.mxu0 0
    %2320 = vmatprep.subr.bf16.mxu0 0
    %2321 = vmatpush1.bf16.msra.mxu0 0
    %2322 = vmatprep.subr.bf16.mxu0 0
    %2323 = vmatpush1.bf16.msra.mxu0 0
    %2324 = vmatprep.subr.bf16.mxu0 0
    %2325 = vmatpush1.bf16.msra.mxu0 0
    %2326 = vmatprep.mubr.bf16.mxu0 0
    %2327 = vmatmul.mubr.bf16.gmra.mrb[0].mxu0 %v2289
    %v2328 = vpop.f32.mrb[0].mxu0
    %v2329 = vadd.f32 0.0, %v2328
    %v2330 = vpop.f32.mrb[0].mxu0
    %v2331 = vpop.f32.mrb[0].mxu0
    %v2332 = vpop.f32.mrb[0].mxu0
    %2333 = vdwg.mxu0
    %2336 = vrot.lane.b32.xlu0 %v1841, 8
    %v2337 = vpop.permute.xlu0 %2336
    %2338 = vrot.lane.b32.xlu0 %v1889, 8
    %v2339 = vpop.permute.xlu0 %2338
    %2344 = vrot.lane.b32.xlu0 %v2061, 16
    %v2345 = vpop.permute.xlu0 %2344
    %2346 = vrot.lane.b32.xlu0 %v2109, 16
    %v2347 = vpop.permute.xlu0 %2346
    %2352 = vrot.lane.b32.xlu0 %v2281, 24
    %v2353 = vpop.permute.xlu0 %2352
    %2354 = vrot.lane.b32.xlu0 %v2329, 24
    %v2355 = vpop.permute.xlu0 %2354
    %v2358 = vsel %vm159, %v1621, %v2337
    %v2359 = vsel %vm159, %v1669, %v2339
    %v2360 = vsel %vm1062, %v2358, %v2345
    %v2361 = vsel %vm1062, %v2359, %v2347
    %v2362 = vsel %vm1065, %v2360, %v2353
    %v2363 = vsel %vm1065, %v2361, %v2355
    %v2364 = vpack.c.bf16 %v2363, %v2362
    %s2365 = scalar_lea.vmem %s6, 16
    %v2366 = vld [vmem:[%s2365] sm:$0xf]
    %v2367 = vld [vmem:[%s2365 + $0x4] sm:$0xf]
    %v2368 = vld [vmem:[%s2365 + $0x8] sm:$0xf]
    %v2369 = vld [vmem:[%s2365 + $0xc] sm:$0xf]
    %s2370 = scalar_lea.vmem %s7, 1
    %v2371 = vld [vmem:[%s2370] sm:$0x1]
    %v2373 = vlaneseq
    %v2374 = vshrl.u32 %v2373, 7
    %v2375 = vsub.s32 0, %v2374
    %v2376 = vrot.slane %v2371, %v2375
    %v2382 = vunpack.c.l.b16 %v2366
    %v2383 = vunpack.c.l.b16 %v2367
    %v2384 = vunpack.c.l.b16 %v2368
    %v2385 = vunpack.c.l.b16 %v2369
    %v2386 = vpack.c.b16 %v2383, %v2382
    %v2387 = vpack.c.b16 %v2385, %v2384
    %v2391 = vsel %vm109, %v2364, 0
    %2393 = vmatprep.subr.bf16.mxu0 0
    %2394 = vmatpush1.bf16.msra.mxu0 %v2386
    %2395 = vmatprep.subr.bf16.mxu0 0
    %2396 = vmatpush1.bf16.msra.mxu0 %v2387
    %2397 = vmatprep.subr.bf16.mxu0 0
    %2398 = vmatpush1.bf16.msra.mxu0 0
    %2399 = vmatprep.subr.bf16.mxu0 0
    %2400 = vmatpush1.bf16.msra.mxu0 0
    %2401 = vmatprep.subr.bf16.mxu0 0
    %2402 = vmatpush1.bf16.msra.mxu0 0
    %2403 = vmatprep.subr.bf16.mxu0 0
    %2404 = vmatpush1.bf16.msra.mxu0 0
    %2405 = vmatprep.subr.bf16.mxu0 0
    %2406 = vmatpush1.bf16.msra.mxu0 0
    %2407 = vmatprep.subr.bf16.mxu0 0
    %2408 = vmatpush1.bf16.msra.mxu0 0
    %2409 = vmatprep.subr.bf16.mxu0 0
    %2410 = vmatpush1.bf16.msra.mxu0 0
    %2411 = vmatprep.subr.bf16.mxu0 0
    %2412 = vmatpush1.bf16.msra.mxu0 0
    %2413 = vmatprep.subr.bf16.mxu0 0
    %2414 = vmatpush1.bf16.msra.mxu0 0
    %2415 = vmatprep.subr.bf16.mxu0 0
    %2416 = vmatpush1.bf16.msra.mxu0 0
    %2417 = vmatprep.subr.bf16.mxu0 0
    %2418 = vmatpush1.bf16.msra.mxu0 0
    %2419 = vmatprep.subr.bf16.mxu0 0
    %2420 = vmatpush1.bf16.msra.mxu0 0
    %2421 = vmatprep.subr.bf16.mxu0 0
    %2422 = vmatpush1.bf16.msra.mxu0 0
    %2423 = vmatprep.subr.bf16.mxu0 0
    %2424 = vmatpush1.bf16.msra.mxu0 0
    %2425 = vmatprep.mubr.bf16.mxu0 0
    %2426 = vmatmul.mubr.bf16.gmra.mrb[0].mxu0 %v2391
    %v2427 = vpop.f32.mrb[0].mxu0
    %v2428 = vadd.f32 %v2376, %v2427
    %v2429 = vpop.f32.mrb[0].mxu0
    %v2430 = vpop.f32.mrb[0].mxu0
    %v2431 = vadd.f32 %v2376, %v2430
    %v2432 = vpop.f32.mrb[0].mxu0
    %2433 = vdwg.mxu0
    %v2434 = vadd.f32 %v1382, %v2428
    %v2435 = vadd.f32 %v1383, %v2431
    %s2436 = scalar_lea.vmem %s12, 1
    %v2437 = vld [vmem:[%s2436] sm:$0x1]
    %s2438 = scalar_lea.vmem %s13, 1
    %v2439 = vld [vmem:[%s2438] sm:$0x1]
    %v2440 = vsel %vm109, %v2434, 0.0
    %2441 = vadd.xlane.f32.xlu0 %v2440
    %v2442 = vpop.xlane.xlu0 %2441
    %v2443 = vsel %vm109, %v2435, 0.0
    %2444 = vadd.xlane.f32.xlu0 %v2443
    %v2445 = vpop.xlane.xlu0 %2444
    %v2446 = vmul.f32 %v2442, %v1146
    %v2447 = vmul.f32 %v2445, %v1146
    %v2448 = vsub.f32 %v2434, %v2446
    %v2449 = vsub.f32 %v2435, %v2447
    %v2450 = vmul.f32 %v2448, %v2448
    %v2451 = vmul.f32 %v2449, %v2449
    %v2452 = vsel %vm109, %v2450, 0.0
    %2453 = vadd.xlane.f32.xlu0 %v2452
    %v2454 = vpop.xlane.xlu0 %2453
    %v2455 = vsel %vm109, %v2451, 0.0
    %2456 = vadd.xlane.f32.xlu0 %v2455
    %v2457 = vpop.xlane.xlu0 %2456
    %v2458 = vmul.f32 %v2454, %v1146
    %v2459 = vmul.f32 %v2457, %v1146
    %v2460 = vadd.f32 %v2458, 1e-05
    %v2461 = vadd.f32 %v2459, 1e-05
    %v2462 = vrsqrt.pop %v2460
    %v2463 = vrsqrt.pop %v2461
    %v2464 = vmul.f32 %v2448, %v2462
    %v2465 = vmul.f32 %v2449, %v2463
    %v2467 = vlaneseq
    %v2468 = vshrl.u32 %v2467, 7
    %v2469 = vsub.s32 0, %v2468
    %v2470 = vrot.slane %v2437, %v2469
    %v2472 = vmul.f32 %v2464, %v2470
    %v2473 = vmul.f32 %v2465, %v2470
    %v2475 = vlaneseq
    %v2476 = vshrl.u32 %v2475, 7
    %v2477 = vsub.s32 0, %v2476
    %v2478 = vrot.slane %v2439, %v2477
    %v2480 = vadd.f32 %v2472, %v2478
    %v2481 = vadd.f32 %v2473, %v2478
    %v2482 = vpack.c.bf16 %v2481, %v2480
    %s2483 = scalar_lea.vmem %s8, 16
    %v2484 = vld [vmem:[%s2483] sm:$0xf]
    %v2485 = vld [vmem:[%s2483 + $0x4] sm:$0xf]
    %v2486 = vld [vmem:[%s2483 + $0x8] sm:$0xf]
    %v2487 = vld [vmem:[%s2483 + $0xc] sm:$0xf]
    %s2488 = scalar_lea.vmem %s9, 1
    %v2489 = vld [vmem:[%s2488] sm:$0x1]
    %v2491 = vlaneseq
    %v2492 = vshrl.u32 %v2491, 7
    %v2493 = vsub.s32 0, %v2492
    %v2494 = vrot.slane %v2489, %v2493
    %v2500 = vunpack.c.l.b16 %v2484
    %v2501 = vunpack.c.l.b16 %v2485
    %v2502 = vunpack.c.l.b16 %v2486
    %v2503 = vunpack.c.l.b16 %v2487
    %v2504 = vpack.c.b16 %v2501, %v2500
    %v2505 = vpack.c.b16 %v2503, %v2502
    %v2509 = vsel %vm109, %v2482, 0
    %2511 = vmatprep.subr.bf16.mxu0 0
    %2512 = vmatpush1.bf16.msra.mxu0 %v2504
    %2513 = vmatprep.subr.bf16.mxu0 0
    %2514 = vmatpush1.bf16.msra.mxu0 %v2505
    %2515 = vmatprep.subr.bf16.mxu0 0
    %2516 = vmatpush1.bf16.msra.mxu0 0
    %2517 = vmatprep.subr.bf16.mxu0 0
    %2518 = vmatpush1.bf16.msra.mxu0 0
    %2519 = vmatprep.subr.bf16.mxu0 0
    %2520 = vmatpush1.bf16.msra.mxu0 0
    %2521 = vmatprep.subr.bf16.mxu0 0
    %2522 = vmatpush1.bf16.msra.mxu0 0
    %2523 = vmatprep.subr.bf16.mxu0 0
    %2524 = vmatpush1.bf16.msra.mxu0 0
    %2525 = vmatprep.subr.bf16.mxu0 0
    %2526 = vmatpush1.bf16.msra.mxu0 0
    %2527 = vmatprep.subr.bf16.mxu0 0
    %2528 = vmatpush1.bf16.msra.mxu0 0
    %2529 = vmatprep.subr.bf16.mxu0 0
    %2530 = vmatpush1.bf16.msra.mxu0 0
    %2531 = vmatprep.subr.bf16.mxu0 0
    %2532 = vmatpush1.bf16.msra.mxu0 0
    %2533 = vmatprep.subr.bf16.mxu0 0
    %2534 = vmatpush1.bf16.msra.mxu0 0
    %2535 = vmatprep.subr.bf16.mxu0 0
    %2536 = vmatpush1.bf16.msra.mxu0 0
    %2537 = vmatprep.subr.bf16.mxu0 0
    %2538 = vmatpush1.bf16.msra.mxu0 0
    %2539 = vmatprep.subr.bf16.mxu0 0
    %2540 = vmatpush1.bf16.msra.mxu0 0
    %2541 = vmatprep.subr.bf16.mxu0 0
    %2542 = vmatpush1.bf16.msra.mxu0 0
    %2543 = vmatprep.mubr.bf16.mxu0 0
    %2544 = vmatmul.mubr.bf16.gmra.mrb[0].mxu0 %v2509
    %v2545 = vpop.f32.mrb[0].mxu0
    %v2546 = vadd.f32 %v2494, %v2545
    %v2547 = vpop.f32.mrb[0].mxu0
    %v2548 = vpop.f32.mrb[0].mxu0
    %v2549 = vadd.f32 %v2494, %v2548
    %v2550 = vpop.f32.mrb[0].mxu0
    %2551 = vdwg.mxu0
    %v2552 = vmax.f32 %v2546, 0.0
    %v2553 = vmax.f32 %v2549, 0.0
    %v2554 = vpack.c.bf16 %v2553, %v2552
    %s2555 = scalar_lea.vmem %s10, 32
    %v2556 = vld [vmem:[%s2555] sm:$0xf]
    %v2557 = vld [vmem:[%s2555 + $0x4] sm:$0xf]
    %v2558 = vld [vmem:[%s2555 + $0x8] sm:$0xf]
    %v2559 = vld [vmem:[%s2555 + $0xc] sm:$0xf]
    %v2560 = vld [vmem:[%s2555 + $0x10] sm:$0xf]
    %v2561 = vld [vmem:[%s2555 + $0x14] sm:$0xf]
    %v2562 = vld [vmem:[%s2555 + $0x18] sm:$0xf]
    %v2563 = vld [vmem:[%s2555 + $0x1c] sm:$0xf]
    %s2564 = scalar_lea.vmem %s11, 1
    %v2565 = vld [vmem:[%s2564] sm:$0x1]
    %v2567 = vlaneseq
    %v2568 = vshrl.u32 %v2567, 7
    %v2569 = vsub.s32 0, %v2568
    %v2570 = vrot.slane %v2565, %v2569
    %v2580 = vunpack.c.l.b16 %v2556
    %v2581 = vunpack.c.l.b16 %v2557
    %v2582 = vunpack.c.l.b16 %v2558
    %v2583 = vunpack.c.l.b16 %v2559
    %v2584 = vunpack.c.l.b16 %v2560
    %v2585 = vunpack.c.l.b16 %v2561
    %v2586 = vunpack.c.l.b16 %v2562
    %v2587 = vunpack.c.l.b16 %v2563
    %v2588 = vpack.c.b16 %v2581, %v2580
    %v2589 = vpack.c.b16 %v2583, %v2582
    %v2590 = vpack.c.b16 %v2585, %v2584
    %v2591 = vpack.c.b16 %v2587, %v2586
    %v2597 = vsel %vm1293, %v2554, 0
    %2599 = vmatprep.subr.bf16.mxu0 0
    %2600 = vmatpush1.bf16.msra.mxu0 %v2588
    %2601 = vmatprep.subr.bf16.mxu0 0
    %2602 = vmatpush1.bf16.msra.mxu0 %v2589
    %2603 = vmatprep.subr.bf16.mxu0 0
    %2604 = vmatpush1.bf16.msra.mxu0 %v2590
    %2605 = vmatprep.subr.bf16.mxu0 0
    %2606 = vmatpush1.bf16.msra.mxu0 %v2591
    %2607 = vmatprep.subr.bf16.mxu0 0
    %2608 = vmatpush1.bf16.msra.mxu0 0
    %2609 = vmatprep.subr.bf16.mxu0 0
    %2610 = vmatpush1.bf16.msra.mxu0 0
    %2611 = vmatprep.subr.bf16.mxu0 0
    %2612 = vmatpush1.bf16.msra.mxu0 0
    %2613 = vmatprep.subr.bf16.mxu0 0
    %2614 = vmatpush1.bf16.msra.mxu0 0
    %2615 = vmatprep.subr.bf16.mxu0 0
    %2616 = vmatpush1.bf16.msra.mxu0 0
    %2617 = vmatprep.subr.bf16.mxu0 0
    %2618 = vmatpush1.bf16.msra.mxu0 0
    %2619 = vmatprep.subr.bf16.mxu0 0
    %2620 = vmatpush1.bf16.msra.mxu0 0
    %2621 = vmatprep.subr.bf16.mxu0 0
    %2622 = vmatpush1.bf16.msra.mxu0 0
    %2623 = vmatprep.subr.bf16.mxu0 0
    %2624 = vmatpush1.bf16.msra.mxu0 0
    %2625 = vmatprep.subr.bf16.mxu0 0
    %2626 = vmatpush1.bf16.msra.mxu0 0
    %2627 = vmatprep.subr.bf16.mxu0 0
    %2628 = vmatpush1.bf16.msra.mxu0 0
    %2629 = vmatprep.subr.bf16.mxu0 0
    %2630 = vmatpush1.bf16.msra.mxu0 0
    %2631 = vmatprep.mubr.bf16.mxu0 0
    %2632 = vmatmul.mubr.bf16.gmra.mrb[0].mxu0 %v2597
    %v2633 = vpop.f32.mrb[0].mxu0
    %v2634 = vadd.f32 %v2570, %v2633
    %v2635 = vpop.f32.mrb[0].mxu0
    %v2636 = vpop.f32.mrb[0].mxu0
    %v2637 = vadd.f32 %v2570, %v2636
    %v2638 = vpop.f32.mrb[0].mxu0
    %2639 = vdwg.mxu0
    %v2640 = vadd.f32 %v2480, %v2634
    %v2641 = vadd.f32 %v2481, %v2637
    %s2642 = scalar_lea.vmem %s14, 1
    %v2643 = vld [vmem:[%s2642] sm:$0x1]
    %s2644 = scalar_lea.vmem %s15, 1
    %v2645 = vld [vmem:[%s2644] sm:$0x1]
    %v2646 = vsel %vm109, %v2640, 0.0
    %2647 = vadd.xlane.f32.xlu0 %v2646
    %v2648 = vpop.xlane.xlu0 %2647
    %v2649 = vsel %vm109, %v2641, 0.0
    %2650 = vadd.xlane.f32.xlu0 %v2649
    %v2651 = vpop.xlane.xlu0 %2650
    %v2652 = vmul.f32 %v2648, %v1146
    %v2653 = vmul.f32 %v2651, %v1146
    %v2654 = vsub.f32 %v2640, %v2652
    %v2655 = vsub.f32 %v2641, %v2653
    %v2656 = vmul.f32 %v2654, %v2654
    %v2657 = vmul.f32 %v2655, %v2655
    %v2658 = vsel %vm109, %v2656, 0.0
    %2659 = vadd.xlane.f32.xlu0 %v2658
    %v2660 = vpop.xlane.xlu0 %2659
    %v2661 = vsel %vm109, %v2657, 0.0
    %2662 = vadd.xlane.f32.xlu0 %v2661
    %v2663 = vpop.xlane.xlu0 %2662
    %v2664 = vmul.f32 %v2660, %v1146
    %v2665 = vmul.f32 %v2663, %v1146
    %v2666 = vadd.f32 %v2664, 1e-05
    %v2667 = vadd.f32 %v2665, 1e-05
    %v2668 = vrsqrt.pop %v2666
    %v2669 = vrsqrt.pop %v2667
    %v2670 = vmul.f32 %v2654, %v2668
    %v2671 = vmul.f32 %v2655, %v2669
    %v2673 = vlaneseq
    %v2674 = vshrl.u32 %v2673, 7
    %v2675 = vsub.s32 0, %v2674
    %v2676 = vrot.slane %v2643, %v2675
    %v2678 = vmul.f32 %v2670, %v2676
    %v2679 = vmul.f32 %v2671, %v2676
    %v2681 = vlaneseq
    %v2682 = vshrl.u32 %v2681, 7
    %v2683 = vsub.s32 0, %v2682
    %v2684 = vrot.slane %v2645, %v2683
    %v2686 = vadd.f32 %v2678, %v2684
    %v2687 = vadd.f32 %v2679, %v2684
    %v2688 = vpack.c.bf16 %v2687, %v2686
    %v2689 = vld [vmem:[%s16] sm:$0xf]
    %v2690 = vld [vmem:[%s16 + $0x4] sm:$0xf]
    %v2691 = vld [vmem:[%s16 + $0x8] sm:$0xf]
    %v2692 = vld [vmem:[%s16 + $0xc] sm:$0xf]
    %v2693 = vld [vmem:[%s17] sm:$0x1]
    %v2695 = vlaneseq
    %v2696 = vshrl.u32 %v2695, 7
    %v2697 = vsub.s32 0, %v2696
    %v2698 = vrot.slane %v2693, %v2697
    %v2704 = vunpack.c.l.b16 %v2689
    %v2705 = vunpack.c.l.b16 %v2690
    %v2706 = vunpack.c.l.b16 %v2691
    %v2707 = vunpack.c.l.b16 %v2692
    %v2708 = vpack.c.b16 %v2705, %v2704
    %v2709 = vpack.c.b16 %v2707, %v2706
    %v2713 = vsel %vm109, %v2688, 0
    %2715 = vmatprep.subr.bf16.mxu0 0
    %2716 = vmatpush1.bf16.msra.mxu0 %v2708
    %2717 = vmatprep.subr.bf16.mxu0 0
    %2718 = vmatpush1.bf16.msra.mxu0 %v2709
    %2719 = vmatprep.subr.bf16.mxu0 0
    %2720 = vmatpush1.bf16.msra.mxu0 0
    %2721 = vmatprep.subr.bf16.mxu0 0
    %2722 = vmatpush1.bf16.msra.mxu0 0
    %2723 = vmatprep.subr.bf16.mxu0 0
    %2724 = vmatpush1.bf16.msra.mxu0 0
    %2725 = vmatprep.subr.bf16.mxu0 0
    %2726 = vmatpush1.bf16.msra.mxu0 0
    %2727 = vmatprep.subr.bf16.mxu0 0
    %2728 = vmatpush1.bf16.msra.mxu0 0
    %2729 = vmatprep.subr.bf16.mxu0 0
    %2730 = vmatpush1.bf16.msra.mxu0 0
    %2731 = vmatprep.subr.bf16.mxu0 0
    %2732 = vmatpush1.bf16.msra.mxu0 0
    %2733 = vmatprep.subr.bf16.mxu0 0
    %2734 = vmatpush1.bf16.msra.mxu0 0
    %2735 = vmatprep.subr.bf16.mxu0 0
    %2736 = vmatpush1.bf16.msra.mxu0 0
    %2737 = vmatprep.subr.bf16.mxu0 0
    %2738 = vmatpush1.bf16.msra.mxu0 0
    %2739 = vmatprep.subr.bf16.mxu0 0
    %2740 = vmatpush1.bf16.msra.mxu0 0
    %2741 = vmatprep.subr.bf16.mxu0 0
    %2742 = vmatpush1.bf16.msra.mxu0 0
    %2743 = vmatprep.subr.bf16.mxu0 0
    %2744 = vmatpush1.bf16.msra.mxu0 0
    %2745 = vmatprep.subr.bf16.mxu0 0
    %2746 = vmatpush1.bf16.msra.mxu0 0
    %2747 = vmatprep.mubr.bf16.mxu0 0
    %2748 = vmatmul.mubr.bf16.gmra.mrb[0].mxu0 %v2713
    %v2749 = vpop.f32.mrb[0].mxu0
    %v2750 = vadd.f32 %v2698, %v2749
    %v2751 = vpop.f32.mrb[0].mxu0
    %v2752 = vpop.f32.mrb[0].mxu0
    %v2753 = vadd.f32 %v2698, %v2752
    %v2754 = vpop.f32.mrb[0].mxu0
    %2755 = vdwg.mxu0
    %2756 = vst.msk [vmem:[#allocation2] sm:$0xff] %vm1062, %v2750
    %2757 = vst.msk [vmem:[#allocation2 + $0x8] sm:$0xff] %vm1062, %v2753
    // Predicated region
    $region74: #{dqn_transformer_embedding.1} parent=1 // pred_check
      _
    $region75: #{dqn_transformer_embedding.1} parent=1 // pred_check_branch
      %2759 = sbr.rel (0) target = $region77
    $region76: #{dqn_transformer_embedding.1} parent=1 // pred_region
      %s2761 = ssub.s32 256, 256
      %2762 = vsyncadd [#allocation3], %s2761
      %s2763 = sshll.u32 [#allocation2], 4
      %s2764 = int_to_ptr.vmem [resolvable:$true] %s2763
      %2769 = dma.vmem_to_hbm [thread:$0]  %s2764, 256, %s18, [#allocation3], 128, 128, 8
    $region77: #{dqn_transformer_embedding.1} parent=1 // pred_fallthru
      _
    // Predicated region
    $region78: #{dqn_transformer_embedding.1} parent=1 // pred_check
      _
    $region79: #{dqn_transformer_embedding.1} parent=1 // pred_check_branch
      %2771 = sbr.rel (0) target = $region81
    $region80: #{dqn_transformer_embedding.1} parent=1 // pred_region
      %2772 = dma.done [#allocation3], 256
    $region81: #{dqn_transformer_embedding.1} parent=1 // pred_fallthru
      _
    %2773 = vsyncpa [#allocation3], 1

</llo_original>
